<compile_context>
chip_gen: v7x
topology: tpu7x:2x2x1
jax: 0.10.0
libtpu: 0.0.40
codegen_flags: <defaults>
</compile_context>

<pallas_src>
import functools

import numpy as np
import jax
import jax.numpy as jnp
from jax.experimental import pallas as pl
from jax.experimental.pallas import tpu as pltpu

# ---- Small synthetic dimensions (scaled-down FasterRCNN box head) -----------
B = 2                         # batch
CIN = 3                       # image channels
H = W = 32                    # image spatial size
HO, WO = H // 2, W // 2       # backbone feature map (after 2x2 avg pool)
CMID = 16                     # backbone feature channels (stands in for 256)
POOL = 4                      # roi pool output size (stands in for 7)
P = 8                         # proposals per image (stands in for ~1000)
IN_FEAT = CMID * POOL * POOL  # 256 (stands in for 256*7*7 = 12544)
D = 128                       # box-head representation size (stands in for 1024)
NUM_CLASSES = 16              # stands in for 91 COCO classes
C_PAD = 128                   # classes padded to a full lane width
NEG_INF = -1e9                # logit for padded (non-existent) classes

# Fixed proposal boxes on the 16x16 backbone feature map (h0, h1, w0, w1).
ROI_BOXES = (
    (0, 16, 0, 16),
    (0, 8, 0, 8),
    (0, 8, 8, 16),
    (8, 16, 0, 8),
    (8, 16, 8, 16),
    (4, 12, 4, 12),
    (0, 8, 0, 16),
    (0, 16, 0, 8),
)
assert len(ROI_BOXES) == P


def _roi_matrix():
    """Fixed averaging matrix A[(cell*P + p), (h*WO + w)] implementing the
    POOLxPOOL adaptive-average ROI pool over the fixed boxes."""
    a = np.zeros((POOL * POOL, P, HO * WO), np.float32)
    for p, (h0, h1, w0, w1) in enumerate(ROI_BOXES):
        sh, sw = (h1 - h0) // POOL, (w1 - w0) // POOL
        for i in range(POOL):
            for j in range(POOL):
                cell = i * POOL + j
                inv = 1.0 / float(sh * sw)
                for hh in range(h0 + i * sh, h0 + (i + 1) * sh):
                    for ww in range(w0 + j * sw, w0 + (j + 1) * sw):
                        a[cell, p, hh * WO + ww] = inv
    return jnp.asarray(a.reshape(POOL * POOL * P, HO * WO))


# ---------------------------------------------------------------------------
# The single fused kernel: one grid step = one image.
# ---------------------------------------------------------------------------
def _fused_forward_kernel(xw_ref, wconv_ref, bconv_ref, a_ref,
                          w6_ref, b6_ref, w7_ref, b7_ref, wc_ref, bc_ref,
                          out_ref, pooled_s, *, weighted):
    # ---------------- backbone stem: 1x1 conv + relu, then 2x2 average pool.
    # VPU broadcast-FMAs (K=3 would waste the MXU); fm never leaves VMEM.
    xw = xw_ref[0]                                   # (HO*WO, 4*CIN): 2x2 windows
    wconv = wconv_ref[...]                           # (CIN, CMID)
    bconv = bconv_ref[...]                           # (1, CMID)
    fm = jnp.zeros((HO * WO, CMID), jnp.float32)
    for j in range(4):                               # 2x2 window positions
        y = bconv
        for k in range(CIN):
            col = j * CIN + k
            y = y + xw[:, col:col + 1] * wconv[k:k + 1, :]
        fm = fm + jnp.maximum(y, 0.0)                # conv1x1 + relu per pixel
    fm = fm * jnp.float32(0.25)                      # 2x2 avg pool -> (HO*WO, CMID)

    # ---------------- fixed-box ROI pooling: one averaging matmul, then
    # scatter the POOL*POOL cells into the flattened (P, IN_FEAT) layout.
    # pooled_s[p, cell*CMID + c]  (fc6 weights are pre-permuted to match).
    cells = jnp.dot(a_ref[...], fm, preferred_element_type=jnp.float32)
    for cell in range(POOL * POOL):                  # static, sublane-aligned rows
        pooled_s[:, cell * CMID:(cell + 1) * CMID] = (
            cells[cell * P:(cell + 1) * P, :])

    # ---------------- box head (fc6+relu, fc7+relu) and cls_score — exactly
    # what the PyTorch hooks capture; kept entirely in VMEM.
    h = jnp.dot(pooled_s[...], w6_ref[...], preferred_element_type=jnp.float32)
    h = jnp.maximum(h + b6_ref[...], 0.0)            # fc6 + relu
    f = jnp.dot(h, w7_ref[...], preferred_element_type=jnp.float32)
    f = jnp.maximum(f + b7_ref[...], 0.0)            # fc7 + relu  (P, D)
    s = jnp.dot(f, wc_ref[...], preferred_element_type=jnp.float32) + bc_ref[...]
                                                     # cls_score  (P, C_PAD)

    # ---------------- aggregation (mirrors the PyTorch post-processing):
    # softmax over classes -> max -> per-image softmax over proposals ->
    # weighted sum (if weighted) else mean.  Padded classes have logit -1e9,
    # so they contribute exactly zero probability.
    s = s - jnp.max(s, axis=-1, keepdims=True)
    e = jnp.exp(s)
    sm = e * pl.reciprocal(jnp.sum(e, axis=-1, keepdims=True), approx=True)
    m = jnp.max(sm, axis=-1, keepdims=True)          # (P, 1)
    m = m - jnp.max(m, axis=0, keepdims=True)
    em = jnp.exp(m)
    wgt = em * pl.reciprocal(jnp.sum(em, axis=0, keepdims=True), approx=True)
    if weighted:
        out = jnp.sum(f * wgt, axis=0, keepdims=True)          # (1, D)
    else:
        out = jnp.sum(f, axis=0, keepdims=True) * jnp.float32(1.0 / P)
    out_ref[0] = out                                 # lane-dense (1, D) store


def _fused_forward(xw, params, weighted):
    full = lambda shape: pl.BlockSpec(shape, lambda b: (0,) * len(shape))
    kernel = functools.partial(_fused_forward_kernel, weighted=weighted)
    return pl.pallas_call(
        kernel,
        out_shape=jax.ShapeDtypeStruct((B, 1, D), jnp.float32),
        grid=(B,),
        in_specs=[
            pl.BlockSpec((1, HO * WO, 4 * CIN), lambda b: (b, 0, 0)),
            full((CIN, CMID)), full((1, CMID)),
            full((POOL * POOL * P, HO * WO)),
            full((IN_FEAT, D)), full((1, D)),
            full((D, D)), full((1, D)),
            full((D, C_PAD)), full((1, C_PAD)),
        ],
        out_specs=pl.BlockSpec((1, 1, D), lambda b: (b, 0, 0)),
        scratch_shapes=[pltpu.VMEM((P, IN_FEAT), jnp.float32)],
        compiler_params=pltpu.CompilerParams(
            dimension_semantics=("parallel",),        # shard images across TCs
            vmem_limit_bytes=16 * 1024 * 1024),
    )(xw, params["w_conv"], params["b_conv"], params["a_roi"],
      params["w6"], params["b6"], params["w7"], params["b7"],
      params["wc"], params["bc"])


# ---------------------------------------------------------------------------
# Parameters: generated in "PyTorch layout", then re-laid-out once for the
# fused kernel (pure relabeling — the forward semantics are unchanged).
# ---------------------------------------------------------------------------
def init_params(key):
    ks = jax.random.split(key, 4)
    def lin(k, fan_in, shape):
        return jax.random.normal(k, shape, jnp.float32) / jnp.sqrt(fan_in)
    return {
        "w_conv": lin(ks[0], CIN, (CIN, CMID)),
        "b_conv": jnp.zeros((1, CMID), jnp.float32),
        "w6": lin(ks[1], IN_FEAT, (IN_FEAT, D)),     # rows in (c, i, j) order
        "b6": 0.01 * jnp.ones((1, D), jnp.float32),
        "w7": lin(ks[2], D, (D, D)),
        "b7": 0.01 * jnp.ones((1, D), jnp.float32),
        "wc": lin(ks[3], D, (D, NUM_CLASSES)),
        "bc": jnp.zeros((1, NUM_CLASSES), jnp.float32),
    }


def prepare_params(params):
    """One-time re-layout:
       * permute fc6 rows from (c, i, j) order to the kernel's (cell, c) order,
       * pad cls_score 16 -> 128 classes (zero weights, -1e9 bias) so the
         score tile is lane-dense; padded classes get softmax prob exactly 0.
    """
    w6p = params["w6"].reshape(CMID, POOL * POOL, D)
    w6p = jnp.transpose(w6p, (1, 0, 2)).reshape(IN_FEAT, D)
    wc_pad = jnp.zeros((D, C_PAD), jnp.float32).at[:, :NUM_CLASSES].set(params["wc"])
    bc_pad = jnp.full((1, C_PAD), NEG_INF, jnp.float32).at[:, :NUM_CLASSES].set(params["bc"])
    return {
        "w_conv": params["w_conv"], "b_conv": params["b_conv"],
        "a_roi": _roi_matrix(),
        "w6": w6p, "b6": params["b6"],
        "w7": params["w7"], "b7": params["b7"],
        "wc": wc_pad, "bc": bc_pad,
    }


@functools.partial(jax.jit, static_argnames=("weighted",))
def faster_rcnn_triplet_forward(x, params, weighted=False):
    """x: NCHW float32 [B, 3, H, W] -> per-image features [B, D]."""
    # TODO(synk): the real module also applies FasterRCNN's image resize
    # (min_size=240/max_size=320) + normalization and the full ResNet50-FPN +
    # RPN/NMS proposal generation; replaced here by a synthetic stem + fixed
    # proposal boxes (layout plumbing below is wrapper-side only).
    xh = jnp.transpose(x, (0, 2, 3, 1))                      # NCHW -> NHWC
    xw = xh.reshape(B, HO, 2, WO, 2, CIN)
    xw = jnp.transpose(xw, (0, 1, 3, 2, 4, 5))               # group 2x2 windows
    xw = xw.reshape(B, HO * WO, 4 * CIN)                     # (B, 256, 12)
    out = _fused_forward(xw, params, weighted)               # (B, 1, D)
    return out.reshape(B, D)


if __name__ == "__main__":
    key = jax.random.PRNGKey(0)
    kx, kp = jax.random.split(key)
    x = jax.random.normal(kx, (B, CIN, H, W), jnp.float32)
    params = prepare_params(init_params(kp))

    out = faster_rcnn_triplet_forward(x, params, weighted=False)   # module default
    out = jax.block_until_ready(out)
    assert out.shape == (B, D) and out.dtype == jnp.float32
    assert bool(jnp.all(jnp.isfinite(out)))

    out_w = faster_rcnn_triplet_forward(x, params, weighted=True)  # weighted branch
    out_w = jax.block_until_ready(out_w)
    assert out_w.shape == (B, D)
    assert bool(jnp.all(jnp.isfinite(out_w)))

    print("KERNEL_OK")
</pallas_src>

<mosaic_0001>
module attributes {stable_mosaic.version = 11 : i64} {
  func.func @_fused_forward_kernel(%arg0: i32, %arg1: memref<1x256x12xf32, #tpu.memory_space<vmem>>, %arg2: memref<3x16xf32, #tpu.memory_space<vmem>>, %arg3: memref<1x16xf32, #tpu.memory_space<vmem>>, %arg4: memref<128x256xf32, #tpu.memory_space<vmem>>, %arg5: memref<256x128xf32, #tpu.memory_space<vmem>>, %arg6: memref<1x128xf32, #tpu.memory_space<vmem>>, %arg7: memref<128x128xf32, #tpu.memory_space<vmem>>, %arg8: memref<1x128xf32, #tpu.memory_space<vmem>>, %arg9: memref<128x128xf32, #tpu.memory_space<vmem>>, %arg10: memref<1x128xf32, #tpu.memory_space<vmem>>, %arg11: memref<1x1x128xf32, #tpu.memory_space<vmem>>, %arg12: memref<8x256xf32, #tpu.memory_space<vmem>>) attributes {dimension_semantics = [#tpu.dimension_semantics<parallel>], iteration_bounds = array<i64: 2>, scalar_prefetch = 0 : i64, scratch_operands = 1 : i64, tpu.core_type = #tpu.core_type<tc>, window_params = [{transform_indices = @transform_0, window_bounds = array<i64: 1, 256, 12>}, {pipeline_mode = #tpu.pipeline_mode<synchronous>, transform_indices = @transform_1, window_bounds = array<i64: 3, 16>}, {pipeline_mode = #tpu.pipeline_mode<synchronous>, transform_indices = @transform_2, window_bounds = array<i64: 1, 16>}, {pipeline_mode = #tpu.pipeline_mode<synchronous>, transform_indices = @transform_3, window_bounds = array<i64: 128, 256>}, {pipeline_mode = #tpu.pipeline_mode<synchronous>, transform_indices = @transform_4, window_bounds = array<i64: 256, 128>}, {pipeline_mode = #tpu.pipeline_mode<synchronous>, transform_indices = @transform_5, window_bounds = array<i64: 1, 128>}, {pipeline_mode = #tpu.pipeline_mode<synchronous>, transform_indices = @transform_6, window_bounds = array<i64: 128, 128>}, {pipeline_mode = #tpu.pipeline_mode<synchronous>, transform_indices = @transform_7, window_bounds = array<i64: 1, 128>}, {pipeline_mode = #tpu.pipeline_mode<synchronous>, transform_indices = @transform_8, window_bounds = array<i64: 128, 128>}, {pipeline_mode = #tpu.pipeline_mode<synchronous>, transform_indices = @transform_9, window_bounds = array<i64: 1, 128>}, {transform_indices = @transform_10, window_bounds = array<i64: 1, 1, 128>}]} {
    %c0 = arith.constant 0 : index
    %c0_0 = arith.constant 0 : index
    %c0_1 = arith.constant 0 : index
    %0 = vector.load %arg1[%c0, %c0_0, %c0_1] : memref<1x256x12xf32, #tpu.memory_space<vmem>>, vector<1x256x12xf32>
    %1 = vector.shape_cast %0 : vector<1x256x12xf32> to vector<256x12xf32>
    %c0_2 = arith.constant 0 : index
    %c0_3 = arith.constant 0 : index
    %2 = vector.load %arg2[%c0_2, %c0_3] : memref<3x16xf32, #tpu.memory_space<vmem>>, vector<3x16xf32>
    %c0_4 = arith.constant 0 : index
    %c0_5 = arith.constant 0 : index
    %3 = vector.load %arg3[%c0_4, %c0_5] : memref<1x16xf32, #tpu.memory_space<vmem>>, vector<1x16xf32>
    %cst = arith.constant 0.000000e+00 : f32
    %4 = vector.broadcast %cst : f32 to vector<256x16xf32>
    %5 = vector.extract_strided_slice %1 {offsets = [0, 0], sizes = [256, 1], strides = [1, 1]} : vector<256x12xf32> to vector<256x1xf32>
    %6 = vector.extract_strided_slice %2 {offsets = [0, 0], sizes = [1, 16], strides = [1, 1]} : vector<3x16xf32> to vector<1x16xf32>
    %7 = vector.broadcast %5 : vector<256x1xf32> to vector<256x16xf32>
    %8 = vector.broadcast %6 : vector<1x16xf32> to vector<256x16xf32>
    %9 = arith.mulf %7, %8 : vector<256x16xf32>
    %10 = vector.broadcast %3 : vector<1x16xf32> to vector<256x16xf32>
    %11 = arith.addf %10, %9 : vector<256x16xf32>
    %12 = vector.extract_strided_slice %1 {offsets = [0, 1], sizes = [256, 1], strides = [1, 1]} : vector<256x12xf32> to vector<256x1xf32>
    %13 = vector.extract_strided_slice %2 {offsets = [1, 0], sizes = [1, 16], strides = [1, 1]} : vector<3x16xf32> to vector<1x16xf32>
    %14 = vector.broadcast %12 : vector<256x1xf32> to vector<256x16xf32>
    %15 = vector.broadcast %13 : vector<1x16xf32> to vector<256x16xf32>
    %16 = arith.mulf %14, %15 : vector<256x16xf32>
    %17 = arith.addf %11, %16 : vector<256x16xf32>
    %18 = vector.extract_strided_slice %1 {offsets = [0, 2], sizes = [256, 1], strides = [1, 1]} : vector<256x12xf32> to vector<256x1xf32>
    %19 = vector.extract_strided_slice %2 {offsets = [2, 0], sizes = [1, 16], strides = [1, 1]} : vector<3x16xf32> to vector<1x16xf32>
    %20 = vector.broadcast %18 : vector<256x1xf32> to vector<256x16xf32>
    %21 = vector.broadcast %19 : vector<1x16xf32> to vector<256x16xf32>
    %22 = arith.mulf %20, %21 : vector<256x16xf32>
    %23 = arith.addf %17, %22 : vector<256x16xf32>
    %cst_6 = arith.constant 0.000000e+00 : f32
    %24 = vector.broadcast %cst_6 : f32 to vector<256x16xf32>
    %25 = arith.maximumf %23, %24 : vector<256x16xf32>
    %26 = arith.addf %4, %25 : vector<256x16xf32>
    %27 = vector.extract_strided_slice %1 {offsets = [0, 3], sizes = [256, 1], strides = [1, 1]} : vector<256x12xf32> to vector<256x1xf32>
    %28 = vector.extract_strided_slice %2 {offsets = [0, 0], sizes = [1, 16], strides = [1, 1]} : vector<3x16xf32> to vector<1x16xf32>
    %29 = vector.broadcast %27 : vector<256x1xf32> to vector<256x16xf32>
    %30 = vector.broadcast %28 : vector<1x16xf32> to vector<256x16xf32>
    %31 = arith.mulf %29, %30 : vector<256x16xf32>
    %32 = vector.broadcast %3 : vector<1x16xf32> to vector<256x16xf32>
    %33 = arith.addf %32, %31 : vector<256x16xf32>
    %34 = vector.extract_strided_slice %1 {offsets = [0, 4], sizes = [256, 1], strides = [1, 1]} : vector<256x12xf32> to vector<256x1xf32>
    %35 = vector.extract_strided_slice %2 {offsets = [1, 0], sizes = [1, 16], strides = [1, 1]} : vector<3x16xf32> to vector<1x16xf32>
    %36 = vector.broadcast %34 : vector<256x1xf32> to vector<256x16xf32>
    %37 = vector.broadcast %35 : vector<1x16xf32> to vector<256x16xf32>
    %38 = arith.mulf %36, %37 : vector<256x16xf32>
    %39 = arith.addf %33, %38 : vector<256x16xf32>
    %40 = vector.extract_strided_slice %1 {offsets = [0, 5], sizes = [256, 1], strides = [1, 1]} : vector<256x12xf32> to vector<256x1xf32>
    %41 = vector.extract_strided_slice %2 {offsets = [2, 0], sizes = [1, 16], strides = [1, 1]} : vector<3x16xf32> to vector<1x16xf32>
    %42 = vector.broadcast %40 : vector<256x1xf32> to vector<256x16xf32>
    %43 = vector.broadcast %41 : vector<1x16xf32> to vector<256x16xf32>
    %44 = arith.mulf %42, %43 : vector<256x16xf32>
    %45 = arith.addf %39, %44 : vector<256x16xf32>
    %cst_7 = arith.constant 0.000000e+00 : f32
    %46 = vector.broadcast %cst_7 : f32 to vector<256x16xf32>
    %47 = arith.maximumf %45, %46 : vector<256x16xf32>
    %48 = arith.addf %26, %47 : vector<256x16xf32>
    %49 = vector.extract_strided_slice %1 {offsets = [0, 6], sizes = [256, 1], strides = [1, 1]} : vector<256x12xf32> to vector<256x1xf32>
    %50 = vector.extract_strided_slice %2 {offsets = [0, 0], sizes = [1, 16], strides = [1, 1]} : vector<3x16xf32> to vector<1x16xf32>
    %51 = vector.broadcast %49 : vector<256x1xf32> to vector<256x16xf32>
    %52 = vector.broadcast %50 : vector<1x16xf32> to vector<256x16xf32>
    %53 = arith.mulf %51, %52 : vector<256x16xf32>
    %54 = vector.broadcast %3 : vector<1x16xf32> to vector<256x16xf32>
    %55 = arith.addf %54, %53 : vector<256x16xf32>
    %56 = vector.extract_strided_slice %1 {offsets = [0, 7], sizes = [256, 1], strides = [1, 1]} : vector<256x12xf32> to vector<256x1xf32>
    %57 = vector.extract_strided_slice %2 {offsets = [1, 0], sizes = [1, 16], strides = [1, 1]} : vector<3x16xf32> to vector<1x16xf32>
    %58 = vector.broadcast %56 : vector<256x1xf32> to vector<256x16xf32>
    %59 = vector.broadcast %57 : vector<1x16xf32> to vector<256x16xf32>
    %60 = arith.mulf %58, %59 : vector<256x16xf32>
    %61 = arith.addf %55, %60 : vector<256x16xf32>
    %62 = vector.extract_strided_slice %1 {offsets = [0, 8], sizes = [256, 1], strides = [1, 1]} : vector<256x12xf32> to vector<256x1xf32>
    %63 = vector.extract_strided_slice %2 {offsets = [2, 0], sizes = [1, 16], strides = [1, 1]} : vector<3x16xf32> to vector<1x16xf32>
    %64 = vector.broadcast %62 : vector<256x1xf32> to vector<256x16xf32>
    %65 = vector.broadcast %63 : vector<1x16xf32> to vector<256x16xf32>
    %66 = arith.mulf %64, %65 : vector<256x16xf32>
    %67 = arith.addf %61, %66 : vector<256x16xf32>
    %cst_8 = arith.constant 0.000000e+00 : f32
    %68 = vector.broadcast %cst_8 : f32 to vector<256x16xf32>
    %69 = arith.maximumf %67, %68 : vector<256x16xf32>
    %70 = arith.addf %48, %69 : vector<256x16xf32>
    %71 = vector.extract_strided_slice %1 {offsets = [0, 9], sizes = [256, 1], strides = [1, 1]} : vector<256x12xf32> to vector<256x1xf32>
    %72 = vector.extract_strided_slice %2 {offsets = [0, 0], sizes = [1, 16], strides = [1, 1]} : vector<3x16xf32> to vector<1x16xf32>
    %73 = vector.broadcast %71 : vector<256x1xf32> to vector<256x16xf32>
    %74 = vector.broadcast %72 : vector<1x16xf32> to vector<256x16xf32>
    %75 = arith.mulf %73, %74 : vector<256x16xf32>
    %76 = vector.broadcast %3 : vector<1x16xf32> to vector<256x16xf32>
    %77 = arith.addf %76, %75 : vector<256x16xf32>
    %78 = vector.extract_strided_slice %1 {offsets = [0, 10], sizes = [256, 1], strides = [1, 1]} : vector<256x12xf32> to vector<256x1xf32>
    %79 = vector.extract_strided_slice %2 {offsets = [1, 0], sizes = [1, 16], strides = [1, 1]} : vector<3x16xf32> to vector<1x16xf32>
    %80 = vector.broadcast %78 : vector<256x1xf32> to vector<256x16xf32>
    %81 = vector.broadcast %79 : vector<1x16xf32> to vector<256x16xf32>
    %82 = arith.mulf %80, %81 : vector<256x16xf32>
    %83 = arith.addf %77, %82 : vector<256x16xf32>
    %84 = vector.extract_strided_slice %1 {offsets = [0, 11], sizes = [256, 1], strides = [1, 1]} : vector<256x12xf32> to vector<256x1xf32>
    %85 = vector.extract_strided_slice %2 {offsets = [2, 0], sizes = [1, 16], strides = [1, 1]} : vector<3x16xf32> to vector<1x16xf32>
    %86 = vector.broadcast %84 : vector<256x1xf32> to vector<256x16xf32>
    %87 = vector.broadcast %85 : vector<1x16xf32> to vector<256x16xf32>
    %88 = arith.mulf %86, %87 : vector<256x16xf32>
    %89 = arith.addf %83, %88 : vector<256x16xf32>
    %cst_9 = arith.constant 0.000000e+00 : f32
    %90 = vector.broadcast %cst_9 : f32 to vector<256x16xf32>
    %91 = arith.maximumf %89, %90 : vector<256x16xf32>
    %92 = arith.addf %70, %91 : vector<256x16xf32>
    %cst_10 = arith.constant 2.500000e-01 : f32
    %93 = vector.broadcast %cst_10 : f32 to vector<256x16xf32>
    %94 = arith.mulf %92, %93 : vector<256x16xf32>
    %c0_11 = arith.constant 0 : index
    %c0_12 = arith.constant 0 : index
    %95 = vector.load %arg4[%c0_11, %c0_12] : memref<128x256xf32, #tpu.memory_space<vmem>>, vector<128x256xf32>
    %cst_13 = arith.constant dense<0.000000e+00> : vector<128x16xf32>
    %96 = tpu.matmul %95, %94, %cst_13 {dimension_numbers = #tpu.dot_dimension_numbers<[1], [0], [0], [1], [0, 0, 1, 1], [], []>} : vector<128x256xf32>, vector<256x16xf32>, vector<128x16xf32> -> vector<128x16xf32>
    %97 = vector.extract_strided_slice %96 {offsets = [0, 0], sizes = [8, 16], strides = [1, 1]} : vector<128x16xf32> to vector<8x16xf32>
    %c0_14 = arith.constant 0 : index
    %c0_15 = arith.constant 0 : index
    %98 = vector.load %arg12[%c0_14, %c0_15] : memref<8x256xf32, #tpu.memory_space<vmem>>, vector<8x16xf32>
    tpu.vector_store %arg12[%c0_14, %c0_15], %97 {strides = array<i32>} : memref<8x256xf32, #tpu.memory_space<vmem>>, vector<8x16xf32>,
    %99 = vector.extract_strided_slice %96 {offsets = [8, 0], sizes = [8, 16], strides = [1, 1]} : vector<128x16xf32> to vector<8x16xf32>
    %c0_16 = arith.constant 0 : index
    %c16 = arith.constant 16 : index
    %100 = vector.load %arg12[%c0_16, %c16] : memref<8x256xf32, #tpu.memory_space<vmem>>, vector<8x16xf32>
    tpu.vector_store %arg12[%c0_16, %c16], %99 {strides = array<i32>} : memref<8x256xf32, #tpu.memory_space<vmem>>, vector<8x16xf32>,
    %101 = vector.extract_strided_slice %96 {offsets = [16, 0], sizes = [8, 16], strides = [1, 1]} : vector<128x16xf32> to vector<8x16xf32>
    %c0_17 = arith.constant 0 : index
    %c32 = arith.constant 32 : index
    %102 = vector.load %arg12[%c0_17, %c32] : memref<8x256xf32, #tpu.memory_space<vmem>>, vector<8x16xf32>
    tpu.vector_store %arg12[%c0_17, %c32], %101 {strides = array<i32>} : memref<8x256xf32, #tpu.memory_space<vmem>>, vector<8x16xf32>,
    %103 = vector.extract_strided_slice %96 {offsets = [24, 0], sizes = [8, 16], strides = [1, 1]} : vector<128x16xf32> to vector<8x16xf32>
    %c0_18 = arith.constant 0 : index
    %c48 = arith.constant 48 : index
    %104 = vector.load %arg12[%c0_18, %c48] : memref<8x256xf32, #tpu.memory_space<vmem>>, vector<8x16xf32>
    tpu.vector_store %arg12[%c0_18, %c48], %103 {strides = array<i32>} : memref<8x256xf32, #tpu.memory_space<vmem>>, vector<8x16xf32>,
    %105 = vector.extract_strided_slice %96 {offsets = [32, 0], sizes = [8, 16], strides = [1, 1]} : vector<128x16xf32> to vector<8x16xf32>
    %c0_19 = arith.constant 0 : index
    %c64 = arith.constant 64 : index
    %106 = vector.load %arg12[%c0_19, %c64] : memref<8x256xf32, #tpu.memory_space<vmem>>, vector<8x16xf32>
    tpu.vector_store %arg12[%c0_19, %c64], %105 {strides = array<i32>} : memref<8x256xf32, #tpu.memory_space<vmem>>, vector<8x16xf32>,
    %107 = vector.extract_strided_slice %96 {offsets = [40, 0], sizes = [8, 16], strides = [1, 1]} : vector<128x16xf32> to vector<8x16xf32>
    %c0_20 = arith.constant 0 : index
    %c80 = arith.constant 80 : index
    %108 = vector.load %arg12[%c0_20, %c80] : memref<8x256xf32, #tpu.memory_space<vmem>>, vector<8x16xf32>
    tpu.vector_store %arg12[%c0_20, %c80], %107 {strides = array<i32>} : memref<8x256xf32, #tpu.memory_space<vmem>>, vector<8x16xf32>,
    %109 = vector.extract_strided_slice %96 {offsets = [48, 0], sizes = [8, 16], strides = [1, 1]} : vector<128x16xf32> to vector<8x16xf32>
    %c0_21 = arith.constant 0 : index
    %c96 = arith.constant 96 : index
    %110 = vector.load %arg12[%c0_21, %c96] : memref<8x256xf32, #tpu.memory_space<vmem>>, vector<8x16xf32>
    tpu.vector_store %arg12[%c0_21, %c96], %109 {strides = array<i32>} : memref<8x256xf32, #tpu.memory_space<vmem>>, vector<8x16xf32>,
    %111 = vector.extract_strided_slice %96 {offsets = [56, 0], sizes = [8, 16], strides = [1, 1]} : vector<128x16xf32> to vector<8x16xf32>
    %c0_22 = arith.constant 0 : index
    %c112 = arith.constant 112 : index
    %112 = vector.load %arg12[%c0_22, %c112] : memref<8x256xf32, #tpu.memory_space<vmem>>, vector<8x16xf32>
    tpu.vector_store %arg12[%c0_22, %c112], %111 {strides = array<i32>} : memref<8x256xf32, #tpu.memory_space<vmem>>, vector<8x16xf32>,
    %113 = vector.extract_strided_slice %96 {offsets = [64, 0], sizes = [8, 16], strides = [1, 1]} : vector<128x16xf32> to vector<8x16xf32>
    %c0_23 = arith.constant 0 : index
    %c128 = arith.constant 128 : index
    %114 = vector.load %arg12[%c0_23, %c128] : memref<8x256xf32, #tpu.memory_space<vmem>>, vector<8x16xf32>
    tpu.vector_store %arg12[%c0_23, %c128], %113 {strides = array<i32>} : memref<8x256xf32, #tpu.memory_space<vmem>>, vector<8x16xf32>,
    %115 = vector.extract_strided_slice %96 {offsets = [72, 0], sizes = [8, 16], strides = [1, 1]} : vector<128x16xf32> to vector<8x16xf32>
    %c0_24 = arith.constant 0 : index
    %c144 = arith.constant 144 : index
    %116 = vector.load %arg12[%c0_24, %c144] : memref<8x256xf32, #tpu.memory_space<vmem>>, vector<8x16xf32>
    tpu.vector_store %arg12[%c0_24, %c144], %115 {strides = array<i32>} : memref<8x256xf32, #tpu.memory_space<vmem>>, vector<8x16xf32>,
    %117 = vector.extract_strided_slice %96 {offsets = [80, 0], sizes = [8, 16], strides = [1, 1]} : vector<128x16xf32> to vector<8x16xf32>
    %c0_25 = arith.constant 0 : index
    %c160 = arith.constant 160 : index
    %118 = vector.load %arg12[%c0_25, %c160] : memref<8x256xf32, #tpu.memory_space<vmem>>, vector<8x16xf32>
    tpu.vector_store %arg12[%c0_25, %c160], %117 {strides = array<i32>} : memref<8x256xf32, #tpu.memory_space<vmem>>, vector<8x16xf32>,
    %119 = vector.extract_strided_slice %96 {offsets = [88, 0], sizes = [8, 16], strides = [1, 1]} : vector<128x16xf32> to vector<8x16xf32>
    %c0_26 = arith.constant 0 : index
    %c176 = arith.constant 176 : index
    %120 = vector.load %arg12[%c0_26, %c176] : memref<8x256xf32, #tpu.memory_space<vmem>>, vector<8x16xf32>
    tpu.vector_store %arg12[%c0_26, %c176], %119 {strides = array<i32>} : memref<8x256xf32, #tpu.memory_space<vmem>>, vector<8x16xf32>,
    %121 = vector.extract_strided_slice %96 {offsets = [96, 0], sizes = [8, 16], strides = [1, 1]} : vector<128x16xf32> to vector<8x16xf32>
    %c0_27 = arith.constant 0 : index
    %c192 = arith.constant 192 : index
    %122 = vector.load %arg12[%c0_27, %c192] : memref<8x256xf32, #tpu.memory_space<vmem>>, vector<8x16xf32>
    tpu.vector_store %arg12[%c0_27, %c192], %121 {strides = array<i32>} : memref<8x256xf32, #tpu.memory_space<vmem>>, vector<8x16xf32>,
    %123 = vector.extract_strided_slice %96 {offsets = [104, 0], sizes = [8, 16], strides = [1, 1]} : vector<128x16xf32> to vector<8x16xf32>
    %c0_28 = arith.constant 0 : index
    %c208 = arith.constant 208 : index
    %124 = vector.load %arg12[%c0_28, %c208] : memref<8x256xf32, #tpu.memory_space<vmem>>, vector<8x16xf32>
    tpu.vector_store %arg12[%c0_28, %c208], %123 {strides = array<i32>} : memref<8x256xf32, #tpu.memory_space<vmem>>, vector<8x16xf32>,
    %125 = vector.extract_strided_slice %96 {offsets = [112, 0], sizes = [8, 16], strides = [1, 1]} : vector<128x16xf32> to vector<8x16xf32>
    %c0_29 = arith.constant 0 : index
    %c224 = arith.constant 224 : index
    %126 = vector.load %arg12[%c0_29, %c224] : memref<8x256xf32, #tpu.memory_space<vmem>>, vector<8x16xf32>
    tpu.vector_store %arg12[%c0_29, %c224], %125 {strides = array<i32>} : memref<8x256xf32, #tpu.memory_space<vmem>>, vector<8x16xf32>,
    %127 = vector.extract_strided_slice %96 {offsets = [120, 0], sizes = [8, 16], strides = [1, 1]} : vector<128x16xf32> to vector<8x16xf32>
    %c0_30 = arith.constant 0 : index
    %c240 = arith.constant 240 : index
    %128 = vector.load %arg12[%c0_30, %c240] : memref<8x256xf32, #tpu.memory_space<vmem>>, vector<8x16xf32>
    tpu.vector_store %arg12[%c0_30, %c240], %127 {strides = array<i32>} : memref<8x256xf32, #tpu.memory_space<vmem>>, vector<8x16xf32>,
    %c0_31 = arith.constant 0 : index
    %c0_32 = arith.constant 0 : index
    %129 = vector.load %arg12[%c0_31, %c0_32] : memref<8x256xf32, #tpu.memory_space<vmem>>, vector<8x256xf32>
    %c0_33 = arith.constant 0 : index
    %c0_34 = arith.constant 0 : index
    %130 = vector.load %arg5[%c0_33, %c0_34] : memref<256x128xf32, #tpu.memory_space<vmem>>, vector<256x128xf32>
    %cst_35 = arith.constant dense<0.000000e+00> : vector<8x128xf32>
    %131 = tpu.matmul %129, %130, %cst_35 {dimension_numbers = #tpu.dot_dimension_numbers<[1], [0], [0], [1], [0, 0, 1, 1], [], []>} : vector<8x256xf32>, vector<256x128xf32>, vector<8x128xf32> -> vector<8x128xf32>
    %c0_36 = arith.constant 0 : index
    %c0_37 = arith.constant 0 : index
    %132 = vector.load %arg6[%c0_36, %c0_37] : memref<1x128xf32, #tpu.memory_space<vmem>>, vector<1x128xf32>
    %133 = vector.broadcast %132 : vector<1x128xf32> to vector<8x128xf32>
    %134 = arith.addf %131, %133 : vector<8x128xf32>
    %cst_38 = arith.constant 0.000000e+00 : f32
    %135 = vector.broadcast %cst_38 : f32 to vector<8x128xf32>
    %136 = arith.maximumf %134, %135 : vector<8x128xf32>
    %c0_39 = arith.constant 0 : index
    %c0_40 = arith.constant 0 : index
    %137 = vector.load %arg7[%c0_39, %c0_40] : memref<128x128xf32, #tpu.memory_space<vmem>>, vector<128x128xf32>
    %cst_41 = arith.constant dense<0.000000e+00> : vector<8x128xf32>
    %138 = tpu.matmul %136, %137, %cst_41 {dimension_numbers = #tpu.dot_dimension_numbers<[1], [0], [0], [1], [0, 0, 1, 1], [], []>} : vector<8x128xf32>, vector<128x128xf32>, vector<8x128xf32> -> vector<8x128xf32>
    %c0_42 = arith.constant 0 : index
    %c0_43 = arith.constant 0 : index
    %139 = vector.load %arg8[%c0_42, %c0_43] : memref<1x128xf32, #tpu.memory_space<vmem>>, vector<1x128xf32>
    %140 = vector.broadcast %139 : vector<1x128xf32> to vector<8x128xf32>
    %141 = arith.addf %138, %140 : vector<8x128xf32>
    %cst_44 = arith.constant 0.000000e+00 : f32
    %142 = vector.broadcast %cst_44 : f32 to vector<8x128xf32>
    %143 = arith.maximumf %141, %142 : vector<8x128xf32>
    %cst_45 = arith.constant dense<0.000000e+00> : vector<128xf32>
    %144 = vector.multi_reduction <add>, %143, %cst_45 [0] : vector<8x128xf32> to vector<128xf32>
    %145 = vector.shape_cast %144 : vector<128xf32> to vector<1x128xf32>
    %cst_46 = arith.constant 1.250000e-01 : f32
    %146 = vector.broadcast %cst_46 : f32 to vector<1x128xf32>
    %147 = arith.mulf %145, %146 : vector<1x128xf32>
    %c0_47 = arith.constant 0 : index
    %c0_48 = arith.constant 0 : index
    %c0_49 = arith.constant 0 : index
    %148 = vector.load %arg11[%c0_47, %c0_48, %c0_49] : memref<1x1x128xf32, #tpu.memory_space<vmem>>, vector<1x1x128xf32>
    %149 = vector.shape_cast %148 : vector<1x1x128xf32> to vector<1x128xf32>
    %150 = vector.shape_cast %147 : vector<1x128xf32> to vector<1x1x128xf32>
    tpu.vector_store %arg11[%c0_47, %c0_48, %c0_49], %150 {strides = array<i32>} : memref<1x1x128xf32, #tpu.memory_space<vmem>>, vector<1x1x128xf32>,
    return
  }
  func.func @transform_0(%arg0: i32) -> (i32, i32, i32) {
    %c0_i32 = arith.constant 0 : i32
    %c0_i32_0 = arith.constant 0 : i32
    %c0_i32_1 = arith.constant 0 : i32
    return %arg0, %c0_i32, %c0_i32_0 : i32, i32, i32
  }
  func.func @transform_1(%arg0: i32) -> (i32, i32) {
    %c0_i32 = arith.constant 0 : i32
    %c0_i32_0 = arith.constant 0 : i32
    %c0_i32_1 = arith.constant 0 : i32
    return %c0_i32, %c0_i32_0 : i32, i32
  }
  func.func @transform_2(%arg0: i32) -> (i32, i32) {
    %c0_i32 = arith.constant 0 : i32
    %c0_i32_0 = arith.constant 0 : i32
    %c0_i32_1 = arith.constant 0 : i32
    return %c0_i32, %c0_i32_0 : i32, i32
  }
  func.func @transform_3(%arg0: i32) -> (i32, i32) {
    %c0_i32 = arith.constant 0 : i32
    %c0_i32_0 = arith.constant 0 : i32
    %c0_i32_1 = arith.constant 0 : i32
    return %c0_i32, %c0_i32_0 : i32, i32
  }
  func.func @transform_4(%arg0: i32) -> (i32, i32) {
    %c0_i32 = arith.constant 0 : i32
    %c0_i32_0 = arith.constant 0 : i32
    %c0_i32_1 = arith.constant 0 : i32
    return %c0_i32, %c0_i32_0 : i32, i32
  }
  func.func @transform_5(%arg0: i32) -> (i32, i32) {
    %c0_i32 = arith.constant 0 : i32
    %c0_i32_0 = arith.constant 0 : i32
    %c0_i32_1 = arith.constant 0 : i32
    return %c0_i32, %c0_i32_0 : i32, i32
  }
  func.func @transform_6(%arg0: i32) -> (i32, i32) {
    %c0_i32 = arith.constant 0 : i32
    %c0_i32_0 = arith.constant 0 : i32
    %c0_i32_1 = arith.constant 0 : i32
    return %c0_i32, %c0_i32_0 : i32, i32
  }
  func.func @transform_7(%arg0: i32) -> (i32, i32) {
    %c0_i32 = arith.constant 0 : i32
    %c0_i32_0 = arith.constant 0 : i32
    %c0_i32_1 = arith.constant 0 : i32
    return %c0_i32, %c0_i32_0 : i32, i32
  }
  func.func @transform_8(%arg0: i32) -> (i32, i32) {
    %c0_i32 = arith.constant 0 : i32
    %c0_i32_0 = arith.constant 0 : i32
    %c0_i32_1 = arith.constant 0 : i32
    return %c0_i32, %c0_i32_0 : i32, i32
  }
  func.func @transform_9(%arg0: i32) -> (i32, i32) {
    %c0_i32 = arith.constant 0 : i32
    %c0_i32_0 = arith.constant 0 : i32
    %c0_i32_1 = arith.constant 0 : i32
    return %c0_i32, %c0_i32_0 : i32, i32
  }
  func.func @transform_10(%arg0: i32) -> (i32, i32, i32) {
    %c0_i32 = arith.constant 0 : i32
    %c0_i32_0 = arith.constant 0 : i32
    %c0_i32_1 = arith.constant 0 : i32
    return %arg0, %c0_i32, %c0_i32_0 : i32, i32, i32
  }
}

</mosaic_0001>

<llo_original>
// kernel: faster_rcnn_triplet_forward.1
$region0: #{faster_rcnn_triplet_forward.1}
  #allocation0 [shape = 'u32[]', space=smem, size = 0x4, offset = 0x4, fixed_abs, tag = 'smem constant byte address 0x4 - core index']
  #allocation1 [shape = 'u32[144,128]{1,0:T(1,128)}', space=vmem, size = 0x12000, scoped, tag = 'internal scratch']
  #allocation2 [shape = 'f32[8,256]{1,0:T(8,128)}', space=vmem, size = 0x2000, scoped, tag = 'scratch operand']
  %s0 = inlined_call_operand.vmem [shape: f32[2,256,12], index: 0, kind: input, shape index: {}]
  %s1 = inlined_call_operand.vmem [shape: f32[3,16], index: 1, kind: input, shape index: {}]
  %s2 = inlined_call_operand.vmem [shape: f32[1,16], index: 2, kind: input, shape index: {}]
  %s3 = inlined_call_operand.vmem [shape: f32[128,256], index: 3, kind: input, shape index: {}]
  %s4 = inlined_call_operand.vmem [shape: f32[256,128], index: 4, kind: input, shape index: {}]
  %s5 = inlined_call_operand.vmem [shape: f32[1,128], index: 5, kind: input, shape index: {}]
  %s6 = inlined_call_operand.vmem [shape: f32[128,128], index: 6, kind: input, shape index: {}]
  %s7 = inlined_call_operand.vmem [shape: f32[1,128], index: 7, kind: input, shape index: {}]
  %s8 = inlined_call_operand.vmem [shape: f32[128,128], index: 8, kind: input, shape index: {}]
  %s9 = inlined_call_operand.vmem [shape: f32[1,128], index: 9, kind: input, shape index: {}]
  %s10 = inlined_call_operand.hbm [shape: f32[2,1,128], index: 10, kind: output, shape index: {}]
  %s11 = sld [smem:[#allocation0]]
  $region73: #{faster_rcnn_triplet_forward.1} parent=0
    _
  %s13 = ssub.s32 1, %s11
  %s14 = scalar_select 0, %s13, %s11
  $region1: #{faster_rcnn_triplet_forward.1} parent=0
    #allocation3 [shape = 'u8[1024]{0}', space=vmem, size = 0x400, scoped, tag = 'output window, operand 0']
    #allocation4 [shape = 's32[2]{0}', space=sflag, size = 0x8, scoped, tag = 'scoped memory for faster_rcnn_triplet_forward.1']
    %15 = vsyncpa [#allocation4], 0
    %s16 = scalar_lea.sflag [#allocation4], 1
    %17 = vsyncpa %s16, 0
    loop: start=0, step=1, limit=4
    $region2: #{faster_rcnn_triplet_forward.1} parent=1 // loop_pre_header
      _
    $region3: #{faster_rcnn_triplet_forward.1} parent=1 // loop_header
      %s19 = sphi 0, %s23
      %p20 = scmp.ge.s32.totalorder %s19, 4
      %s29 = sphi 0, %s31
      %s32 = sphi 0, %s29
      %s33 = sphi 0, %s32
      %s49 = sphi 0, %s33
      %s53 = sphi 0, %s53
      %s55 = sphi 0, %s53
      %s56 = sphi 0, %s55
      %s70 = sphi 0, %s56
      %s74 = sphi 0, %s74
      %s76 = sphi 0, %s74
      %s77 = sphi 0, %s76
      %s91 = sphi 0, %s77
      %s95 = sphi 0, %s95
      %s97 = sphi 0, %s95
      %s98 = sphi 0, %s97
      %s112 = sphi 0, %s98
      %s116 = sphi 0, %s116
      %s118 = sphi 0, %s116
      %s119 = sphi 0, %s118
      %s133 = sphi 0, %s119
      %s137 = sphi 0, %s137
      %s139 = sphi 0, %s137
      %s140 = sphi 0, %s139
      %s154 = sphi 0, %s140
      %s158 = sphi 0, %s158
      %s160 = sphi 0, %s158
      %s161 = sphi 0, %s160
      %s175 = sphi 0, %s161
      %s179 = sphi 0, %s179
      %s181 = sphi 0, %s179
      %s182 = sphi 0, %s181
      %s196 = sphi 0, %s182
      %s200 = sphi 0, %s200
      %s202 = sphi 0, %s200
      %s203 = sphi 0, %s202
      %s217 = sphi 0, %s203
      %s221 = sphi 0, %s221
      %s223 = sphi 0, %s221
      %s224 = sphi 0, %s223
      %s238 = sphi 0, %s224
      %s244 = sphi 0, %s246
      %s247 = sphi 0, %s244
      %s248 = sphi 0, %s247
      %s264 = sphi 0, %s248
    $region4: #{faster_rcnn_triplet_forward.1} parent=1 // loop_header_branch
      %22 = sbr.rel (%p20) target = $region8
    $region5: #{faster_rcnn_triplet_forward.1} parent=1 // loop_body
      %s24 = ssub.s32 %s19, 1
      %s25 = ssub.s32 %s19, 2
      %s26 = sadd.s32 %s19, 1
      %s27 = ssub.s32 %s19, %s26
      %p28 = scmp.eq.s32.totalorder %s27, 0
      %s30 = sadd.s32 %s29, 1
      %s31 = scalar_select %p28, %s29, %s30
      %p34 = pneg %p28
      %p35 = scmp.eq.s32.totalorder %s19, 1
      %p36 = por %p34, %p35
      %p37 = scmp.ne.s32.totalorder %s29, %s32
      %p38 = scmp.eq.s32.totalorder %s19, 0
      %p39 = por %p37, %p38
      %p40 = scmp.ne.s32.totalorder %s29, %s32
      %p41 = scmp.eq.s32.totalorder %s24, 1
      %p42 = por %p40, %p41
      %p43 = scmp.ne.s32.totalorder %s32, %s33
      %p44 = scmp.eq.s32.totalorder %s24, 0
      %p45 = por %p43, %p44
      %p46 = scmp.ne.s32.totalorder %s32, %s33
      %p47 = scmp.eq.s32.totalorder %s25, 1
      %p48 = por %p46, %p47
      %p50 = scmp.ne.s32.totalorder %s33, %s49
      %p51 = scmp.eq.s32.totalorder %s25, 0
      %p52 = por %p50, %p51
      %s54 = sadd.s32 %s53, 1
      %p57 = scmp.eq.s32.totalorder %s19, 1
      %p58 = scmp.ne.s32.totalorder %s53, %s55
      %p59 = scmp.eq.s32.totalorder %s19, 0
      %p60 = por %p58, %p59
      %p61 = scmp.ne.s32.totalorder %s53, %s55
      %p62 = scmp.eq.s32.totalorder %s24, 1
      %p63 = por %p61, %p62
      %p64 = scmp.ne.s32.totalorder %s55, %s56
      %p65 = scmp.eq.s32.totalorder %s24, 0
      %p66 = por %p64, %p65
      %p67 = scmp.ne.s32.totalorder %s55, %s56
      %p68 = scmp.eq.s32.totalorder %s25, 1
      %p69 = por %p67, %p68
      %p71 = scmp.ne.s32.totalorder %s56, %s70
      %p72 = scmp.eq.s32.totalorder %s25, 0
      %p73 = por %p71, %p72
      %s75 = sadd.s32 %s74, 1
      %p78 = scmp.eq.s32.totalorder %s19, 1
      %p79 = scmp.ne.s32.totalorder %s74, %s76
      %p80 = scmp.eq.s32.totalorder %s19, 0
      %p81 = por %p79, %p80
      %p82 = scmp.ne.s32.totalorder %s74, %s76
      %p83 = scmp.eq.s32.totalorder %s24, 1
      %p84 = por %p82, %p83
      %p85 = scmp.ne.s32.totalorder %s76, %s77
      %p86 = scmp.eq.s32.totalorder %s24, 0
      %p87 = por %p85, %p86
      %p88 = scmp.ne.s32.totalorder %s76, %s77
      %p89 = scmp.eq.s32.totalorder %s25, 1
      %p90 = por %p88, %p89
      %p92 = scmp.ne.s32.totalorder %s77, %s91
      %p93 = scmp.eq.s32.totalorder %s25, 0
      %p94 = por %p92, %p93
      %s96 = sadd.s32 %s95, 1
      %p99 = scmp.eq.s32.totalorder %s19, 1
      %p100 = scmp.ne.s32.totalorder %s95, %s97
      %p101 = scmp.eq.s32.totalorder %s19, 0
      %p102 = por %p100, %p101
      %p103 = scmp.ne.s32.totalorder %s95, %s97
      %p104 = scmp.eq.s32.totalorder %s24, 1
      %p105 = por %p103, %p104
      %p106 = scmp.ne.s32.totalorder %s97, %s98
      %p107 = scmp.eq.s32.totalorder %s24, 0
      %p108 = por %p106, %p107
      %p109 = scmp.ne.s32.totalorder %s97, %s98
      %p110 = scmp.eq.s32.totalorder %s25, 1
      %p111 = por %p109, %p110
      %p113 = scmp.ne.s32.totalorder %s98, %s112
      %p114 = scmp.eq.s32.totalorder %s25, 0
      %p115 = por %p113, %p114
      %s117 = sadd.s32 %s116, 1
      %p120 = scmp.eq.s32.totalorder %s19, 1
      %p121 = scmp.ne.s32.totalorder %s116, %s118
      %p122 = scmp.eq.s32.totalorder %s19, 0
      %p123 = por %p121, %p122
      %p124 = scmp.ne.s32.totalorder %s116, %s118
      %p125 = scmp.eq.s32.totalorder %s24, 1
      %p126 = por %p124, %p125
      %p127 = scmp.ne.s32.totalorder %s118, %s119
      %p128 = scmp.eq.s32.totalorder %s24, 0
      %p129 = por %p127, %p128
      %p130 = scmp.ne.s32.totalorder %s118, %s119
      %p131 = scmp.eq.s32.totalorder %s25, 1
      %p132 = por %p130, %p131
      %p134 = scmp.ne.s32.totalorder %s119, %s133
      %p135 = scmp.eq.s32.totalorder %s25, 0
      %p136 = por %p134, %p135
      %s138 = sadd.s32 %s137, 1
      %p141 = scmp.eq.s32.totalorder %s19, 1
      %p142 = scmp.ne.s32.totalorder %s137, %s139
      %p143 = scmp.eq.s32.totalorder %s19, 0
      %p144 = por %p142, %p143
      %p145 = scmp.ne.s32.totalorder %s137, %s139
      %p146 = scmp.eq.s32.totalorder %s24, 1
      %p147 = por %p145, %p146
      %p148 = scmp.ne.s32.totalorder %s139, %s140
      %p149 = scmp.eq.s32.totalorder %s24, 0
      %p150 = por %p148, %p149
      %p151 = scmp.ne.s32.totalorder %s139, %s140
      %p152 = scmp.eq.s32.totalorder %s25, 1
      %p153 = por %p151, %p152
      %p155 = scmp.ne.s32.totalorder %s140, %s154
      %p156 = scmp.eq.s32.totalorder %s25, 0
      %p157 = por %p155, %p156
      %s159 = sadd.s32 %s158, 1
      %p162 = scmp.eq.s32.totalorder %s19, 1
      %p163 = scmp.ne.s32.totalorder %s158, %s160
      %p164 = scmp.eq.s32.totalorder %s19, 0
      %p165 = por %p163, %p164
      %p166 = scmp.ne.s32.totalorder %s158, %s160
      %p167 = scmp.eq.s32.totalorder %s24, 1
      %p168 = por %p166, %p167
      %p169 = scmp.ne.s32.totalorder %s160, %s161
      %p170 = scmp.eq.s32.totalorder %s24, 0
      %p171 = por %p169, %p170
      %p172 = scmp.ne.s32.totalorder %s160, %s161
      %p173 = scmp.eq.s32.totalorder %s25, 1
      %p174 = por %p172, %p173
      %p176 = scmp.ne.s32.totalorder %s161, %s175
      %p177 = scmp.eq.s32.totalorder %s25, 0
      %p178 = por %p176, %p177
      %s180 = sadd.s32 %s179, 1
      %p183 = scmp.eq.s32.totalorder %s19, 1
      %p184 = scmp.ne.s32.totalorder %s179, %s181
      %p185 = scmp.eq.s32.totalorder %s19, 0
      %p186 = por %p184, %p185
      %p187 = scmp.ne.s32.totalorder %s179, %s181
      %p188 = scmp.eq.s32.totalorder %s24, 1
      %p189 = por %p187, %p188
      %p190 = scmp.ne.s32.totalorder %s181, %s182
      %p191 = scmp.eq.s32.totalorder %s24, 0
      %p192 = por %p190, %p191
      %p193 = scmp.ne.s32.totalorder %s181, %s182
      %p194 = scmp.eq.s32.totalorder %s25, 1
      %p195 = por %p193, %p194
      %p197 = scmp.ne.s32.totalorder %s182, %s196
      %p198 = scmp.eq.s32.totalorder %s25, 0
      %p199 = por %p197, %p198
      %s201 = sadd.s32 %s200, 1
      %p204 = scmp.eq.s32.totalorder %s19, 1
      %p205 = scmp.ne.s32.totalorder %s200, %s202
      %p206 = scmp.eq.s32.totalorder %s19, 0
      %p207 = por %p205, %p206
      %p208 = scmp.ne.s32.totalorder %s200, %s202
      %p209 = scmp.eq.s32.totalorder %s24, 1
      %p210 = por %p208, %p209
      %p211 = scmp.ne.s32.totalorder %s202, %s203
      %p212 = scmp.eq.s32.totalorder %s24, 0
      %p213 = por %p211, %p212
      %p214 = scmp.ne.s32.totalorder %s202, %s203
      %p215 = scmp.eq.s32.totalorder %s25, 1
      %p216 = por %p214, %p215
      %p218 = scmp.ne.s32.totalorder %s203, %s217
      %p219 = scmp.eq.s32.totalorder %s25, 0
      %p220 = por %p218, %p219
      %s222 = sadd.s32 %s221, 1
      %p225 = scmp.eq.s32.totalorder %s19, 1
      %p226 = scmp.ne.s32.totalorder %s221, %s223
      %p227 = scmp.eq.s32.totalorder %s19, 0
      %p228 = por %p226, %p227
      %p229 = scmp.ne.s32.totalorder %s221, %s223
      %p230 = scmp.eq.s32.totalorder %s24, 1
      %p231 = por %p229, %p230
      %p232 = scmp.ne.s32.totalorder %s223, %s224
      %p233 = scmp.eq.s32.totalorder %s24, 0
      %p234 = por %p232, %p233
      %p235 = scmp.ne.s32.totalorder %s223, %s224
      %p236 = scmp.eq.s32.totalorder %s25, 1
      %p237 = por %p235, %p236
      %p239 = scmp.ne.s32.totalorder %s224, %s238
      %p240 = scmp.eq.s32.totalorder %s25, 0
      %p241 = por %p239, %p240
      %s242 = ssub.s32 %s19, %s26
      %p243 = scmp.eq.s32.totalorder %s242, 0
      %s245 = sadd.s32 %s244, 1
      %s246 = scalar_select %p243, %s244, %s245
      %p249 = pneg %p243
      %p250 = scmp.eq.s32.totalorder %s19, 1
      %p251 = por %p249, %p250
      %p252 = scmp.ne.s32.totalorder %s244, %s247
      %p253 = scmp.eq.s32.totalorder %s19, 0
      %p254 = por %p252, %p253
      %p255 = scmp.ne.s32.totalorder %s244, %s247
      %p256 = scmp.eq.s32.totalorder %s24, 1
      %p257 = por %p255, %p256
      %p258 = scmp.ne.s32.totalorder %s247, %s248
      %p259 = scmp.eq.s32.totalorder %s24, 0
      %p260 = por %p258, %p259
      %p261 = scmp.ne.s32.totalorder %s247, %s248
      %p262 = scmp.eq.s32.totalorder %s25, 1
      %p263 = por %p261, %p262
      %p265 = scmp.ne.s32.totalorder %s248, %s264
      %p266 = scmp.eq.s32.totalorder %s25, 0
      %p267 = por %p265, %p266
      %p268 = scmp.le.s32.totalorder 1, %s19
      %p269 = scmp.lt.s32.totalorder %s19, 3
      %p270 = pnand %p268, %p269
      %p271 = pneg %p270
      // Predicated region
      $region9: #{faster_rcnn_triplet_forward.1} parent=5 // pred_check
        _
      $region10: #{faster_rcnn_triplet_forward.1} parent=5 // pred_check_branch
        %273 = sbr.rel (%p270) target = $region12
      $region11: #{faster_rcnn_triplet_forward.1} parent=5 // pred_region
        %s274 = ssub.s32 %s19, 1
        // Predicated region
        $region13: #{faster_rcnn_triplet_forward.1} parent=11 // pred_check
          %p275 = pneg %p66
        $region14: #{faster_rcnn_triplet_forward.1} parent=11 // pred_check_branch
          %277 = sbr.rel (%p275) target = $region16
        $region15: #{faster_rcnn_triplet_forward.1} parent=11 // pred_region
          _
        $region16: #{faster_rcnn_triplet_forward.1} parent=11 // pred_fallthru
          _
        // Predicated region
        $region17: #{faster_rcnn_triplet_forward.1} parent=11 // pred_check
          %p278 = pneg %p87
        $region18: #{faster_rcnn_triplet_forward.1} parent=11 // pred_check_branch
          %280 = sbr.rel (%p278) target = $region20
        $region19: #{faster_rcnn_triplet_forward.1} parent=11 // pred_region
          _
        $region20: #{faster_rcnn_triplet_forward.1} parent=11 // pred_fallthru
          _
        // Predicated region
        $region21: #{faster_rcnn_triplet_forward.1} parent=11 // pred_check
          %p281 = pneg %p108
        $region22: #{faster_rcnn_triplet_forward.1} parent=11 // pred_check_branch
          %283 = sbr.rel (%p281) target = $region24
        $region23: #{faster_rcnn_triplet_forward.1} parent=11 // pred_region
          _
        $region24: #{faster_rcnn_triplet_forward.1} parent=11 // pred_fallthru
          _
        // Predicated region
        $region25: #{faster_rcnn_triplet_forward.1} parent=11 // pred_check
          %p284 = pneg %p129
        $region26: #{faster_rcnn_triplet_forward.1} parent=11 // pred_check_branch
          %286 = sbr.rel (%p284) target = $region28
        $region27: #{faster_rcnn_triplet_forward.1} parent=11 // pred_region
          _
        $region28: #{faster_rcnn_triplet_forward.1} parent=11 // pred_fallthru
          _
        // Predicated region
        $region29: #{faster_rcnn_triplet_forward.1} parent=11 // pred_check
          %p287 = pneg %p150
        $region30: #{faster_rcnn_triplet_forward.1} parent=11 // pred_check_branch
          %289 = sbr.rel (%p287) target = $region32
        $region31: #{faster_rcnn_triplet_forward.1} parent=11 // pred_region
          _
        $region32: #{faster_rcnn_triplet_forward.1} parent=11 // pred_fallthru
          _
        // Predicated region
        $region33: #{faster_rcnn_triplet_forward.1} parent=11 // pred_check
          %p290 = pneg %p171
        $region34: #{faster_rcnn_triplet_forward.1} parent=11 // pred_check_branch
          %292 = sbr.rel (%p290) target = $region36
        $region35: #{faster_rcnn_triplet_forward.1} parent=11 // pred_region
          _
        $region36: #{faster_rcnn_triplet_forward.1} parent=11 // pred_fallthru
          _
        // Predicated region
        $region37: #{faster_rcnn_triplet_forward.1} parent=11 // pred_check
          %p293 = pneg %p192
        $region38: #{faster_rcnn_triplet_forward.1} parent=11 // pred_check_branch
          %295 = sbr.rel (%p293) target = $region40
        $region39: #{faster_rcnn_triplet_forward.1} parent=11 // pred_region
          _
        $region40: #{faster_rcnn_triplet_forward.1} parent=11 // pred_fallthru
          _
        // Predicated region
        $region41: #{faster_rcnn_triplet_forward.1} parent=11 // pred_check
          %p296 = pneg %p213
        $region42: #{faster_rcnn_triplet_forward.1} parent=11 // pred_check_branch
          %298 = sbr.rel (%p296) target = $region44
        $region43: #{faster_rcnn_triplet_forward.1} parent=11 // pred_region
          _
        $region44: #{faster_rcnn_triplet_forward.1} parent=11 // pred_fallthru
          _
        // Predicated region
        $region45: #{faster_rcnn_triplet_forward.1} parent=11 // pred_check
          %p299 = pneg %p234
        $region46: #{faster_rcnn_triplet_forward.1} parent=11 // pred_check_branch
          %301 = sbr.rel (%p299) target = $region48
        $region47: #{faster_rcnn_triplet_forward.1} parent=11 // pred_region
          _
        $region48: #{faster_rcnn_triplet_forward.1} parent=11 // pred_fallthru
          _
      $region12: #{faster_rcnn_triplet_forward.1} parent=5 // pred_fallthru
        _
      %p302 = scmp.lt.s32.totalorder %s19, 2
      // Predicated region
      $region49: #{faster_rcnn_triplet_forward.1} parent=5 // pred_check
        %p303 = pneg %p302
      $region50: #{faster_rcnn_triplet_forward.1} parent=5 // pred_check_branch
        %305 = sbr.rel (%p303) target = $region52
      $region51: #{faster_rcnn_triplet_forward.1} parent=5 // pred_region
        // Predicated region
        $region53: #{faster_rcnn_triplet_forward.1} parent=51 // pred_check
          %p306 = pneg %p39
        $region54: #{faster_rcnn_triplet_forward.1} parent=51 // pred_check_branch
          %308 = sbr.rel (%p306) target = $region56
        $region55: #{faster_rcnn_triplet_forward.1} parent=51 // pred_region
          %p309 = scmp.lt.s32.totalorder %s19, 1
          %s310 = scalar_select %p309, %s19, 1
          %s311 = smul.addr %s310, 32
          %s312 = smul.addr %s311, 8
          %s313 = scalar_lea.vmem %s0, %s312
        $region56: #{faster_rcnn_triplet_forward.1} parent=51 // pred_fallthru
          _
      $region52: #{faster_rcnn_triplet_forward.1} parent=5 // pred_fallthru
        _
      %p314 = scmp.le.s32.totalorder 1, %s19
      %p315 = scmp.lt.s32.totalorder %s19, 3
      %p316 = pnand %p314, %p315
      %p317 = pneg %p316
      // Predicated region
      $region57: #{faster_rcnn_triplet_forward.1} parent=5 // pred_check
        _
      $region58: #{faster_rcnn_triplet_forward.1} parent=5 // pred_check_branch
        %319 = sbr.rel (%p316) target = $region60
      $region59: #{faster_rcnn_triplet_forward.1} parent=5 // pred_region
        %s320 = ssub.s32 %s19, 1
        %p321 = scmp.lt.s32.totalorder %s24, 1
        %s322 = scalar_select %p321, %s24, 1
        %s323 = smul.addr %s322, 32
        %s324 = smul.addr %s323, 8
        %s325 = scalar_lea.vmem %s0, %s324
        %p326 = pneg %p45
        %p327 = pneg %p42
        %p328 = pneg %p66
        %p329 = pneg %p63
        %p330 = pneg %p87
        %p331 = pneg %p84
        %p332 = pneg %p108
        %p333 = pneg %p105
        %p334 = pneg %p129
        %p335 = pneg %p126
        %p336 = pneg %p150
        %p337 = pneg %p147
        %p338 = pneg %p171
        %p339 = pneg %p168
        %p340 = pneg %p192
        %p341 = pneg %p189
        %p342 = pneg %p213
        %p343 = pneg %p210
        %p344 = pneg %p234
        %p345 = pneg %p231
        %p346 = pneg %p260
        %p347 = pneg %p257
        %s348 = sand.u32 %s247, 1
        %s349 = scalar_lea.sflag [#allocation4], %s348
        %s350 = sand.u32 %s247, 1
        %s351 = scalar_lea.vmem [#allocation3], %s350
        %p352 = scmp.lt.s32.totalorder %s24, 1
        %s353 = scalar_select %p352, %s24, 1
        %s354 = smul.addr %s353, 32
        %s355 = smul.addr %s354, 8
        %s356 = scalar_lea.vmem %s0, %s355
        %v357 = vld [vmem:[%s356] sm:$0xff]
        %v358 = vld [vmem:[%s356 + $0x8] sm:$0xff]
        %v359 = vld [vmem:[%s356 + $0x10] sm:$0xff]
        %v360 = vld [vmem:[%s356 + $0x18] sm:$0xff]
        %v361 = vld [vmem:[%s356 + $0x20] sm:$0xff]
        %v362 = vld [vmem:[%s356 + $0x28] sm:$0xff]
        %v363 = vld [vmem:[%s356 + $0x30] sm:$0xff]
        %v364 = vld [vmem:[%s356 + $0x38] sm:$0xff]
        %v365 = vld [vmem:[%s356 + $0x40] sm:$0xff]
        %v366 = vld [vmem:[%s356 + $0x48] sm:$0xff]
        %v367 = vld [vmem:[%s356 + $0x50] sm:$0xff]
        %v368 = vld [vmem:[%s356 + $0x58] sm:$0xff]
        %v369 = vld [vmem:[%s356 + $0x60] sm:$0xff]
        %v370 = vld [vmem:[%s356 + $0x68] sm:$0xff]
        %v371 = vld [vmem:[%s356 + $0x70] sm:$0xff]
        %v372 = vld [vmem:[%s356 + $0x78] sm:$0xff]
        %v373 = vld [vmem:[%s356 + $0x80] sm:$0xff]
        %v374 = vld [vmem:[%s356 + $0x88] sm:$0xff]
        %v375 = vld [vmem:[%s356 + $0x90] sm:$0xff]
        %v376 = vld [vmem:[%s356 + $0x98] sm:$0xff]
        %v377 = vld [vmem:[%s356 + $0xa0] sm:$0xff]
        %v378 = vld [vmem:[%s356 + $0xa8] sm:$0xff]
        %v379 = vld [vmem:[%s356 + $0xb0] sm:$0xff]
        %v380 = vld [vmem:[%s356 + $0xb8] sm:$0xff]
        %v381 = vld [vmem:[%s356 + $0xc0] sm:$0xff]
        %v382 = vld [vmem:[%s356 + $0xc8] sm:$0xff]
        %v383 = vld [vmem:[%s356 + $0xd0] sm:$0xff]
        %v384 = vld [vmem:[%s356 + $0xd8] sm:$0xff]
        %v385 = vld [vmem:[%s356 + $0xe0] sm:$0xff]
        %v386 = vld [vmem:[%s356 + $0xe8] sm:$0xff]
        %v387 = vld [vmem:[%s356 + $0xf0] sm:$0xff]
        %v388 = vld [vmem:[%s356 + $0xf8] sm:$0xff]
        %v389 = vld [vmem:[%s1] sm:$0x7]
        %v390 = vld [vmem:[%s2] sm:$0x1]
        %392 = vset.pattern.permute.xlu0 0
        %393 = vperm.xlu0 %392, %v357
        %v394 = vpop.permute.xlu0 %393
        %397 = vset.pattern.permute.xlu0 0
        %398 = vperm.xlu0 %397, %v358
        %v399 = vpop.permute.xlu0 %398
        %402 = vset.pattern.permute.xlu0 0
        %403 = vperm.xlu0 %402, %v359
        %v404 = vpop.permute.xlu0 %403
        %407 = vset.pattern.permute.xlu0 0
        %408 = vperm.xlu0 %407, %v360
        %v409 = vpop.permute.xlu0 %408
        %412 = vset.pattern.permute.xlu0 0
        %413 = vperm.xlu0 %412, %v361
        %v414 = vpop.permute.xlu0 %413
        %417 = vset.pattern.permute.xlu0 0
        %418 = vperm.xlu0 %417, %v362
        %v419 = vpop.permute.xlu0 %418
        %422 = vset.pattern.permute.xlu0 0
        %423 = vperm.xlu0 %422, %v363
        %v424 = vpop.permute.xlu0 %423
        %427 = vset.pattern.permute.xlu0 0
        %428 = vperm.xlu0 %427, %v364
        %v429 = vpop.permute.xlu0 %428
        %432 = vset.pattern.permute.xlu0 0
        %433 = vperm.xlu0 %432, %v365
        %v434 = vpop.permute.xlu0 %433
        %437 = vset.pattern.permute.xlu0 0
        %438 = vperm.xlu0 %437, %v366
        %v439 = vpop.permute.xlu0 %438
        %442 = vset.pattern.permute.xlu0 0
        %443 = vperm.xlu0 %442, %v367
        %v444 = vpop.permute.xlu0 %443
        %447 = vset.pattern.permute.xlu0 0
        %448 = vperm.xlu0 %447, %v368
        %v449 = vpop.permute.xlu0 %448
        %452 = vset.pattern.permute.xlu0 0
        %453 = vperm.xlu0 %452, %v369
        %v454 = vpop.permute.xlu0 %453
        %457 = vset.pattern.permute.xlu0 0
        %458 = vperm.xlu0 %457, %v370
        %v459 = vpop.permute.xlu0 %458
        %462 = vset.pattern.permute.xlu0 0
        %463 = vperm.xlu0 %462, %v371
        %v464 = vpop.permute.xlu0 %463
        %467 = vset.pattern.permute.xlu0 0
        %468 = vperm.xlu0 %467, %v372
        %v469 = vpop.permute.xlu0 %468
        %472 = vset.pattern.permute.xlu0 0
        %473 = vperm.xlu0 %472, %v373
        %v474 = vpop.permute.xlu0 %473
        %477 = vset.pattern.permute.xlu0 0
        %478 = vperm.xlu0 %477, %v374
        %v479 = vpop.permute.xlu0 %478
        %482 = vset.pattern.permute.xlu0 0
        %483 = vperm.xlu0 %482, %v375
        %v484 = vpop.permute.xlu0 %483
        %487 = vset.pattern.permute.xlu0 0
        %488 = vperm.xlu0 %487, %v376
        %v489 = vpop.permute.xlu0 %488
        %492 = vset.pattern.permute.xlu0 0
        %493 = vperm.xlu0 %492, %v377
        %v494 = vpop.permute.xlu0 %493
        %497 = vset.pattern.permute.xlu0 0
        %498 = vperm.xlu0 %497, %v378
        %v499 = vpop.permute.xlu0 %498
        %502 = vset.pattern.permute.xlu0 0
        %503 = vperm.xlu0 %502, %v379
        %v504 = vpop.permute.xlu0 %503
        %507 = vset.pattern.permute.xlu0 0
        %508 = vperm.xlu0 %507, %v380
        %v509 = vpop.permute.xlu0 %508
        %512 = vset.pattern.permute.xlu0 0
        %513 = vperm.xlu0 %512, %v381
        %v514 = vpop.permute.xlu0 %513
        %517 = vset.pattern.permute.xlu0 0
        %518 = vperm.xlu0 %517, %v382
        %v519 = vpop.permute.xlu0 %518
        %522 = vset.pattern.permute.xlu0 0
        %523 = vperm.xlu0 %522, %v383
        %v524 = vpop.permute.xlu0 %523
        %527 = vset.pattern.permute.xlu0 0
        %528 = vperm.xlu0 %527, %v384
        %v529 = vpop.permute.xlu0 %528
        %532 = vset.pattern.permute.xlu0 0
        %533 = vperm.xlu0 %532, %v385
        %v534 = vpop.permute.xlu0 %533
        %537 = vset.pattern.permute.xlu0 0
        %538 = vperm.xlu0 %537, %v386
        %v539 = vpop.permute.xlu0 %538
        %542 = vset.pattern.permute.xlu0 0
        %543 = vperm.xlu0 %542, %v387
        %v544 = vpop.permute.xlu0 %543
        %547 = vset.pattern.permute.xlu0 0
        %548 = vperm.xlu0 %547, %v388
        %v549 = vpop.permute.xlu0 %548
        %v551 = vlaneseq
        %v552 = vshrl.u32 %v551, 7
        %v553 = vsub.s32 0, %v552
        %v554 = vrot.slane %v389, %v553
        %v555 = vmul.f32 %v394, %v554
        %v556 = vmul.f32 %v399, %v554
        %v557 = vmul.f32 %v404, %v554
        %v558 = vmul.f32 %v409, %v554
        %v559 = vmul.f32 %v414, %v554
        %v560 = vmul.f32 %v419, %v554
        %v561 = vmul.f32 %v424, %v554
        %v562 = vmul.f32 %v429, %v554
        %v563 = vmul.f32 %v434, %v554
        %v564 = vmul.f32 %v439, %v554
        %v565 = vmul.f32 %v444, %v554
        %v566 = vmul.f32 %v449, %v554
        %v567 = vmul.f32 %v454, %v554
        %v568 = vmul.f32 %v459, %v554
        %v569 = vmul.f32 %v464, %v554
        %v570 = vmul.f32 %v469, %v554
        %v571 = vmul.f32 %v474, %v554
        %v572 = vmul.f32 %v479, %v554
        %v573 = vmul.f32 %v484, %v554
        %v574 = vmul.f32 %v489, %v554
        %v575 = vmul.f32 %v494, %v554
        %v576 = vmul.f32 %v499, %v554
        %v577 = vmul.f32 %v504, %v554
        %v578 = vmul.f32 %v509, %v554
        %v579 = vmul.f32 %v514, %v554
        %v580 = vmul.f32 %v519, %v554
        %v581 = vmul.f32 %v524, %v554
        %v582 = vmul.f32 %v529, %v554
        %v583 = vmul.f32 %v534, %v554
        %v584 = vmul.f32 %v539, %v554
        %v585 = vmul.f32 %v544, %v554
        %v586 = vmul.f32 %v549, %v554
        %v588 = vlaneseq
        %v589 = vshrl.u32 %v588, 7
        %v590 = vsub.s32 0, %v589
        %v591 = vrot.slane %v390, %v590
        %v593 = vadd.f32 %v591, %v555
        %v594 = vadd.f32 %v591, %v556
        %v595 = vadd.f32 %v591, %v557
        %v596 = vadd.f32 %v591, %v558
        %v597 = vadd.f32 %v591, %v559
        %v598 = vadd.f32 %v591, %v560
        %v599 = vadd.f32 %v591, %v561
        %v600 = vadd.f32 %v591, %v562
        %v601 = vadd.f32 %v591, %v563
        %v602 = vadd.f32 %v591, %v564
        %v603 = vadd.f32 %v591, %v565
        %v604 = vadd.f32 %v591, %v566
        %v605 = vadd.f32 %v591, %v567
        %v606 = vadd.f32 %v591, %v568
        %v607 = vadd.f32 %v591, %v569
        %v608 = vadd.f32 %v591, %v570
        %v609 = vadd.f32 %v591, %v571
        %v610 = vadd.f32 %v591, %v572
        %v611 = vadd.f32 %v591, %v573
        %v612 = vadd.f32 %v591, %v574
        %v613 = vadd.f32 %v591, %v575
        %v614 = vadd.f32 %v591, %v576
        %v615 = vadd.f32 %v591, %v577
        %v616 = vadd.f32 %v591, %v578
        %v617 = vadd.f32 %v591, %v579
        %v618 = vadd.f32 %v591, %v580
        %v619 = vadd.f32 %v591, %v581
        %v620 = vadd.f32 %v591, %v582
        %v621 = vadd.f32 %v591, %v583
        %v622 = vadd.f32 %v591, %v584
        %v623 = vadd.f32 %v591, %v585
        %v624 = vadd.f32 %v591, %v586
        %625 = vset.pattern.permute.xlu0 1
        %626 = vperm.xlu0 %625, %v357
        %v627 = vpop.permute.xlu0 %626
        %629 = vset.pattern.permute.xlu0 1
        %630 = vperm.xlu0 %629, %v358
        %v631 = vpop.permute.xlu0 %630
        %633 = vset.pattern.permute.xlu0 1
        %634 = vperm.xlu0 %633, %v359
        %v635 = vpop.permute.xlu0 %634
        %637 = vset.pattern.permute.xlu0 1
        %638 = vperm.xlu0 %637, %v360
        %v639 = vpop.permute.xlu0 %638
        %641 = vset.pattern.permute.xlu0 1
        %642 = vperm.xlu0 %641, %v361
        %v643 = vpop.permute.xlu0 %642
        %645 = vset.pattern.permute.xlu0 1
        %646 = vperm.xlu0 %645, %v362
        %v647 = vpop.permute.xlu0 %646
        %649 = vset.pattern.permute.xlu0 1
        %650 = vperm.xlu0 %649, %v363
        %v651 = vpop.permute.xlu0 %650
        %653 = vset.pattern.permute.xlu0 1
        %654 = vperm.xlu0 %653, %v364
        %v655 = vpop.permute.xlu0 %654
        %657 = vset.pattern.permute.xlu0 1
        %658 = vperm.xlu0 %657, %v365
        %v659 = vpop.permute.xlu0 %658
        %661 = vset.pattern.permute.xlu0 1
        %662 = vperm.xlu0 %661, %v366
        %v663 = vpop.permute.xlu0 %662
        %665 = vset.pattern.permute.xlu0 1
        %666 = vperm.xlu0 %665, %v367
        %v667 = vpop.permute.xlu0 %666
        %669 = vset.pattern.permute.xlu0 1
        %670 = vperm.xlu0 %669, %v368
        %v671 = vpop.permute.xlu0 %670
        %673 = vset.pattern.permute.xlu0 1
        %674 = vperm.xlu0 %673, %v369
        %v675 = vpop.permute.xlu0 %674
        %677 = vset.pattern.permute.xlu0 1
        %678 = vperm.xlu0 %677, %v370
        %v679 = vpop.permute.xlu0 %678
        %681 = vset.pattern.permute.xlu0 1
        %682 = vperm.xlu0 %681, %v371
        %v683 = vpop.permute.xlu0 %682
        %685 = vset.pattern.permute.xlu0 1
        %686 = vperm.xlu0 %685, %v372
        %v687 = vpop.permute.xlu0 %686
        %689 = vset.pattern.permute.xlu0 1
        %690 = vperm.xlu0 %689, %v373
        %v691 = vpop.permute.xlu0 %690
        %693 = vset.pattern.permute.xlu0 1
        %694 = vperm.xlu0 %693, %v374
        %v695 = vpop.permute.xlu0 %694
        %697 = vset.pattern.permute.xlu0 1
        %698 = vperm.xlu0 %697, %v375
        %v699 = vpop.permute.xlu0 %698
        %701 = vset.pattern.permute.xlu0 1
        %702 = vperm.xlu0 %701, %v376
        %v703 = vpop.permute.xlu0 %702
        %705 = vset.pattern.permute.xlu0 1
        %706 = vperm.xlu0 %705, %v377
        %v707 = vpop.permute.xlu0 %706
        %709 = vset.pattern.permute.xlu0 1
        %710 = vperm.xlu0 %709, %v378
        %v711 = vpop.permute.xlu0 %710
        %713 = vset.pattern.permute.xlu0 1
        %714 = vperm.xlu0 %713, %v379
        %v715 = vpop.permute.xlu0 %714
        %717 = vset.pattern.permute.xlu0 1
        %718 = vperm.xlu0 %717, %v380
        %v719 = vpop.permute.xlu0 %718
        %721 = vset.pattern.permute.xlu0 1
        %722 = vperm.xlu0 %721, %v381
        %v723 = vpop.permute.xlu0 %722
        %725 = vset.pattern.permute.xlu0 1
        %726 = vperm.xlu0 %725, %v382
        %v727 = vpop.permute.xlu0 %726
        %729 = vset.pattern.permute.xlu0 1
        %730 = vperm.xlu0 %729, %v383
        %v731 = vpop.permute.xlu0 %730
        %733 = vset.pattern.permute.xlu0 1
        %734 = vperm.xlu0 %733, %v384
        %v735 = vpop.permute.xlu0 %734
        %737 = vset.pattern.permute.xlu0 1
        %738 = vperm.xlu0 %737, %v385
        %v739 = vpop.permute.xlu0 %738
        %741 = vset.pattern.permute.xlu0 1
        %742 = vperm.xlu0 %741, %v386
        %v743 = vpop.permute.xlu0 %742
        %745 = vset.pattern.permute.xlu0 1
        %746 = vperm.xlu0 %745, %v387
        %v747 = vpop.permute.xlu0 %746
        %749 = vset.pattern.permute.xlu0 1
        %750 = vperm.xlu0 %749, %v388
        %v751 = vpop.permute.xlu0 %750
        %v753 = vlaneseq
        %v754 = vshrl.u32 %v753, 7
        %v755 = vsub.s32 1, %v754
        %v756 = vrot.slane %v389, %v755
        %v757 = vmul.f32 %v627, %v756
        %v758 = vmul.f32 %v631, %v756
        %v759 = vmul.f32 %v635, %v756
        %v760 = vmul.f32 %v639, %v756
        %v761 = vmul.f32 %v643, %v756
        %v762 = vmul.f32 %v647, %v756
        %v763 = vmul.f32 %v651, %v756
        %v764 = vmul.f32 %v655, %v756
        %v765 = vmul.f32 %v659, %v756
        %v766 = vmul.f32 %v663, %v756
        %v767 = vmul.f32 %v667, %v756
        %v768 = vmul.f32 %v671, %v756
        %v769 = vmul.f32 %v675, %v756
        %v770 = vmul.f32 %v679, %v756
        %v771 = vmul.f32 %v683, %v756
        %v772 = vmul.f32 %v687, %v756
        %v773 = vmul.f32 %v691, %v756
        %v774 = vmul.f32 %v695, %v756
        %v775 = vmul.f32 %v699, %v756
        %v776 = vmul.f32 %v703, %v756
        %v777 = vmul.f32 %v707, %v756
        %v778 = vmul.f32 %v711, %v756
        %v779 = vmul.f32 %v715, %v756
        %v780 = vmul.f32 %v719, %v756
        %v781 = vmul.f32 %v723, %v756
        %v782 = vmul.f32 %v727, %v756
        %v783 = vmul.f32 %v731, %v756
        %v784 = vmul.f32 %v735, %v756
        %v785 = vmul.f32 %v739, %v756
        %v786 = vmul.f32 %v743, %v756
        %v787 = vmul.f32 %v747, %v756
        %v788 = vmul.f32 %v751, %v756
        %v789 = vadd.f32 %v593, %v757
        %v790 = vadd.f32 %v594, %v758
        %v791 = vadd.f32 %v595, %v759
        %v792 = vadd.f32 %v596, %v760
        %v793 = vadd.f32 %v597, %v761
        %v794 = vadd.f32 %v598, %v762
        %v795 = vadd.f32 %v599, %v763
        %v796 = vadd.f32 %v600, %v764
        %v797 = vadd.f32 %v601, %v765
        %v798 = vadd.f32 %v602, %v766
        %v799 = vadd.f32 %v603, %v767
        %v800 = vadd.f32 %v604, %v768
        %v801 = vadd.f32 %v605, %v769
        %v802 = vadd.f32 %v606, %v770
        %v803 = vadd.f32 %v607, %v771
        %v804 = vadd.f32 %v608, %v772
        %v805 = vadd.f32 %v609, %v773
        %v806 = vadd.f32 %v610, %v774
        %v807 = vadd.f32 %v611, %v775
        %v808 = vadd.f32 %v612, %v776
        %v809 = vadd.f32 %v613, %v777
        %v810 = vadd.f32 %v614, %v778
        %v811 = vadd.f32 %v615, %v779
        %v812 = vadd.f32 %v616, %v780
        %v813 = vadd.f32 %v617, %v781
        %v814 = vadd.f32 %v618, %v782
        %v815 = vadd.f32 %v619, %v783
        %v816 = vadd.f32 %v620, %v784
        %v817 = vadd.f32 %v621, %v785
        %v818 = vadd.f32 %v622, %v786
        %v819 = vadd.f32 %v623, %v787
        %v820 = vadd.f32 %v624, %v788
        %821 = vset.pattern.permute.xlu0 2
        %822 = vperm.xlu0 %821, %v357
        %v823 = vpop.permute.xlu0 %822
        %825 = vset.pattern.permute.xlu0 2
        %826 = vperm.xlu0 %825, %v358
        %v827 = vpop.permute.xlu0 %826
        %829 = vset.pattern.permute.xlu0 2
        %830 = vperm.xlu0 %829, %v359
        %v831 = vpop.permute.xlu0 %830
        %833 = vset.pattern.permute.xlu0 2
        %834 = vperm.xlu0 %833, %v360
        %v835 = vpop.permute.xlu0 %834
        %837 = vset.pattern.permute.xlu0 2
        %838 = vperm.xlu0 %837, %v361
        %v839 = vpop.permute.xlu0 %838
        %841 = vset.pattern.permute.xlu0 2
        %842 = vperm.xlu0 %841, %v362
        %v843 = vpop.permute.xlu0 %842
        %845 = vset.pattern.permute.xlu0 2
        %846 = vperm.xlu0 %845, %v363
        %v847 = vpop.permute.xlu0 %846
        %849 = vset.pattern.permute.xlu0 2
        %850 = vperm.xlu0 %849, %v364
        %v851 = vpop.permute.xlu0 %850
        %853 = vset.pattern.permute.xlu0 2
        %854 = vperm.xlu0 %853, %v365
        %v855 = vpop.permute.xlu0 %854
        %857 = vset.pattern.permute.xlu0 2
        %858 = vperm.xlu0 %857, %v366
        %v859 = vpop.permute.xlu0 %858
        %861 = vset.pattern.permute.xlu0 2
        %862 = vperm.xlu0 %861, %v367
        %v863 = vpop.permute.xlu0 %862
        %865 = vset.pattern.permute.xlu0 2
        %866 = vperm.xlu0 %865, %v368
        %v867 = vpop.permute.xlu0 %866
        %869 = vset.pattern.permute.xlu0 2
        %870 = vperm.xlu0 %869, %v369
        %v871 = vpop.permute.xlu0 %870
        %873 = vset.pattern.permute.xlu0 2
        %874 = vperm.xlu0 %873, %v370
        %v875 = vpop.permute.xlu0 %874
        %877 = vset.pattern.permute.xlu0 2
        %878 = vperm.xlu0 %877, %v371
        %v879 = vpop.permute.xlu0 %878
        %881 = vset.pattern.permute.xlu0 2
        %882 = vperm.xlu0 %881, %v372
        %v883 = vpop.permute.xlu0 %882
        %885 = vset.pattern.permute.xlu0 2
        %886 = vperm.xlu0 %885, %v373
        %v887 = vpop.permute.xlu0 %886
        %889 = vset.pattern.permute.xlu0 2
        %890 = vperm.xlu0 %889, %v374
        %v891 = vpop.permute.xlu0 %890
        %893 = vset.pattern.permute.xlu0 2
        %894 = vperm.xlu0 %893, %v375
        %v895 = vpop.permute.xlu0 %894
        %897 = vset.pattern.permute.xlu0 2
        %898 = vperm.xlu0 %897, %v376
        %v899 = vpop.permute.xlu0 %898
        %901 = vset.pattern.permute.xlu0 2
        %902 = vperm.xlu0 %901, %v377
        %v903 = vpop.permute.xlu0 %902
        %905 = vset.pattern.permute.xlu0 2
        %906 = vperm.xlu0 %905, %v378
        %v907 = vpop.permute.xlu0 %906
        %909 = vset.pattern.permute.xlu0 2
        %910 = vperm.xlu0 %909, %v379
        %v911 = vpop.permute.xlu0 %910
        %913 = vset.pattern.permute.xlu0 2
        %914 = vperm.xlu0 %913, %v380
        %v915 = vpop.permute.xlu0 %914
        %917 = vset.pattern.permute.xlu0 2
        %918 = vperm.xlu0 %917, %v381
        %v919 = vpop.permute.xlu0 %918
        %921 = vset.pattern.permute.xlu0 2
        %922 = vperm.xlu0 %921, %v382
        %v923 = vpop.permute.xlu0 %922
        %925 = vset.pattern.permute.xlu0 2
        %926 = vperm.xlu0 %925, %v383
        %v927 = vpop.permute.xlu0 %926
        %929 = vset.pattern.permute.xlu0 2
        %930 = vperm.xlu0 %929, %v384
        %v931 = vpop.permute.xlu0 %930
        %933 = vset.pattern.permute.xlu0 2
        %934 = vperm.xlu0 %933, %v385
        %v935 = vpop.permute.xlu0 %934
        %937 = vset.pattern.permute.xlu0 2
        %938 = vperm.xlu0 %937, %v386
        %v939 = vpop.permute.xlu0 %938
        %941 = vset.pattern.permute.xlu0 2
        %942 = vperm.xlu0 %941, %v387
        %v943 = vpop.permute.xlu0 %942
        %945 = vset.pattern.permute.xlu0 2
        %946 = vperm.xlu0 %945, %v388
        %v947 = vpop.permute.xlu0 %946
        %v949 = vlaneseq
        %v950 = vshrl.u32 %v949, 7
        %v951 = vsub.s32 2, %v950
        %v952 = vrot.slane %v389, %v951
        %v953 = vmul.f32 %v823, %v952
        %v954 = vmul.f32 %v827, %v952
        %v955 = vmul.f32 %v831, %v952
        %v956 = vmul.f32 %v835, %v952
        %v957 = vmul.f32 %v839, %v952
        %v958 = vmul.f32 %v843, %v952
        %v959 = vmul.f32 %v847, %v952
        %v960 = vmul.f32 %v851, %v952
        %v961 = vmul.f32 %v855, %v952
        %v962 = vmul.f32 %v859, %v952
        %v963 = vmul.f32 %v863, %v952
        %v964 = vmul.f32 %v867, %v952
        %v965 = vmul.f32 %v871, %v952
        %v966 = vmul.f32 %v875, %v952
        %v967 = vmul.f32 %v879, %v952
        %v968 = vmul.f32 %v883, %v952
        %v969 = vmul.f32 %v887, %v952
        %v970 = vmul.f32 %v891, %v952
        %v971 = vmul.f32 %v895, %v952
        %v972 = vmul.f32 %v899, %v952
        %v973 = vmul.f32 %v903, %v952
        %v974 = vmul.f32 %v907, %v952
        %v975 = vmul.f32 %v911, %v952
        %v976 = vmul.f32 %v915, %v952
        %v977 = vmul.f32 %v919, %v952
        %v978 = vmul.f32 %v923, %v952
        %v979 = vmul.f32 %v927, %v952
        %v980 = vmul.f32 %v931, %v952
        %v981 = vmul.f32 %v935, %v952
        %v982 = vmul.f32 %v939, %v952
        %v983 = vmul.f32 %v943, %v952
        %v984 = vmul.f32 %v947, %v952
        %v985 = vadd.f32 %v789, %v953
        %v986 = vadd.f32 %v790, %v954
        %v987 = vadd.f32 %v791, %v955
        %v988 = vadd.f32 %v792, %v956
        %v989 = vadd.f32 %v793, %v957
        %v990 = vadd.f32 %v794, %v958
        %v991 = vadd.f32 %v795, %v959
        %v992 = vadd.f32 %v796, %v960
        %v993 = vadd.f32 %v797, %v961
        %v994 = vadd.f32 %v798, %v962
        %v995 = vadd.f32 %v799, %v963
        %v996 = vadd.f32 %v800, %v964
        %v997 = vadd.f32 %v801, %v965
        %v998 = vadd.f32 %v802, %v966
        %v999 = vadd.f32 %v803, %v967
        %v1000 = vadd.f32 %v804, %v968
        %v1001 = vadd.f32 %v805, %v969
        %v1002 = vadd.f32 %v806, %v970
        %v1003 = vadd.f32 %v807, %v971
        %v1004 = vadd.f32 %v808, %v972
        %v1005 = vadd.f32 %v809, %v973
        %v1006 = vadd.f32 %v810, %v974
        %v1007 = vadd.f32 %v811, %v975
        %v1008 = vadd.f32 %v812, %v976
        %v1009 = vadd.f32 %v813, %v977
        %v1010 = vadd.f32 %v814, %v978
        %v1011 = vadd.f32 %v815, %v979
        %v1012 = vadd.f32 %v816, %v980
        %v1013 = vadd.f32 %v817, %v981
        %v1014 = vadd.f32 %v818, %v982
        %v1015 = vadd.f32 %v819, %v983
        %v1016 = vadd.f32 %v820, %v984
        %v1017 = vmax.f32 %v985, 0.0
        %v1018 = vmax.f32 %v986, 0.0
        %v1019 = vmax.f32 %v987, 0.0
        %v1020 = vmax.f32 %v988, 0.0
        %v1021 = vmax.f32 %v989, 0.0
        %v1022 = vmax.f32 %v990, 0.0
        %v1023 = vmax.f32 %v991, 0.0
        %v1024 = vmax.f32 %v992, 0.0
        %v1025 = vmax.f32 %v993, 0.0
        %v1026 = vmax.f32 %v994, 0.0
        %v1027 = vmax.f32 %v995, 0.0
        %v1028 = vmax.f32 %v996, 0.0
        %v1029 = vmax.f32 %v997, 0.0
        %v1030 = vmax.f32 %v998, 0.0
        %v1031 = vmax.f32 %v999, 0.0
        %v1032 = vmax.f32 %v1000, 0.0
        %v1033 = vmax.f32 %v1001, 0.0
        %v1034 = vmax.f32 %v1002, 0.0
        %v1035 = vmax.f32 %v1003, 0.0
        %v1036 = vmax.f32 %v1004, 0.0
        %v1037 = vmax.f32 %v1005, 0.0
        %v1038 = vmax.f32 %v1006, 0.0
        %v1039 = vmax.f32 %v1007, 0.0
        %v1040 = vmax.f32 %v1008, 0.0
        %v1041 = vmax.f32 %v1009, 0.0
        %v1042 = vmax.f32 %v1010, 0.0
        %v1043 = vmax.f32 %v1011, 0.0
        %v1044 = vmax.f32 %v1012, 0.0
        %v1045 = vmax.f32 %v1013, 0.0
        %v1046 = vmax.f32 %v1014, 0.0
        %v1047 = vmax.f32 %v1015, 0.0
        %v1048 = vmax.f32 %v1016, 0.0
        %v1049 = vadd.f32 %v1017, 0.0
        %v1050 = vadd.f32 %v1018, 0.0
        %v1051 = vadd.f32 %v1019, 0.0
        %v1052 = vadd.f32 %v1020, 0.0
        %v1053 = vadd.f32 %v1021, 0.0
        %v1054 = vadd.f32 %v1022, 0.0
        %v1055 = vadd.f32 %v1023, 0.0
        %v1056 = vadd.f32 %v1024, 0.0
        %v1057 = vadd.f32 %v1025, 0.0
        %v1058 = vadd.f32 %v1026, 0.0
        %v1059 = vadd.f32 %v1027, 0.0
        %v1060 = vadd.f32 %v1028, 0.0
        %v1061 = vadd.f32 %v1029, 0.0
        %v1062 = vadd.f32 %v1030, 0.0
        %v1063 = vadd.f32 %v1031, 0.0
        %v1064 = vadd.f32 %v1032, 0.0
        %v1065 = vadd.f32 %v1033, 0.0
        %v1066 = vadd.f32 %v1034, 0.0
        %v1067 = vadd.f32 %v1035, 0.0
        %v1068 = vadd.f32 %v1036, 0.0
        %v1069 = vadd.f32 %v1037, 0.0
        %v1070 = vadd.f32 %v1038, 0.0
        %v1071 = vadd.f32 %v1039, 0.0
        %v1072 = vadd.f32 %v1040, 0.0
        %v1073 = vadd.f32 %v1041, 0.0
        %v1074 = vadd.f32 %v1042, 0.0
        %v1075 = vadd.f32 %v1043, 0.0
        %v1076 = vadd.f32 %v1044, 0.0
        %v1077 = vadd.f32 %v1045, 0.0
        %v1078 = vadd.f32 %v1046, 0.0
        %v1079 = vadd.f32 %v1047, 0.0
        %v1080 = vadd.f32 %v1048, 0.0
        %1081 = vset.pattern.permute.xlu0 3
        %1082 = vperm.xlu0 %1081, %v357
        %v1083 = vpop.permute.xlu0 %1082
        %1085 = vset.pattern.permute.xlu0 3
        %1086 = vperm.xlu0 %1085, %v358
        %v1087 = vpop.permute.xlu0 %1086
        %1089 = vset.pattern.permute.xlu0 3
        %1090 = vperm.xlu0 %1089, %v359
        %v1091 = vpop.permute.xlu0 %1090
        %1093 = vset.pattern.permute.xlu0 3
        %1094 = vperm.xlu0 %1093, %v360
        %v1095 = vpop.permute.xlu0 %1094
        %1097 = vset.pattern.permute.xlu0 3
        %1098 = vperm.xlu0 %1097, %v361
        %v1099 = vpop.permute.xlu0 %1098
        %1101 = vset.pattern.permute.xlu0 3
        %1102 = vperm.xlu0 %1101, %v362
        %v1103 = vpop.permute.xlu0 %1102
        %1105 = vset.pattern.permute.xlu0 3
        %1106 = vperm.xlu0 %1105, %v363
        %v1107 = vpop.permute.xlu0 %1106
        %1109 = vset.pattern.permute.xlu0 3
        %1110 = vperm.xlu0 %1109, %v364
        %v1111 = vpop.permute.xlu0 %1110
        %1113 = vset.pattern.permute.xlu0 3
        %1114 = vperm.xlu0 %1113, %v365
        %v1115 = vpop.permute.xlu0 %1114
        %1117 = vset.pattern.permute.xlu0 3
        %1118 = vperm.xlu0 %1117, %v366
        %v1119 = vpop.permute.xlu0 %1118
        %1121 = vset.pattern.permute.xlu0 3
        %1122 = vperm.xlu0 %1121, %v367
        %v1123 = vpop.permute.xlu0 %1122
        %1125 = vset.pattern.permute.xlu0 3
        %1126 = vperm.xlu0 %1125, %v368
        %v1127 = vpop.permute.xlu0 %1126
        %1129 = vset.pattern.permute.xlu0 3
        %1130 = vperm.xlu0 %1129, %v369
        %v1131 = vpop.permute.xlu0 %1130
        %1133 = vset.pattern.permute.xlu0 3
        %1134 = vperm.xlu0 %1133, %v370
        %v1135 = vpop.permute.xlu0 %1134
        %1137 = vset.pattern.permute.xlu0 3
        %1138 = vperm.xlu0 %1137, %v371
        %v1139 = vpop.permute.xlu0 %1138
        %1141 = vset.pattern.permute.xlu0 3
        %1142 = vperm.xlu0 %1141, %v372
        %v1143 = vpop.permute.xlu0 %1142
        %1145 = vset.pattern.permute.xlu0 3
        %1146 = vperm.xlu0 %1145, %v373
        %v1147 = vpop.permute.xlu0 %1146
        %1149 = vset.pattern.permute.xlu0 3
        %1150 = vperm.xlu0 %1149, %v374
        %v1151 = vpop.permute.xlu0 %1150
        %1153 = vset.pattern.permute.xlu0 3
        %1154 = vperm.xlu0 %1153, %v375
        %v1155 = vpop.permute.xlu0 %1154
        %1157 = vset.pattern.permute.xlu0 3
        %1158 = vperm.xlu0 %1157, %v376
        %v1159 = vpop.permute.xlu0 %1158
        %1161 = vset.pattern.permute.xlu0 3
        %1162 = vperm.xlu0 %1161, %v377
        %v1163 = vpop.permute.xlu0 %1162
        %1165 = vset.pattern.permute.xlu0 3
        %1166 = vperm.xlu0 %1165, %v378
        %v1167 = vpop.permute.xlu0 %1166
        %1169 = vset.pattern.permute.xlu0 3
        %1170 = vperm.xlu0 %1169, %v379
        %v1171 = vpop.permute.xlu0 %1170
        %1173 = vset.pattern.permute.xlu0 3
        %1174 = vperm.xlu0 %1173, %v380
        %v1175 = vpop.permute.xlu0 %1174
        %1177 = vset.pattern.permute.xlu0 3
        %1178 = vperm.xlu0 %1177, %v381
        %v1179 = vpop.permute.xlu0 %1178
        %1181 = vset.pattern.permute.xlu0 3
        %1182 = vperm.xlu0 %1181, %v382
        %v1183 = vpop.permute.xlu0 %1182
        %1185 = vset.pattern.permute.xlu0 3
        %1186 = vperm.xlu0 %1185, %v383
        %v1187 = vpop.permute.xlu0 %1186
        %1189 = vset.pattern.permute.xlu0 3
        %1190 = vperm.xlu0 %1189, %v384
        %v1191 = vpop.permute.xlu0 %1190
        %1193 = vset.pattern.permute.xlu0 3
        %1194 = vperm.xlu0 %1193, %v385
        %v1195 = vpop.permute.xlu0 %1194
        %1197 = vset.pattern.permute.xlu0 3
        %1198 = vperm.xlu0 %1197, %v386
        %v1199 = vpop.permute.xlu0 %1198
        %1201 = vset.pattern.permute.xlu0 3
        %1202 = vperm.xlu0 %1201, %v387
        %v1203 = vpop.permute.xlu0 %1202
        %1205 = vset.pattern.permute.xlu0 3
        %1206 = vperm.xlu0 %1205, %v388
        %v1207 = vpop.permute.xlu0 %1206
        %v1209 = vmul.f32 %v1083, %v554
        %v1210 = vmul.f32 %v1087, %v554
        %v1211 = vmul.f32 %v1091, %v554
        %v1212 = vmul.f32 %v1095, %v554
        %v1213 = vmul.f32 %v1099, %v554
        %v1214 = vmul.f32 %v1103, %v554
        %v1215 = vmul.f32 %v1107, %v554
        %v1216 = vmul.f32 %v1111, %v554
        %v1217 = vmul.f32 %v1115, %v554
        %v1218 = vmul.f32 %v1119, %v554
        %v1219 = vmul.f32 %v1123, %v554
        %v1220 = vmul.f32 %v1127, %v554
        %v1221 = vmul.f32 %v1131, %v554
        %v1222 = vmul.f32 %v1135, %v554
        %v1223 = vmul.f32 %v1139, %v554
        %v1224 = vmul.f32 %v1143, %v554
        %v1225 = vmul.f32 %v1147, %v554
        %v1226 = vmul.f32 %v1151, %v554
        %v1227 = vmul.f32 %v1155, %v554
        %v1228 = vmul.f32 %v1159, %v554
        %v1229 = vmul.f32 %v1163, %v554
        %v1230 = vmul.f32 %v1167, %v554
        %v1231 = vmul.f32 %v1171, %v554
        %v1232 = vmul.f32 %v1175, %v554
        %v1233 = vmul.f32 %v1179, %v554
        %v1234 = vmul.f32 %v1183, %v554
        %v1235 = vmul.f32 %v1187, %v554
        %v1236 = vmul.f32 %v1191, %v554
        %v1237 = vmul.f32 %v1195, %v554
        %v1238 = vmul.f32 %v1199, %v554
        %v1239 = vmul.f32 %v1203, %v554
        %v1240 = vmul.f32 %v1207, %v554
        %v1241 = vadd.f32 %v591, %v1209
        %v1242 = vadd.f32 %v591, %v1210
        %v1243 = vadd.f32 %v591, %v1211
        %v1244 = vadd.f32 %v591, %v1212
        %v1245 = vadd.f32 %v591, %v1213
        %v1246 = vadd.f32 %v591, %v1214
        %v1247 = vadd.f32 %v591, %v1215
        %v1248 = vadd.f32 %v591, %v1216
        %v1249 = vadd.f32 %v591, %v1217
        %v1250 = vadd.f32 %v591, %v1218
        %v1251 = vadd.f32 %v591, %v1219
        %v1252 = vadd.f32 %v591, %v1220
        %v1253 = vadd.f32 %v591, %v1221
        %v1254 = vadd.f32 %v591, %v1222
        %v1255 = vadd.f32 %v591, %v1223
        %v1256 = vadd.f32 %v591, %v1224
        %v1257 = vadd.f32 %v591, %v1225
        %v1258 = vadd.f32 %v591, %v1226
        %v1259 = vadd.f32 %v591, %v1227
        %v1260 = vadd.f32 %v591, %v1228
        %v1261 = vadd.f32 %v591, %v1229
        %v1262 = vadd.f32 %v591, %v1230
        %v1263 = vadd.f32 %v591, %v1231
        %v1264 = vadd.f32 %v591, %v1232
        %v1265 = vadd.f32 %v591, %v1233
        %v1266 = vadd.f32 %v591, %v1234
        %v1267 = vadd.f32 %v591, %v1235
        %v1268 = vadd.f32 %v591, %v1236
        %v1269 = vadd.f32 %v591, %v1237
        %v1270 = vadd.f32 %v591, %v1238
        %v1271 = vadd.f32 %v591, %v1239
        %v1272 = vadd.f32 %v591, %v1240
        %1273 = vset.pattern.permute.xlu0 4
        %1274 = vperm.xlu0 %1273, %v357
        %v1275 = vpop.permute.xlu0 %1274
        %1277 = vset.pattern.permute.xlu0 4
        %1278 = vperm.xlu0 %1277, %v358
        %v1279 = vpop.permute.xlu0 %1278
        %1281 = vset.pattern.permute.xlu0 4
        %1282 = vperm.xlu0 %1281, %v359
        %v1283 = vpop.permute.xlu0 %1282
        %1285 = vset.pattern.permute.xlu0 4
        %1286 = vperm.xlu0 %1285, %v360
        %v1287 = vpop.permute.xlu0 %1286
        %1289 = vset.pattern.permute.xlu0 4
        %1290 = vperm.xlu0 %1289, %v361
        %v1291 = vpop.permute.xlu0 %1290
        %1293 = vset.pattern.permute.xlu0 4
        %1294 = vperm.xlu0 %1293, %v362
        %v1295 = vpop.permute.xlu0 %1294
        %1297 = vset.pattern.permute.xlu0 4
        %1298 = vperm.xlu0 %1297, %v363
        %v1299 = vpop.permute.xlu0 %1298
        %1301 = vset.pattern.permute.xlu0 4
        %1302 = vperm.xlu0 %1301, %v364
        %v1303 = vpop.permute.xlu0 %1302
        %1305 = vset.pattern.permute.xlu0 4
        %1306 = vperm.xlu0 %1305, %v365
        %v1307 = vpop.permute.xlu0 %1306
        %1309 = vset.pattern.permute.xlu0 4
        %1310 = vperm.xlu0 %1309, %v366
        %v1311 = vpop.permute.xlu0 %1310
        %1313 = vset.pattern.permute.xlu0 4
        %1314 = vperm.xlu0 %1313, %v367
        %v1315 = vpop.permute.xlu0 %1314
        %1317 = vset.pattern.permute.xlu0 4
        %1318 = vperm.xlu0 %1317, %v368
        %v1319 = vpop.permute.xlu0 %1318
        %1321 = vset.pattern.permute.xlu0 4
        %1322 = vperm.xlu0 %1321, %v369
        %v1323 = vpop.permute.xlu0 %1322
        %1325 = vset.pattern.permute.xlu0 4
        %1326 = vperm.xlu0 %1325, %v370
        %v1327 = vpop.permute.xlu0 %1326
        %1329 = vset.pattern.permute.xlu0 4
        %1330 = vperm.xlu0 %1329, %v371
        %v1331 = vpop.permute.xlu0 %1330
        %1333 = vset.pattern.permute.xlu0 4
        %1334 = vperm.xlu0 %1333, %v372
        %v1335 = vpop.permute.xlu0 %1334
        %1337 = vset.pattern.permute.xlu0 4
        %1338 = vperm.xlu0 %1337, %v373
        %v1339 = vpop.permute.xlu0 %1338
        %1341 = vset.pattern.permute.xlu0 4
        %1342 = vperm.xlu0 %1341, %v374
        %v1343 = vpop.permute.xlu0 %1342
        %1345 = vset.pattern.permute.xlu0 4
        %1346 = vperm.xlu0 %1345, %v375
        %v1347 = vpop.permute.xlu0 %1346
        %1349 = vset.pattern.permute.xlu0 4
        %1350 = vperm.xlu0 %1349, %v376
        %v1351 = vpop.permute.xlu0 %1350
        %1353 = vset.pattern.permute.xlu0 4
        %1354 = vperm.xlu0 %1353, %v377
        %v1355 = vpop.permute.xlu0 %1354
        %1357 = vset.pattern.permute.xlu0 4
        %1358 = vperm.xlu0 %1357, %v378
        %v1359 = vpop.permute.xlu0 %1358
        %1361 = vset.pattern.permute.xlu0 4
        %1362 = vperm.xlu0 %1361, %v379
        %v1363 = vpop.permute.xlu0 %1362
        %1365 = vset.pattern.permute.xlu0 4
        %1366 = vperm.xlu0 %1365, %v380
        %v1367 = vpop.permute.xlu0 %1366
        %1369 = vset.pattern.permute.xlu0 4
        %1370 = vperm.xlu0 %1369, %v381
        %v1371 = vpop.permute.xlu0 %1370
        %1373 = vset.pattern.permute.xlu0 4
        %1374 = vperm.xlu0 %1373, %v382
        %v1375 = vpop.permute.xlu0 %1374
        %1377 = vset.pattern.permute.xlu0 4
        %1378 = vperm.xlu0 %1377, %v383
        %v1379 = vpop.permute.xlu0 %1378
        %1381 = vset.pattern.permute.xlu0 4
        %1382 = vperm.xlu0 %1381, %v384
        %v1383 = vpop.permute.xlu0 %1382
        %1385 = vset.pattern.permute.xlu0 4
        %1386 = vperm.xlu0 %1385, %v385
        %v1387 = vpop.permute.xlu0 %1386
        %1389 = vset.pattern.permute.xlu0 4
        %1390 = vperm.xlu0 %1389, %v386
        %v1391 = vpop.permute.xlu0 %1390
        %1393 = vset.pattern.permute.xlu0 4
        %1394 = vperm.xlu0 %1393, %v387
        %v1395 = vpop.permute.xlu0 %1394
        %1397 = vset.pattern.permute.xlu0 4
        %1398 = vperm.xlu0 %1397, %v388
        %v1399 = vpop.permute.xlu0 %1398
        %v1401 = vmul.f32 %v1275, %v756
        %v1402 = vmul.f32 %v1279, %v756
        %v1403 = vmul.f32 %v1283, %v756
        %v1404 = vmul.f32 %v1287, %v756
        %v1405 = vmul.f32 %v1291, %v756
        %v1406 = vmul.f32 %v1295, %v756
        %v1407 = vmul.f32 %v1299, %v756
        %v1408 = vmul.f32 %v1303, %v756
        %v1409 = vmul.f32 %v1307, %v756
        %v1410 = vmul.f32 %v1311, %v756
        %v1411 = vmul.f32 %v1315, %v756
        %v1412 = vmul.f32 %v1319, %v756
        %v1413 = vmul.f32 %v1323, %v756
        %v1414 = vmul.f32 %v1327, %v756
        %v1415 = vmul.f32 %v1331, %v756
        %v1416 = vmul.f32 %v1335, %v756
        %v1417 = vmul.f32 %v1339, %v756
        %v1418 = vmul.f32 %v1343, %v756
        %v1419 = vmul.f32 %v1347, %v756
        %v1420 = vmul.f32 %v1351, %v756
        %v1421 = vmul.f32 %v1355, %v756
        %v1422 = vmul.f32 %v1359, %v756
        %v1423 = vmul.f32 %v1363, %v756
        %v1424 = vmul.f32 %v1367, %v756
        %v1425 = vmul.f32 %v1371, %v756
        %v1426 = vmul.f32 %v1375, %v756
        %v1427 = vmul.f32 %v1379, %v756
        %v1428 = vmul.f32 %v1383, %v756
        %v1429 = vmul.f32 %v1387, %v756
        %v1430 = vmul.f32 %v1391, %v756
        %v1431 = vmul.f32 %v1395, %v756
        %v1432 = vmul.f32 %v1399, %v756
        %v1433 = vadd.f32 %v1241, %v1401
        %v1434 = vadd.f32 %v1242, %v1402
        %v1435 = vadd.f32 %v1243, %v1403
        %v1436 = vadd.f32 %v1244, %v1404
        %v1437 = vadd.f32 %v1245, %v1405
        %v1438 = vadd.f32 %v1246, %v1406
        %v1439 = vadd.f32 %v1247, %v1407
        %v1440 = vadd.f32 %v1248, %v1408
        %v1441 = vadd.f32 %v1249, %v1409
        %v1442 = vadd.f32 %v1250, %v1410
        %v1443 = vadd.f32 %v1251, %v1411
        %v1444 = vadd.f32 %v1252, %v1412
        %v1445 = vadd.f32 %v1253, %v1413
        %v1446 = vadd.f32 %v1254, %v1414
        %v1447 = vadd.f32 %v1255, %v1415
        %v1448 = vadd.f32 %v1256, %v1416
        %v1449 = vadd.f32 %v1257, %v1417
        %v1450 = vadd.f32 %v1258, %v1418
        %v1451 = vadd.f32 %v1259, %v1419
        %v1452 = vadd.f32 %v1260, %v1420
        %v1453 = vadd.f32 %v1261, %v1421
        %v1454 = vadd.f32 %v1262, %v1422
        %v1455 = vadd.f32 %v1263, %v1423
        %v1456 = vadd.f32 %v1264, %v1424
        %v1457 = vadd.f32 %v1265, %v1425
        %v1458 = vadd.f32 %v1266, %v1426
        %v1459 = vadd.f32 %v1267, %v1427
        %v1460 = vadd.f32 %v1268, %v1428
        %v1461 = vadd.f32 %v1269, %v1429
        %v1462 = vadd.f32 %v1270, %v1430
        %v1463 = vadd.f32 %v1271, %v1431
        %v1464 = vadd.f32 %v1272, %v1432
        %1465 = vset.pattern.permute.xlu0 5
        %1466 = vperm.xlu0 %1465, %v357
        %v1467 = vpop.permute.xlu0 %1466
        %1469 = vset.pattern.permute.xlu0 5
        %1470 = vperm.xlu0 %1469, %v358
        %v1471 = vpop.permute.xlu0 %1470
        %1473 = vset.pattern.permute.xlu0 5
        %1474 = vperm.xlu0 %1473, %v359
        %v1475 = vpop.permute.xlu0 %1474
        %1477 = vset.pattern.permute.xlu0 5
        %1478 = vperm.xlu0 %1477, %v360
        %v1479 = vpop.permute.xlu0 %1478
        %1481 = vset.pattern.permute.xlu0 5
        %1482 = vperm.xlu0 %1481, %v361
        %v1483 = vpop.permute.xlu0 %1482
        %1485 = vset.pattern.permute.xlu0 5
        %1486 = vperm.xlu0 %1485, %v362
        %v1487 = vpop.permute.xlu0 %1486
        %1489 = vset.pattern.permute.xlu0 5
        %1490 = vperm.xlu0 %1489, %v363
        %v1491 = vpop.permute.xlu0 %1490
        %1493 = vset.pattern.permute.xlu0 5
        %1494 = vperm.xlu0 %1493, %v364
        %v1495 = vpop.permute.xlu0 %1494
        %1497 = vset.pattern.permute.xlu0 5
        %1498 = vperm.xlu0 %1497, %v365
        %v1499 = vpop.permute.xlu0 %1498
        %1501 = vset.pattern.permute.xlu0 5
        %1502 = vperm.xlu0 %1501, %v366
        %v1503 = vpop.permute.xlu0 %1502
        %1505 = vset.pattern.permute.xlu0 5
        %1506 = vperm.xlu0 %1505, %v367
        %v1507 = vpop.permute.xlu0 %1506
        %1509 = vset.pattern.permute.xlu0 5
        %1510 = vperm.xlu0 %1509, %v368
        %v1511 = vpop.permute.xlu0 %1510
        %1513 = vset.pattern.permute.xlu0 5
        %1514 = vperm.xlu0 %1513, %v369
        %v1515 = vpop.permute.xlu0 %1514
        %1517 = vset.pattern.permute.xlu0 5
        %1518 = vperm.xlu0 %1517, %v370
        %v1519 = vpop.permute.xlu0 %1518
        %1521 = vset.pattern.permute.xlu0 5
        %1522 = vperm.xlu0 %1521, %v371
        %v1523 = vpop.permute.xlu0 %1522
        %1525 = vset.pattern.permute.xlu0 5
        %1526 = vperm.xlu0 %1525, %v372
        %v1527 = vpop.permute.xlu0 %1526
        %1529 = vset.pattern.permute.xlu0 5
        %1530 = vperm.xlu0 %1529, %v373
        %v1531 = vpop.permute.xlu0 %1530
        %1533 = vset.pattern.permute.xlu0 5
        %1534 = vperm.xlu0 %1533, %v374
        %v1535 = vpop.permute.xlu0 %1534
        %1537 = vset.pattern.permute.xlu0 5
        %1538 = vperm.xlu0 %1537, %v375
        %v1539 = vpop.permute.xlu0 %1538
        %1541 = vset.pattern.permute.xlu0 5
        %1542 = vperm.xlu0 %1541, %v376
        %v1543 = vpop.permute.xlu0 %1542
        %1545 = vset.pattern.permute.xlu0 5
        %1546 = vperm.xlu0 %1545, %v377
        %v1547 = vpop.permute.xlu0 %1546
        %1549 = vset.pattern.permute.xlu0 5
        %1550 = vperm.xlu0 %1549, %v378
        %v1551 = vpop.permute.xlu0 %1550
        %1553 = vset.pattern.permute.xlu0 5
        %1554 = vperm.xlu0 %1553, %v379
        %v1555 = vpop.permute.xlu0 %1554
        %1557 = vset.pattern.permute.xlu0 5
        %1558 = vperm.xlu0 %1557, %v380
        %v1559 = vpop.permute.xlu0 %1558
        %1561 = vset.pattern.permute.xlu0 5
        %1562 = vperm.xlu0 %1561, %v381
        %v1563 = vpop.permute.xlu0 %1562
        %1565 = vset.pattern.permute.xlu0 5
        %1566 = vperm.xlu0 %1565, %v382
        %v1567 = vpop.permute.xlu0 %1566
        %1569 = vset.pattern.permute.xlu0 5
        %1570 = vperm.xlu0 %1569, %v383
        %v1571 = vpop.permute.xlu0 %1570
        %1573 = vset.pattern.permute.xlu0 5
        %1574 = vperm.xlu0 %1573, %v384
        %v1575 = vpop.permute.xlu0 %1574
        %1577 = vset.pattern.permute.xlu0 5
        %1578 = vperm.xlu0 %1577, %v385
        %v1579 = vpop.permute.xlu0 %1578
        %1581 = vset.pattern.permute.xlu0 5
        %1582 = vperm.xlu0 %1581, %v386
        %v1583 = vpop.permute.xlu0 %1582
        %1585 = vset.pattern.permute.xlu0 5
        %1586 = vperm.xlu0 %1585, %v387
        %v1587 = vpop.permute.xlu0 %1586
        %1589 = vset.pattern.permute.xlu0 5
        %1590 = vperm.xlu0 %1589, %v388
        %v1591 = vpop.permute.xlu0 %1590
        %v1593 = vmul.f32 %v1467, %v952
        %v1594 = vmul.f32 %v1471, %v952
        %v1595 = vmul.f32 %v1475, %v952
        %v1596 = vmul.f32 %v1479, %v952
        %v1597 = vmul.f32 %v1483, %v952
        %v1598 = vmul.f32 %v1487, %v952
        %v1599 = vmul.f32 %v1491, %v952
        %v1600 = vmul.f32 %v1495, %v952
        %v1601 = vmul.f32 %v1499, %v952
        %v1602 = vmul.f32 %v1503, %v952
        %v1603 = vmul.f32 %v1507, %v952
        %v1604 = vmul.f32 %v1511, %v952
        %v1605 = vmul.f32 %v1515, %v952
        %v1606 = vmul.f32 %v1519, %v952
        %v1607 = vmul.f32 %v1523, %v952
        %v1608 = vmul.f32 %v1527, %v952
        %v1609 = vmul.f32 %v1531, %v952
        %v1610 = vmul.f32 %v1535, %v952
        %v1611 = vmul.f32 %v1539, %v952
        %v1612 = vmul.f32 %v1543, %v952
        %v1613 = vmul.f32 %v1547, %v952
        %v1614 = vmul.f32 %v1551, %v952
        %v1615 = vmul.f32 %v1555, %v952
        %v1616 = vmul.f32 %v1559, %v952
        %v1617 = vmul.f32 %v1563, %v952
        %v1618 = vmul.f32 %v1567, %v952
        %v1619 = vmul.f32 %v1571, %v952
        %v1620 = vmul.f32 %v1575, %v952
        %v1621 = vmul.f32 %v1579, %v952
        %v1622 = vmul.f32 %v1583, %v952
        %v1623 = vmul.f32 %v1587, %v952
        %v1624 = vmul.f32 %v1591, %v952
        %v1625 = vadd.f32 %v1433, %v1593
        %v1626 = vadd.f32 %v1434, %v1594
        %v1627 = vadd.f32 %v1435, %v1595
        %v1628 = vadd.f32 %v1436, %v1596
        %v1629 = vadd.f32 %v1437, %v1597
        %v1630 = vadd.f32 %v1438, %v1598
        %v1631 = vadd.f32 %v1439, %v1599
        %v1632 = vadd.f32 %v1440, %v1600
        %v1633 = vadd.f32 %v1441, %v1601
        %v1634 = vadd.f32 %v1442, %v1602
        %v1635 = vadd.f32 %v1443, %v1603
        %v1636 = vadd.f32 %v1444, %v1604
        %v1637 = vadd.f32 %v1445, %v1605
        %v1638 = vadd.f32 %v1446, %v1606
        %v1639 = vadd.f32 %v1447, %v1607
        %v1640 = vadd.f32 %v1448, %v1608
        %v1641 = vadd.f32 %v1449, %v1609
        %v1642 = vadd.f32 %v1450, %v1610
        %v1643 = vadd.f32 %v1451, %v1611
        %v1644 = vadd.f32 %v1452, %v1612
        %v1645 = vadd.f32 %v1453, %v1613
        %v1646 = vadd.f32 %v1454, %v1614
        %v1647 = vadd.f32 %v1455, %v1615
        %v1648 = vadd.f32 %v1456, %v1616
        %v1649 = vadd.f32 %v1457, %v1617
        %v1650 = vadd.f32 %v1458, %v1618
        %v1651 = vadd.f32 %v1459, %v1619
        %v1652 = vadd.f32 %v1460, %v1620
        %v1653 = vadd.f32 %v1461, %v1621
        %v1654 = vadd.f32 %v1462, %v1622
        %v1655 = vadd.f32 %v1463, %v1623
        %v1656 = vadd.f32 %v1464, %v1624
        %v1657 = vmax.f32 %v1625, 0.0
        %v1658 = vmax.f32 %v1626, 0.0
        %v1659 = vmax.f32 %v1627, 0.0
        %v1660 = vmax.f32 %v1628, 0.0
        %v1661 = vmax.f32 %v1629, 0.0
        %v1662 = vmax.f32 %v1630, 0.0
        %v1663 = vmax.f32 %v1631, 0.0
        %v1664 = vmax.f32 %v1632, 0.0
        %v1665 = vmax.f32 %v1633, 0.0
        %v1666 = vmax.f32 %v1634, 0.0
        %v1667 = vmax.f32 %v1635, 0.0
        %v1668 = vmax.f32 %v1636, 0.0
        %v1669 = vmax.f32 %v1637, 0.0
        %v1670 = vmax.f32 %v1638, 0.0
        %v1671 = vmax.f32 %v1639, 0.0
        %v1672 = vmax.f32 %v1640, 0.0
        %v1673 = vmax.f32 %v1641, 0.0
        %v1674 = vmax.f32 %v1642, 0.0
        %v1675 = vmax.f32 %v1643, 0.0
        %v1676 = vmax.f32 %v1644, 0.0
        %v1677 = vmax.f32 %v1645, 0.0
        %v1678 = vmax.f32 %v1646, 0.0
        %v1679 = vmax.f32 %v1647, 0.0
        %v1680 = vmax.f32 %v1648, 0.0
        %v1681 = vmax.f32 %v1649, 0.0
        %v1682 = vmax.f32 %v1650, 0.0
        %v1683 = vmax.f32 %v1651, 0.0
        %v1684 = vmax.f32 %v1652, 0.0
        %v1685 = vmax.f32 %v1653, 0.0
        %v1686 = vmax.f32 %v1654, 0.0
        %v1687 = vmax.f32 %v1655, 0.0
        %v1688 = vmax.f32 %v1656, 0.0
        %v1689 = vadd.f32 %v1049, %v1657
        %v1690 = vadd.f32 %v1050, %v1658
        %v1691 = vadd.f32 %v1051, %v1659
        %v1692 = vadd.f32 %v1052, %v1660
        %v1693 = vadd.f32 %v1053, %v1661
        %v1694 = vadd.f32 %v1054, %v1662
        %v1695 = vadd.f32 %v1055, %v1663
        %v1696 = vadd.f32 %v1056, %v1664
        %v1697 = vadd.f32 %v1057, %v1665
        %v1698 = vadd.f32 %v1058, %v1666
        %v1699 = vadd.f32 %v1059, %v1667
        %v1700 = vadd.f32 %v1060, %v1668
        %v1701 = vadd.f32 %v1061, %v1669
        %v1702 = vadd.f32 %v1062, %v1670
        %v1703 = vadd.f32 %v1063, %v1671
        %v1704 = vadd.f32 %v1064, %v1672
        %v1705 = vadd.f32 %v1065, %v1673
        %v1706 = vadd.f32 %v1066, %v1674
        %v1707 = vadd.f32 %v1067, %v1675
        %v1708 = vadd.f32 %v1068, %v1676
        %v1709 = vadd.f32 %v1069, %v1677
        %v1710 = vadd.f32 %v1070, %v1678
        %v1711 = vadd.f32 %v1071, %v1679
        %v1712 = vadd.f32 %v1072, %v1680
        %v1713 = vadd.f32 %v1073, %v1681
        %v1714 = vadd.f32 %v1074, %v1682
        %v1715 = vadd.f32 %v1075, %v1683
        %v1716 = vadd.f32 %v1076, %v1684
        %v1717 = vadd.f32 %v1077, %v1685
        %v1718 = vadd.f32 %v1078, %v1686
        %v1719 = vadd.f32 %v1079, %v1687
        %v1720 = vadd.f32 %v1080, %v1688
        %1721 = vset.pattern.permute.xlu0 6
        %1722 = vperm.xlu0 %1721, %v357
        %v1723 = vpop.permute.xlu0 %1722
        %1725 = vset.pattern.permute.xlu0 6
        %1726 = vperm.xlu0 %1725, %v358
        %v1727 = vpop.permute.xlu0 %1726
        %1729 = vset.pattern.permute.xlu0 6
        %1730 = vperm.xlu0 %1729, %v359
        %v1731 = vpop.permute.xlu0 %1730
        %1733 = vset.pattern.permute.xlu0 6
        %1734 = vperm.xlu0 %1733, %v360
        %v1735 = vpop.permute.xlu0 %1734
        %1737 = vset.pattern.permute.xlu0 6
        %1738 = vperm.xlu0 %1737, %v361
        %v1739 = vpop.permute.xlu0 %1738
        %1741 = vset.pattern.permute.xlu0 6
        %1742 = vperm.xlu0 %1741, %v362
        %v1743 = vpop.permute.xlu0 %1742
        %1745 = vset.pattern.permute.xlu0 6
        %1746 = vperm.xlu0 %1745, %v363
        %v1747 = vpop.permute.xlu0 %1746
        %1749 = vset.pattern.permute.xlu0 6
        %1750 = vperm.xlu0 %1749, %v364
        %v1751 = vpop.permute.xlu0 %1750
        %1753 = vset.pattern.permute.xlu0 6
        %1754 = vperm.xlu0 %1753, %v365
        %v1755 = vpop.permute.xlu0 %1754
        %1757 = vset.pattern.permute.xlu0 6
        %1758 = vperm.xlu0 %1757, %v366
        %v1759 = vpop.permute.xlu0 %1758
        %1761 = vset.pattern.permute.xlu0 6
        %1762 = vperm.xlu0 %1761, %v367
        %v1763 = vpop.permute.xlu0 %1762
        %1765 = vset.pattern.permute.xlu0 6
        %1766 = vperm.xlu0 %1765, %v368
        %v1767 = vpop.permute.xlu0 %1766
        %1769 = vset.pattern.permute.xlu0 6
        %1770 = vperm.xlu0 %1769, %v369
        %v1771 = vpop.permute.xlu0 %1770
        %1773 = vset.pattern.permute.xlu0 6
        %1774 = vperm.xlu0 %1773, %v370
        %v1775 = vpop.permute.xlu0 %1774
        %1777 = vset.pattern.permute.xlu0 6
        %1778 = vperm.xlu0 %1777, %v371
        %v1779 = vpop.permute.xlu0 %1778
        %1781 = vset.pattern.permute.xlu0 6
        %1782 = vperm.xlu0 %1781, %v372
        %v1783 = vpop.permute.xlu0 %1782
        %1785 = vset.pattern.permute.xlu0 6
        %1786 = vperm.xlu0 %1785, %v373
        %v1787 = vpop.permute.xlu0 %1786
        %1789 = vset.pattern.permute.xlu0 6
        %1790 = vperm.xlu0 %1789, %v374
        %v1791 = vpop.permute.xlu0 %1790
        %1793 = vset.pattern.permute.xlu0 6
        %1794 = vperm.xlu0 %1793, %v375
        %v1795 = vpop.permute.xlu0 %1794
        %1797 = vset.pattern.permute.xlu0 6
        %1798 = vperm.xlu0 %1797, %v376
        %v1799 = vpop.permute.xlu0 %1798
        %1801 = vset.pattern.permute.xlu0 6
        %1802 = vperm.xlu0 %1801, %v377
        %v1803 = vpop.permute.xlu0 %1802
        %1805 = vset.pattern.permute.xlu0 6
        %1806 = vperm.xlu0 %1805, %v378
        %v1807 = vpop.permute.xlu0 %1806
        %1809 = vset.pattern.permute.xlu0 6
        %1810 = vperm.xlu0 %1809, %v379
        %v1811 = vpop.permute.xlu0 %1810
        %1813 = vset.pattern.permute.xlu0 6
        %1814 = vperm.xlu0 %1813, %v380
        %v1815 = vpop.permute.xlu0 %1814
        %1817 = vset.pattern.permute.xlu0 6
        %1818 = vperm.xlu0 %1817, %v381
        %v1819 = vpop.permute.xlu0 %1818
        %1821 = vset.pattern.permute.xlu0 6
        %1822 = vperm.xlu0 %1821, %v382
        %v1823 = vpop.permute.xlu0 %1822
        %1825 = vset.pattern.permute.xlu0 6
        %1826 = vperm.xlu0 %1825, %v383
        %v1827 = vpop.permute.xlu0 %1826
        %1829 = vset.pattern.permute.xlu0 6
        %1830 = vperm.xlu0 %1829, %v384
        %v1831 = vpop.permute.xlu0 %1830
        %1833 = vset.pattern.permute.xlu0 6
        %1834 = vperm.xlu0 %1833, %v385
        %v1835 = vpop.permute.xlu0 %1834
        %1837 = vset.pattern.permute.xlu0 6
        %1838 = vperm.xlu0 %1837, %v386
        %v1839 = vpop.permute.xlu0 %1838
        %1841 = vset.pattern.permute.xlu0 6
        %1842 = vperm.xlu0 %1841, %v387
        %v1843 = vpop.permute.xlu0 %1842
        %1845 = vset.pattern.permute.xlu0 6
        %1846 = vperm.xlu0 %1845, %v388
        %v1847 = vpop.permute.xlu0 %1846
        %v1849 = vmul.f32 %v1723, %v554
        %v1850 = vmul.f32 %v1727, %v554
        %v1851 = vmul.f32 %v1731, %v554
        %v1852 = vmul.f32 %v1735, %v554
        %v1853 = vmul.f32 %v1739, %v554
        %v1854 = vmul.f32 %v1743, %v554
        %v1855 = vmul.f32 %v1747, %v554
        %v1856 = vmul.f32 %v1751, %v554
        %v1857 = vmul.f32 %v1755, %v554
        %v1858 = vmul.f32 %v1759, %v554
        %v1859 = vmul.f32 %v1763, %v554
        %v1860 = vmul.f32 %v1767, %v554
        %v1861 = vmul.f32 %v1771, %v554
        %v1862 = vmul.f32 %v1775, %v554
        %v1863 = vmul.f32 %v1779, %v554
        %v1864 = vmul.f32 %v1783, %v554
        %v1865 = vmul.f32 %v1787, %v554
        %v1866 = vmul.f32 %v1791, %v554
        %v1867 = vmul.f32 %v1795, %v554
        %v1868 = vmul.f32 %v1799, %v554
        %v1869 = vmul.f32 %v1803, %v554
        %v1870 = vmul.f32 %v1807, %v554
        %v1871 = vmul.f32 %v1811, %v554
        %v1872 = vmul.f32 %v1815, %v554
        %v1873 = vmul.f32 %v1819, %v554
        %v1874 = vmul.f32 %v1823, %v554
        %v1875 = vmul.f32 %v1827, %v554
        %v1876 = vmul.f32 %v1831, %v554
        %v1877 = vmul.f32 %v1835, %v554
        %v1878 = vmul.f32 %v1839, %v554
        %v1879 = vmul.f32 %v1843, %v554
        %v1880 = vmul.f32 %v1847, %v554
        %v1881 = vadd.f32 %v591, %v1849
        %v1882 = vadd.f32 %v591, %v1850
        %v1883 = vadd.f32 %v591, %v1851
        %v1884 = vadd.f32 %v591, %v1852
        %v1885 = vadd.f32 %v591, %v1853
        %v1886 = vadd.f32 %v591, %v1854
        %v1887 = vadd.f32 %v591, %v1855
        %v1888 = vadd.f32 %v591, %v1856
        %v1889 = vadd.f32 %v591, %v1857
        %v1890 = vadd.f32 %v591, %v1858
        %v1891 = vadd.f32 %v591, %v1859
        %v1892 = vadd.f32 %v591, %v1860
        %v1893 = vadd.f32 %v591, %v1861
        %v1894 = vadd.f32 %v591, %v1862
        %v1895 = vadd.f32 %v591, %v1863
        %v1896 = vadd.f32 %v591, %v1864
        %v1897 = vadd.f32 %v591, %v1865
        %v1898 = vadd.f32 %v591, %v1866
        %v1899 = vadd.f32 %v591, %v1867
        %v1900 = vadd.f32 %v591, %v1868
        %v1901 = vadd.f32 %v591, %v1869
        %v1902 = vadd.f32 %v591, %v1870
        %v1903 = vadd.f32 %v591, %v1871
        %v1904 = vadd.f32 %v591, %v1872
        %v1905 = vadd.f32 %v591, %v1873
        %v1906 = vadd.f32 %v591, %v1874
        %v1907 = vadd.f32 %v591, %v1875
        %v1908 = vadd.f32 %v591, %v1876
        %v1909 = vadd.f32 %v591, %v1877
        %v1910 = vadd.f32 %v591, %v1878
        %v1911 = vadd.f32 %v591, %v1879
        %v1912 = vadd.f32 %v591, %v1880
        %1913 = vset.pattern.permute.xlu0 7
        %1914 = vperm.xlu0 %1913, %v357
        %v1915 = vpop.permute.xlu0 %1914
        %1917 = vset.pattern.permute.xlu0 7
        %1918 = vperm.xlu0 %1917, %v358
        %v1919 = vpop.permute.xlu0 %1918
        %1921 = vset.pattern.permute.xlu0 7
        %1922 = vperm.xlu0 %1921, %v359
        %v1923 = vpop.permute.xlu0 %1922
        %1925 = vset.pattern.permute.xlu0 7
        %1926 = vperm.xlu0 %1925, %v360
        %v1927 = vpop.permute.xlu0 %1926
        %1929 = vset.pattern.permute.xlu0 7
        %1930 = vperm.xlu0 %1929, %v361
        %v1931 = vpop.permute.xlu0 %1930
        %1933 = vset.pattern.permute.xlu0 7
        %1934 = vperm.xlu0 %1933, %v362
        %v1935 = vpop.permute.xlu0 %1934
        %1937 = vset.pattern.permute.xlu0 7
        %1938 = vperm.xlu0 %1937, %v363
        %v1939 = vpop.permute.xlu0 %1938
        %1941 = vset.pattern.permute.xlu0 7
        %1942 = vperm.xlu0 %1941, %v364
        %v1943 = vpop.permute.xlu0 %1942
        %1945 = vset.pattern.permute.xlu0 7
        %1946 = vperm.xlu0 %1945, %v365
        %v1947 = vpop.permute.xlu0 %1946
        %1949 = vset.pattern.permute.xlu0 7
        %1950 = vperm.xlu0 %1949, %v366
        %v1951 = vpop.permute.xlu0 %1950
        %1953 = vset.pattern.permute.xlu0 7
        %1954 = vperm.xlu0 %1953, %v367
        %v1955 = vpop.permute.xlu0 %1954
        %1957 = vset.pattern.permute.xlu0 7
        %1958 = vperm.xlu0 %1957, %v368
        %v1959 = vpop.permute.xlu0 %1958
        %1961 = vset.pattern.permute.xlu0 7
        %1962 = vperm.xlu0 %1961, %v369
        %v1963 = vpop.permute.xlu0 %1962
        %1965 = vset.pattern.permute.xlu0 7
        %1966 = vperm.xlu0 %1965, %v370
        %v1967 = vpop.permute.xlu0 %1966
        %1969 = vset.pattern.permute.xlu0 7
        %1970 = vperm.xlu0 %1969, %v371
        %v1971 = vpop.permute.xlu0 %1970
        %1973 = vset.pattern.permute.xlu0 7
        %1974 = vperm.xlu0 %1973, %v372
        %v1975 = vpop.permute.xlu0 %1974
        %1977 = vset.pattern.permute.xlu0 7
        %1978 = vperm.xlu0 %1977, %v373
        %v1979 = vpop.permute.xlu0 %1978
        %1981 = vset.pattern.permute.xlu0 7
        %1982 = vperm.xlu0 %1981, %v374
        %v1983 = vpop.permute.xlu0 %1982
        %1985 = vset.pattern.permute.xlu0 7
        %1986 = vperm.xlu0 %1985, %v375
        %v1987 = vpop.permute.xlu0 %1986
        %1989 = vset.pattern.permute.xlu0 7
        %1990 = vperm.xlu0 %1989, %v376
        %v1991 = vpop.permute.xlu0 %1990
        %1993 = vset.pattern.permute.xlu0 7
        %1994 = vperm.xlu0 %1993, %v377
        %v1995 = vpop.permute.xlu0 %1994
        %1997 = vset.pattern.permute.xlu0 7
        %1998 = vperm.xlu0 %1997, %v378
        %v1999 = vpop.permute.xlu0 %1998
        %2001 = vset.pattern.permute.xlu0 7
        %2002 = vperm.xlu0 %2001, %v379
        %v2003 = vpop.permute.xlu0 %2002
        %2005 = vset.pattern.permute.xlu0 7
        %2006 = vperm.xlu0 %2005, %v380
        %v2007 = vpop.permute.xlu0 %2006
        %2009 = vset.pattern.permute.xlu0 7
        %2010 = vperm.xlu0 %2009, %v381
        %v2011 = vpop.permute.xlu0 %2010
        %2013 = vset.pattern.permute.xlu0 7
        %2014 = vperm.xlu0 %2013, %v382
        %v2015 = vpop.permute.xlu0 %2014
        %2017 = vset.pattern.permute.xlu0 7
        %2018 = vperm.xlu0 %2017, %v383
        %v2019 = vpop.permute.xlu0 %2018
        %2021 = vset.pattern.permute.xlu0 7
        %2022 = vperm.xlu0 %2021, %v384
        %v2023 = vpop.permute.xlu0 %2022
        %2025 = vset.pattern.permute.xlu0 7
        %2026 = vperm.xlu0 %2025, %v385
        %v2027 = vpop.permute.xlu0 %2026
        %2029 = vset.pattern.permute.xlu0 7
        %2030 = vperm.xlu0 %2029, %v386
        %v2031 = vpop.permute.xlu0 %2030
        %2033 = vset.pattern.permute.xlu0 7
        %2034 = vperm.xlu0 %2033, %v387
        %v2035 = vpop.permute.xlu0 %2034
        %2037 = vset.pattern.permute.xlu0 7
        %2038 = vperm.xlu0 %2037, %v388
        %v2039 = vpop.permute.xlu0 %2038
        %v2041 = vmul.f32 %v1915, %v756
        %v2042 = vmul.f32 %v1919, %v756
        %v2043 = vmul.f32 %v1923, %v756
        %v2044 = vmul.f32 %v1927, %v756
        %v2045 = vmul.f32 %v1931, %v756
        %v2046 = vmul.f32 %v1935, %v756
        %v2047 = vmul.f32 %v1939, %v756
        %v2048 = vmul.f32 %v1943, %v756
        %v2049 = vmul.f32 %v1947, %v756
        %v2050 = vmul.f32 %v1951, %v756
        %v2051 = vmul.f32 %v1955, %v756
        %v2052 = vmul.f32 %v1959, %v756
        %v2053 = vmul.f32 %v1963, %v756
        %v2054 = vmul.f32 %v1967, %v756
        %v2055 = vmul.f32 %v1971, %v756
        %v2056 = vmul.f32 %v1975, %v756
        %v2057 = vmul.f32 %v1979, %v756
        %v2058 = vmul.f32 %v1983, %v756
        %v2059 = vmul.f32 %v1987, %v756
        %v2060 = vmul.f32 %v1991, %v756
        %v2061 = vmul.f32 %v1995, %v756
        %v2062 = vmul.f32 %v1999, %v756
        %v2063 = vmul.f32 %v2003, %v756
        %v2064 = vmul.f32 %v2007, %v756
        %v2065 = vmul.f32 %v2011, %v756
        %v2066 = vmul.f32 %v2015, %v756
        %v2067 = vmul.f32 %v2019, %v756
        %v2068 = vmul.f32 %v2023, %v756
        %v2069 = vmul.f32 %v2027, %v756
        %v2070 = vmul.f32 %v2031, %v756
        %v2071 = vmul.f32 %v2035, %v756
        %v2072 = vmul.f32 %v2039, %v756
        %v2073 = vadd.f32 %v1881, %v2041
        %v2074 = vadd.f32 %v1882, %v2042
        %v2075 = vadd.f32 %v1883, %v2043
        %v2076 = vadd.f32 %v1884, %v2044
        %v2077 = vadd.f32 %v1885, %v2045
        %v2078 = vadd.f32 %v1886, %v2046
        %v2079 = vadd.f32 %v1887, %v2047
        %v2080 = vadd.f32 %v1888, %v2048
        %v2081 = vadd.f32 %v1889, %v2049
        %v2082 = vadd.f32 %v1890, %v2050
        %v2083 = vadd.f32 %v1891, %v2051
        %v2084 = vadd.f32 %v1892, %v2052
        %v2085 = vadd.f32 %v1893, %v2053
        %v2086 = vadd.f32 %v1894, %v2054
        %v2087 = vadd.f32 %v1895, %v2055
        %v2088 = vadd.f32 %v1896, %v2056
        %v2089 = vadd.f32 %v1897, %v2057
        %v2090 = vadd.f32 %v1898, %v2058
        %v2091 = vadd.f32 %v1899, %v2059
        %v2092 = vadd.f32 %v1900, %v2060
        %v2093 = vadd.f32 %v1901, %v2061
        %v2094 = vadd.f32 %v1902, %v2062
        %v2095 = vadd.f32 %v1903, %v2063
        %v2096 = vadd.f32 %v1904, %v2064
        %v2097 = vadd.f32 %v1905, %v2065
        %v2098 = vadd.f32 %v1906, %v2066
        %v2099 = vadd.f32 %v1907, %v2067
        %v2100 = vadd.f32 %v1908, %v2068
        %v2101 = vadd.f32 %v1909, %v2069
        %v2102 = vadd.f32 %v1910, %v2070
        %v2103 = vadd.f32 %v1911, %v2071
        %v2104 = vadd.f32 %v1912, %v2072
        %2105 = vset.pattern.permute.xlu0 8
        %2106 = vperm.xlu0 %2105, %v357
        %v2107 = vpop.permute.xlu0 %2106
        %2109 = vset.pattern.permute.xlu0 8
        %2110 = vperm.xlu0 %2109, %v358
        %v2111 = vpop.permute.xlu0 %2110
        %2113 = vset.pattern.permute.xlu0 8
        %2114 = vperm.xlu0 %2113, %v359
        %v2115 = vpop.permute.xlu0 %2114
        %2117 = vset.pattern.permute.xlu0 8
        %2118 = vperm.xlu0 %2117, %v360
        %v2119 = vpop.permute.xlu0 %2118
        %2121 = vset.pattern.permute.xlu0 8
        %2122 = vperm.xlu0 %2121, %v361
        %v2123 = vpop.permute.xlu0 %2122
        %2125 = vset.pattern.permute.xlu0 8
        %2126 = vperm.xlu0 %2125, %v362
        %v2127 = vpop.permute.xlu0 %2126
        %2129 = vset.pattern.permute.xlu0 8
        %2130 = vperm.xlu0 %2129, %v363
        %v2131 = vpop.permute.xlu0 %2130
        %2133 = vset.pattern.permute.xlu0 8
        %2134 = vperm.xlu0 %2133, %v364
        %v2135 = vpop.permute.xlu0 %2134
        %2137 = vset.pattern.permute.xlu0 8
        %2138 = vperm.xlu0 %2137, %v365
        %v2139 = vpop.permute.xlu0 %2138
        %2141 = vset.pattern.permute.xlu0 8
        %2142 = vperm.xlu0 %2141, %v366
        %v2143 = vpop.permute.xlu0 %2142
        %2145 = vset.pattern.permute.xlu0 8
        %2146 = vperm.xlu0 %2145, %v367
        %v2147 = vpop.permute.xlu0 %2146
        %2149 = vset.pattern.permute.xlu0 8
        %2150 = vperm.xlu0 %2149, %v368
        %v2151 = vpop.permute.xlu0 %2150
        %2153 = vset.pattern.permute.xlu0 8
        %2154 = vperm.xlu0 %2153, %v369
        %v2155 = vpop.permute.xlu0 %2154
        %2157 = vset.pattern.permute.xlu0 8
        %2158 = vperm.xlu0 %2157, %v370
        %v2159 = vpop.permute.xlu0 %2158
        %2161 = vset.pattern.permute.xlu0 8
        %2162 = vperm.xlu0 %2161, %v371
        %v2163 = vpop.permute.xlu0 %2162
        %2165 = vset.pattern.permute.xlu0 8
        %2166 = vperm.xlu0 %2165, %v372
        %v2167 = vpop.permute.xlu0 %2166
        %2169 = vset.pattern.permute.xlu0 8
        %2170 = vperm.xlu0 %2169, %v373
        %v2171 = vpop.permute.xlu0 %2170
        %2173 = vset.pattern.permute.xlu0 8
        %2174 = vperm.xlu0 %2173, %v374
        %v2175 = vpop.permute.xlu0 %2174
        %2177 = vset.pattern.permute.xlu0 8
        %2178 = vperm.xlu0 %2177, %v375
        %v2179 = vpop.permute.xlu0 %2178
        %2181 = vset.pattern.permute.xlu0 8
        %2182 = vperm.xlu0 %2181, %v376
        %v2183 = vpop.permute.xlu0 %2182
        %2185 = vset.pattern.permute.xlu0 8
        %2186 = vperm.xlu0 %2185, %v377
        %v2187 = vpop.permute.xlu0 %2186
        %2189 = vset.pattern.permute.xlu0 8
        %2190 = vperm.xlu0 %2189, %v378
        %v2191 = vpop.permute.xlu0 %2190
        %2193 = vset.pattern.permute.xlu0 8
        %2194 = vperm.xlu0 %2193, %v379
        %v2195 = vpop.permute.xlu0 %2194
        %2197 = vset.pattern.permute.xlu0 8
        %2198 = vperm.xlu0 %2197, %v380
        %v2199 = vpop.permute.xlu0 %2198
        %2201 = vset.pattern.permute.xlu0 8
        %2202 = vperm.xlu0 %2201, %v381
        %v2203 = vpop.permute.xlu0 %2202
        %2205 = vset.pattern.permute.xlu0 8
        %2206 = vperm.xlu0 %2205, %v382
        %v2207 = vpop.permute.xlu0 %2206
        %2209 = vset.pattern.permute.xlu0 8
        %2210 = vperm.xlu0 %2209, %v383
        %v2211 = vpop.permute.xlu0 %2210
        %2213 = vset.pattern.permute.xlu0 8
        %2214 = vperm.xlu0 %2213, %v384
        %v2215 = vpop.permute.xlu0 %2214
        %2217 = vset.pattern.permute.xlu0 8
        %2218 = vperm.xlu0 %2217, %v385
        %v2219 = vpop.permute.xlu0 %2218
        %2221 = vset.pattern.permute.xlu0 8
        %2222 = vperm.xlu0 %2221, %v386
        %v2223 = vpop.permute.xlu0 %2222
        %2225 = vset.pattern.permute.xlu0 8
        %2226 = vperm.xlu0 %2225, %v387
        %v2227 = vpop.permute.xlu0 %2226
        %2229 = vset.pattern.permute.xlu0 8
        %2230 = vperm.xlu0 %2229, %v388
        %v2231 = vpop.permute.xlu0 %2230
        %v2233 = vmul.f32 %v2107, %v952
        %v2234 = vmul.f32 %v2111, %v952
        %v2235 = vmul.f32 %v2115, %v952
        %v2236 = vmul.f32 %v2119, %v952
        %v2237 = vmul.f32 %v2123, %v952
        %v2238 = vmul.f32 %v2127, %v952
        %v2239 = vmul.f32 %v2131, %v952
        %v2240 = vmul.f32 %v2135, %v952
        %v2241 = vmul.f32 %v2139, %v952
        %v2242 = vmul.f32 %v2143, %v952
        %v2243 = vmul.f32 %v2147, %v952
        %v2244 = vmul.f32 %v2151, %v952
        %v2245 = vmul.f32 %v2155, %v952
        %v2246 = vmul.f32 %v2159, %v952
        %v2247 = vmul.f32 %v2163, %v952
        %v2248 = vmul.f32 %v2167, %v952
        %v2249 = vmul.f32 %v2171, %v952
        %v2250 = vmul.f32 %v2175, %v952
        %v2251 = vmul.f32 %v2179, %v952
        %v2252 = vmul.f32 %v2183, %v952
        %v2253 = vmul.f32 %v2187, %v952
        %v2254 = vmul.f32 %v2191, %v952
        %v2255 = vmul.f32 %v2195, %v952
        %v2256 = vmul.f32 %v2199, %v952
        %v2257 = vmul.f32 %v2203, %v952
        %v2258 = vmul.f32 %v2207, %v952
        %v2259 = vmul.f32 %v2211, %v952
        %v2260 = vmul.f32 %v2215, %v952
        %v2261 = vmul.f32 %v2219, %v952
        %v2262 = vmul.f32 %v2223, %v952
        %v2263 = vmul.f32 %v2227, %v952
        %v2264 = vmul.f32 %v2231, %v952
        %v2265 = vadd.f32 %v2073, %v2233
        %v2266 = vadd.f32 %v2074, %v2234
        %v2267 = vadd.f32 %v2075, %v2235
        %v2268 = vadd.f32 %v2076, %v2236
        %v2269 = vadd.f32 %v2077, %v2237
        %v2270 = vadd.f32 %v2078, %v2238
        %v2271 = vadd.f32 %v2079, %v2239
        %v2272 = vadd.f32 %v2080, %v2240
        %v2273 = vadd.f32 %v2081, %v2241
        %v2274 = vadd.f32 %v2082, %v2242
        %v2275 = vadd.f32 %v2083, %v2243
        %v2276 = vadd.f32 %v2084, %v2244
        %v2277 = vadd.f32 %v2085, %v2245
        %v2278 = vadd.f32 %v2086, %v2246
        %v2279 = vadd.f32 %v2087, %v2247
        %v2280 = vadd.f32 %v2088, %v2248
        %v2281 = vadd.f32 %v2089, %v2249
        %v2282 = vadd.f32 %v2090, %v2250
        %v2283 = vadd.f32 %v2091, %v2251
        %v2284 = vadd.f32 %v2092, %v2252
        %v2285 = vadd.f32 %v2093, %v2253
        %v2286 = vadd.f32 %v2094, %v2254
        %v2287 = vadd.f32 %v2095, %v2255
        %v2288 = vadd.f32 %v2096, %v2256
        %v2289 = vadd.f32 %v2097, %v2257
        %v2290 = vadd.f32 %v2098, %v2258
        %v2291 = vadd.f32 %v2099, %v2259
        %v2292 = vadd.f32 %v2100, %v2260
        %v2293 = vadd.f32 %v2101, %v2261
        %v2294 = vadd.f32 %v2102, %v2262
        %v2295 = vadd.f32 %v2103, %v2263
        %v2296 = vadd.f32 %v2104, %v2264
        %v2297 = vmax.f32 %v2265, 0.0
        %v2298 = vmax.f32 %v2266, 0.0
        %v2299 = vmax.f32 %v2267, 0.0
        %v2300 = vmax.f32 %v2268, 0.0
        %v2301 = vmax.f32 %v2269, 0.0
        %v2302 = vmax.f32 %v2270, 0.0
        %v2303 = vmax.f32 %v2271, 0.0
        %v2304 = vmax.f32 %v2272, 0.0
        %v2305 = vmax.f32 %v2273, 0.0
        %v2306 = vmax.f32 %v2274, 0.0
        %v2307 = vmax.f32 %v2275, 0.0
        %v2308 = vmax.f32 %v2276, 0.0
        %v2309 = vmax.f32 %v2277, 0.0
        %v2310 = vmax.f32 %v2278, 0.0
        %v2311 = vmax.f32 %v2279, 0.0
        %v2312 = vmax.f32 %v2280, 0.0
        %v2313 = vmax.f32 %v2281, 0.0
        %v2314 = vmax.f32 %v2282, 0.0
        %v2315 = vmax.f32 %v2283, 0.0
        %v2316 = vmax.f32 %v2284, 0.0
        %v2317 = vmax.f32 %v2285, 0.0
        %v2318 = vmax.f32 %v2286, 0.0
        %v2319 = vmax.f32 %v2287, 0.0
        %v2320 = vmax.f32 %v2288, 0.0
        %v2321 = vmax.f32 %v2289, 0.0
        %v2322 = vmax.f32 %v2290, 0.0
        %v2323 = vmax.f32 %v2291, 0.0
        %v2324 = vmax.f32 %v2292, 0.0
        %v2325 = vmax.f32 %v2293, 0.0
        %v2326 = vmax.f32 %v2294, 0.0
        %v2327 = vmax.f32 %v2295, 0.0
        %v2328 = vmax.f32 %v2296, 0.0
        %v2329 = vadd.f32 %v1689, %v2297
        %v2330 = vadd.f32 %v1690, %v2298
        %v2331 = vadd.f32 %v1691, %v2299
        %v2332 = vadd.f32 %v1692, %v2300
        %v2333 = vadd.f32 %v1693, %v2301
        %v2334 = vadd.f32 %v1694, %v2302
        %v2335 = vadd.f32 %v1695, %v2303
        %v2336 = vadd.f32 %v1696, %v2304
        %v2337 = vadd.f32 %v1697, %v2305
        %v2338 = vadd.f32 %v1698, %v2306
        %v2339 = vadd.f32 %v1699, %v2307
        %v2340 = vadd.f32 %v1700, %v2308
        %v2341 = vadd.f32 %v1701, %v2309
        %v2342 = vadd.f32 %v1702, %v2310
        %v2343 = vadd.f32 %v1703, %v2311
        %v2344 = vadd.f32 %v1704, %v2312
        %v2345 = vadd.f32 %v1705, %v2313
        %v2346 = vadd.f32 %v1706, %v2314
        %v2347 = vadd.f32 %v1707, %v2315
        %v2348 = vadd.f32 %v1708, %v2316
        %v2349 = vadd.f32 %v1709, %v2317
        %v2350 = vadd.f32 %v1710, %v2318
        %v2351 = vadd.f32 %v1711, %v2319
        %v2352 = vadd.f32 %v1712, %v2320
        %v2353 = vadd.f32 %v1713, %v2321
        %v2354 = vadd.f32 %v1714, %v2322
        %v2355 = vadd.f32 %v1715, %v2323
        %v2356 = vadd.f32 %v1716, %v2324
        %v2357 = vadd.f32 %v1717, %v2325
        %v2358 = vadd.f32 %v1718, %v2326
        %v2359 = vadd.f32 %v1719, %v2327
        %v2360 = vadd.f32 %v1720, %v2328
        %2361 = vset.pattern.permute.xlu0 9
        %2362 = vperm.xlu0 %2361, %v357
        %v2363 = vpop.permute.xlu0 %2362
        %2365 = vset.pattern.permute.xlu0 9
        %2366 = vperm.xlu0 %2365, %v358
        %v2367 = vpop.permute.xlu0 %2366
        %2369 = vset.pattern.permute.xlu0 9
        %2370 = vperm.xlu0 %2369, %v359
        %v2371 = vpop.permute.xlu0 %2370
        %2373 = vset.pattern.permute.xlu0 9
        %2374 = vperm.xlu0 %2373, %v360
        %v2375 = vpop.permute.xlu0 %2374
        %2377 = vset.pattern.permute.xlu0 9
        %2378 = vperm.xlu0 %2377, %v361
        %v2379 = vpop.permute.xlu0 %2378
        %2381 = vset.pattern.permute.xlu0 9
        %2382 = vperm.xlu0 %2381, %v362
        %v2383 = vpop.permute.xlu0 %2382
        %2385 = vset.pattern.permute.xlu0 9
        %2386 = vperm.xlu0 %2385, %v363
        %v2387 = vpop.permute.xlu0 %2386
        %2389 = vset.pattern.permute.xlu0 9
        %2390 = vperm.xlu0 %2389, %v364
        %v2391 = vpop.permute.xlu0 %2390
        %2393 = vset.pattern.permute.xlu0 9
        %2394 = vperm.xlu0 %2393, %v365
        %v2395 = vpop.permute.xlu0 %2394
        %2397 = vset.pattern.permute.xlu0 9
        %2398 = vperm.xlu0 %2397, %v366
        %v2399 = vpop.permute.xlu0 %2398
        %2401 = vset.pattern.permute.xlu0 9
        %2402 = vperm.xlu0 %2401, %v367
        %v2403 = vpop.permute.xlu0 %2402
        %2405 = vset.pattern.permute.xlu0 9
        %2406 = vperm.xlu0 %2405, %v368
        %v2407 = vpop.permute.xlu0 %2406
        %2409 = vset.pattern.permute.xlu0 9
        %2410 = vperm.xlu0 %2409, %v369
        %v2411 = vpop.permute.xlu0 %2410
        %2413 = vset.pattern.permute.xlu0 9
        %2414 = vperm.xlu0 %2413, %v370
        %v2415 = vpop.permute.xlu0 %2414
        %2417 = vset.pattern.permute.xlu0 9
        %2418 = vperm.xlu0 %2417, %v371
        %v2419 = vpop.permute.xlu0 %2418
        %2421 = vset.pattern.permute.xlu0 9
        %2422 = vperm.xlu0 %2421, %v372
        %v2423 = vpop.permute.xlu0 %2422
        %2425 = vset.pattern.permute.xlu0 9
        %2426 = vperm.xlu0 %2425, %v373
        %v2427 = vpop.permute.xlu0 %2426
        %2429 = vset.pattern.permute.xlu0 9
        %2430 = vperm.xlu0 %2429, %v374
        %v2431 = vpop.permute.xlu0 %2430
        %2433 = vset.pattern.permute.xlu0 9
        %2434 = vperm.xlu0 %2433, %v375
        %v2435 = vpop.permute.xlu0 %2434
        %2437 = vset.pattern.permute.xlu0 9
        %2438 = vperm.xlu0 %2437, %v376
        %v2439 = vpop.permute.xlu0 %2438
        %2441 = vset.pattern.permute.xlu0 9
        %2442 = vperm.xlu0 %2441, %v377
        %v2443 = vpop.permute.xlu0 %2442
        %2445 = vset.pattern.permute.xlu0 9
        %2446 = vperm.xlu0 %2445, %v378
        %v2447 = vpop.permute.xlu0 %2446
        %2449 = vset.pattern.permute.xlu0 9
        %2450 = vperm.xlu0 %2449, %v379
        %v2451 = vpop.permute.xlu0 %2450
        %2453 = vset.pattern.permute.xlu0 9
        %2454 = vperm.xlu0 %2453, %v380
        %v2455 = vpop.permute.xlu0 %2454
        %2457 = vset.pattern.permute.xlu0 9
        %2458 = vperm.xlu0 %2457, %v381
        %v2459 = vpop.permute.xlu0 %2458
        %2461 = vset.pattern.permute.xlu0 9
        %2462 = vperm.xlu0 %2461, %v382
        %v2463 = vpop.permute.xlu0 %2462
        %2465 = vset.pattern.permute.xlu0 9
        %2466 = vperm.xlu0 %2465, %v383
        %v2467 = vpop.permute.xlu0 %2466
        %2469 = vset.pattern.permute.xlu0 9
        %2470 = vperm.xlu0 %2469, %v384
        %v2471 = vpop.permute.xlu0 %2470
        %2473 = vset.pattern.permute.xlu0 9
        %2474 = vperm.xlu0 %2473, %v385
        %v2475 = vpop.permute.xlu0 %2474
        %2477 = vset.pattern.permute.xlu0 9
        %2478 = vperm.xlu0 %2477, %v386
        %v2479 = vpop.permute.xlu0 %2478
        %2481 = vset.pattern.permute.xlu0 9
        %2482 = vperm.xlu0 %2481, %v387
        %v2483 = vpop.permute.xlu0 %2482
        %2485 = vset.pattern.permute.xlu0 9
        %2486 = vperm.xlu0 %2485, %v388
        %v2487 = vpop.permute.xlu0 %2486
        %v2489 = vmul.f32 %v2363, %v554
        %v2490 = vmul.f32 %v2367, %v554
        %v2491 = vmul.f32 %v2371, %v554
        %v2492 = vmul.f32 %v2375, %v554
        %v2493 = vmul.f32 %v2379, %v554
        %v2494 = vmul.f32 %v2383, %v554
        %v2495 = vmul.f32 %v2387, %v554
        %v2496 = vmul.f32 %v2391, %v554
        %v2497 = vmul.f32 %v2395, %v554
        %v2498 = vmul.f32 %v2399, %v554
        %v2499 = vmul.f32 %v2403, %v554
        %v2500 = vmul.f32 %v2407, %v554
        %v2501 = vmul.f32 %v2411, %v554
        %v2502 = vmul.f32 %v2415, %v554
        %v2503 = vmul.f32 %v2419, %v554
        %v2504 = vmul.f32 %v2423, %v554
        %v2505 = vmul.f32 %v2427, %v554
        %v2506 = vmul.f32 %v2431, %v554
        %v2507 = vmul.f32 %v2435, %v554
        %v2508 = vmul.f32 %v2439, %v554
        %v2509 = vmul.f32 %v2443, %v554
        %v2510 = vmul.f32 %v2447, %v554
        %v2511 = vmul.f32 %v2451, %v554
        %v2512 = vmul.f32 %v2455, %v554
        %v2513 = vmul.f32 %v2459, %v554
        %v2514 = vmul.f32 %v2463, %v554
        %v2515 = vmul.f32 %v2467, %v554
        %v2516 = vmul.f32 %v2471, %v554
        %v2517 = vmul.f32 %v2475, %v554
        %v2518 = vmul.f32 %v2479, %v554
        %v2519 = vmul.f32 %v2483, %v554
        %v2520 = vmul.f32 %v2487, %v554
        %v2521 = vadd.f32 %v591, %v2489
        %v2522 = vadd.f32 %v591, %v2490
        %v2523 = vadd.f32 %v591, %v2491
        %v2524 = vadd.f32 %v591, %v2492
        %v2525 = vadd.f32 %v591, %v2493
        %v2526 = vadd.f32 %v591, %v2494
        %v2527 = vadd.f32 %v591, %v2495
        %v2528 = vadd.f32 %v591, %v2496
        %v2529 = vadd.f32 %v591, %v2497
        %v2530 = vadd.f32 %v591, %v2498
        %v2531 = vadd.f32 %v591, %v2499
        %v2532 = vadd.f32 %v591, %v2500
        %v2533 = vadd.f32 %v591, %v2501
        %v2534 = vadd.f32 %v591, %v2502
        %v2535 = vadd.f32 %v591, %v2503
        %v2536 = vadd.f32 %v591, %v2504
        %v2537 = vadd.f32 %v591, %v2505
        %v2538 = vadd.f32 %v591, %v2506
        %v2539 = vadd.f32 %v591, %v2507
        %v2540 = vadd.f32 %v591, %v2508
        %v2541 = vadd.f32 %v591, %v2509
        %v2542 = vadd.f32 %v591, %v2510
        %v2543 = vadd.f32 %v591, %v2511
        %v2544 = vadd.f32 %v591, %v2512
        %v2545 = vadd.f32 %v591, %v2513
        %v2546 = vadd.f32 %v591, %v2514
        %v2547 = vadd.f32 %v591, %v2515
        %v2548 = vadd.f32 %v591, %v2516
        %v2549 = vadd.f32 %v591, %v2517
        %v2550 = vadd.f32 %v591, %v2518
        %v2551 = vadd.f32 %v591, %v2519
        %v2552 = vadd.f32 %v591, %v2520
        %2553 = vset.pattern.permute.xlu0 10
        %2554 = vperm.xlu0 %2553, %v357
        %v2555 = vpop.permute.xlu0 %2554
        %2557 = vset.pattern.permute.xlu0 10
        %2558 = vperm.xlu0 %2557, %v358
        %v2559 = vpop.permute.xlu0 %2558
        %2561 = vset.pattern.permute.xlu0 10
        %2562 = vperm.xlu0 %2561, %v359
        %v2563 = vpop.permute.xlu0 %2562
        %2565 = vset.pattern.permute.xlu0 10
        %2566 = vperm.xlu0 %2565, %v360
        %v2567 = vpop.permute.xlu0 %2566
        %2569 = vset.pattern.permute.xlu0 10
        %2570 = vperm.xlu0 %2569, %v361
        %v2571 = vpop.permute.xlu0 %2570
        %2573 = vset.pattern.permute.xlu0 10
        %2574 = vperm.xlu0 %2573, %v362
        %v2575 = vpop.permute.xlu0 %2574
        %2577 = vset.pattern.permute.xlu0 10
        %2578 = vperm.xlu0 %2577, %v363
        %v2579 = vpop.permute.xlu0 %2578
        %2581 = vset.pattern.permute.xlu0 10
        %2582 = vperm.xlu0 %2581, %v364
        %v2583 = vpop.permute.xlu0 %2582
        %2585 = vset.pattern.permute.xlu0 10
        %2586 = vperm.xlu0 %2585, %v365
        %v2587 = vpop.permute.xlu0 %2586
        %2589 = vset.pattern.permute.xlu0 10
        %2590 = vperm.xlu0 %2589, %v366
        %v2591 = vpop.permute.xlu0 %2590
        %2593 = vset.pattern.permute.xlu0 10
        %2594 = vperm.xlu0 %2593, %v367
        %v2595 = vpop.permute.xlu0 %2594
        %2597 = vset.pattern.permute.xlu0 10
        %2598 = vperm.xlu0 %2597, %v368
        %v2599 = vpop.permute.xlu0 %2598
        %2601 = vset.pattern.permute.xlu0 10
        %2602 = vperm.xlu0 %2601, %v369
        %v2603 = vpop.permute.xlu0 %2602
        %2605 = vset.pattern.permute.xlu0 10
        %2606 = vperm.xlu0 %2605, %v370
        %v2607 = vpop.permute.xlu0 %2606
        %2609 = vset.pattern.permute.xlu0 10
        %2610 = vperm.xlu0 %2609, %v371
        %v2611 = vpop.permute.xlu0 %2610
        %2613 = vset.pattern.permute.xlu0 10
        %2614 = vperm.xlu0 %2613, %v372
        %v2615 = vpop.permute.xlu0 %2614
        %2617 = vset.pattern.permute.xlu0 10
        %2618 = vperm.xlu0 %2617, %v373
        %v2619 = vpop.permute.xlu0 %2618
        %2621 = vset.pattern.permute.xlu0 10
        %2622 = vperm.xlu0 %2621, %v374
        %v2623 = vpop.permute.xlu0 %2622
        %2625 = vset.pattern.permute.xlu0 10
        %2626 = vperm.xlu0 %2625, %v375
        %v2627 = vpop.permute.xlu0 %2626
        %2629 = vset.pattern.permute.xlu0 10
        %2630 = vperm.xlu0 %2629, %v376
        %v2631 = vpop.permute.xlu0 %2630
        %2633 = vset.pattern.permute.xlu0 10
        %2634 = vperm.xlu0 %2633, %v377
        %v2635 = vpop.permute.xlu0 %2634
        %2637 = vset.pattern.permute.xlu0 10
        %2638 = vperm.xlu0 %2637, %v378
        %v2639 = vpop.permute.xlu0 %2638
        %2641 = vset.pattern.permute.xlu0 10
        %2642 = vperm.xlu0 %2641, %v379
        %v2643 = vpop.permute.xlu0 %2642
        %2645 = vset.pattern.permute.xlu0 10
        %2646 = vperm.xlu0 %2645, %v380
        %v2647 = vpop.permute.xlu0 %2646
        %2649 = vset.pattern.permute.xlu0 10
        %2650 = vperm.xlu0 %2649, %v381
        %v2651 = vpop.permute.xlu0 %2650
        %2653 = vset.pattern.permute.xlu0 10
        %2654 = vperm.xlu0 %2653, %v382
        %v2655 = vpop.permute.xlu0 %2654
        %2657 = vset.pattern.permute.xlu0 10
        %2658 = vperm.xlu0 %2657, %v383
        %v2659 = vpop.permute.xlu0 %2658
        %2661 = vset.pattern.permute.xlu0 10
        %2662 = vperm.xlu0 %2661, %v384
        %v2663 = vpop.permute.xlu0 %2662
        %2665 = vset.pattern.permute.xlu0 10
        %2666 = vperm.xlu0 %2665, %v385
        %v2667 = vpop.permute.xlu0 %2666
        %2669 = vset.pattern.permute.xlu0 10
        %2670 = vperm.xlu0 %2669, %v386
        %v2671 = vpop.permute.xlu0 %2670
        %2673 = vset.pattern.permute.xlu0 10
        %2674 = vperm.xlu0 %2673, %v387
        %v2675 = vpop.permute.xlu0 %2674
        %2677 = vset.pattern.permute.xlu0 10
        %2678 = vperm.xlu0 %2677, %v388
        %v2679 = vpop.permute.xlu0 %2678
        %v2681 = vmul.f32 %v2555, %v756
        %v2682 = vmul.f32 %v2559, %v756
        %v2683 = vmul.f32 %v2563, %v756
        %v2684 = vmul.f32 %v2567, %v756
        %v2685 = vmul.f32 %v2571, %v756
        %v2686 = vmul.f32 %v2575, %v756
        %v2687 = vmul.f32 %v2579, %v756
        %v2688 = vmul.f32 %v2583, %v756
        %v2689 = vmul.f32 %v2587, %v756
        %v2690 = vmul.f32 %v2591, %v756
        %v2691 = vmul.f32 %v2595, %v756
        %v2692 = vmul.f32 %v2599, %v756
        %v2693 = vmul.f32 %v2603, %v756
        %v2694 = vmul.f32 %v2607, %v756
        %v2695 = vmul.f32 %v2611, %v756
        %v2696 = vmul.f32 %v2615, %v756
        %v2697 = vmul.f32 %v2619, %v756
        %v2698 = vmul.f32 %v2623, %v756
        %v2699 = vmul.f32 %v2627, %v756
        %v2700 = vmul.f32 %v2631, %v756
        %v2701 = vmul.f32 %v2635, %v756
        %v2702 = vmul.f32 %v2639, %v756
        %v2703 = vmul.f32 %v2643, %v756
        %v2704 = vmul.f32 %v2647, %v756
        %v2705 = vmul.f32 %v2651, %v756
        %v2706 = vmul.f32 %v2655, %v756
        %v2707 = vmul.f32 %v2659, %v756
        %v2708 = vmul.f32 %v2663, %v756
        %v2709 = vmul.f32 %v2667, %v756
        %v2710 = vmul.f32 %v2671, %v756
        %v2711 = vmul.f32 %v2675, %v756
        %v2712 = vmul.f32 %v2679, %v756
        %v2713 = vadd.f32 %v2521, %v2681
        %v2714 = vadd.f32 %v2522, %v2682
        %v2715 = vadd.f32 %v2523, %v2683
        %v2716 = vadd.f32 %v2524, %v2684
        %v2717 = vadd.f32 %v2525, %v2685
        %v2718 = vadd.f32 %v2526, %v2686
        %v2719 = vadd.f32 %v2527, %v2687
        %v2720 = vadd.f32 %v2528, %v2688
        %v2721 = vadd.f32 %v2529, %v2689
        %v2722 = vadd.f32 %v2530, %v2690
        %v2723 = vadd.f32 %v2531, %v2691
        %v2724 = vadd.f32 %v2532, %v2692
        %v2725 = vadd.f32 %v2533, %v2693
        %v2726 = vadd.f32 %v2534, %v2694
        %v2727 = vadd.f32 %v2535, %v2695
        %v2728 = vadd.f32 %v2536, %v2696
        %v2729 = vadd.f32 %v2537, %v2697
        %v2730 = vadd.f32 %v2538, %v2698
        %v2731 = vadd.f32 %v2539, %v2699
        %v2732 = vadd.f32 %v2540, %v2700
        %v2733 = vadd.f32 %v2541, %v2701
        %v2734 = vadd.f32 %v2542, %v2702
        %v2735 = vadd.f32 %v2543, %v2703
        %v2736 = vadd.f32 %v2544, %v2704
        %v2737 = vadd.f32 %v2545, %v2705
        %v2738 = vadd.f32 %v2546, %v2706
        %v2739 = vadd.f32 %v2547, %v2707
        %v2740 = vadd.f32 %v2548, %v2708
        %v2741 = vadd.f32 %v2549, %v2709
        %v2742 = vadd.f32 %v2550, %v2710
        %v2743 = vadd.f32 %v2551, %v2711
        %v2744 = vadd.f32 %v2552, %v2712
        %2745 = vset.pattern.permute.xlu0 11
        %2746 = vperm.xlu0 %2745, %v357
        %v2747 = vpop.permute.xlu0 %2746
        %2749 = vset.pattern.permute.xlu0 11
        %2750 = vperm.xlu0 %2749, %v358
        %v2751 = vpop.permute.xlu0 %2750
        %2753 = vset.pattern.permute.xlu0 11
        %2754 = vperm.xlu0 %2753, %v359
        %v2755 = vpop.permute.xlu0 %2754
        %2757 = vset.pattern.permute.xlu0 11
        %2758 = vperm.xlu0 %2757, %v360
        %v2759 = vpop.permute.xlu0 %2758
        %2761 = vset.pattern.permute.xlu0 11
        %2762 = vperm.xlu0 %2761, %v361
        %v2763 = vpop.permute.xlu0 %2762
        %2765 = vset.pattern.permute.xlu0 11
        %2766 = vperm.xlu0 %2765, %v362
        %v2767 = vpop.permute.xlu0 %2766
        %2769 = vset.pattern.permute.xlu0 11
        %2770 = vperm.xlu0 %2769, %v363
        %v2771 = vpop.permute.xlu0 %2770
        %2773 = vset.pattern.permute.xlu0 11
        %2774 = vperm.xlu0 %2773, %v364
        %v2775 = vpop.permute.xlu0 %2774
        %2777 = vset.pattern.permute.xlu0 11
        %2778 = vperm.xlu0 %2777, %v365
        %v2779 = vpop.permute.xlu0 %2778
        %2781 = vset.pattern.permute.xlu0 11
        %2782 = vperm.xlu0 %2781, %v366
        %v2783 = vpop.permute.xlu0 %2782
        %2785 = vset.pattern.permute.xlu0 11
        %2786 = vperm.xlu0 %2785, %v367
        %v2787 = vpop.permute.xlu0 %2786
        %2789 = vset.pattern.permute.xlu0 11
        %2790 = vperm.xlu0 %2789, %v368
        %v2791 = vpop.permute.xlu0 %2790
        %2793 = vset.pattern.permute.xlu0 11
        %2794 = vperm.xlu0 %2793, %v369
        %v2795 = vpop.permute.xlu0 %2794
        %2797 = vset.pattern.permute.xlu0 11
        %2798 = vperm.xlu0 %2797, %v370
        %v2799 = vpop.permute.xlu0 %2798
        %2801 = vset.pattern.permute.xlu0 11
        %2802 = vperm.xlu0 %2801, %v371
        %v2803 = vpop.permute.xlu0 %2802
        %2805 = vset.pattern.permute.xlu0 11
        %2806 = vperm.xlu0 %2805, %v372
        %v2807 = vpop.permute.xlu0 %2806
        %2809 = vset.pattern.permute.xlu0 11
        %2810 = vperm.xlu0 %2809, %v373
        %v2811 = vpop.permute.xlu0 %2810
        %2813 = vset.pattern.permute.xlu0 11
        %2814 = vperm.xlu0 %2813, %v374
        %v2815 = vpop.permute.xlu0 %2814
        %2817 = vset.pattern.permute.xlu0 11
        %2818 = vperm.xlu0 %2817, %v375
        %v2819 = vpop.permute.xlu0 %2818
        %2821 = vset.pattern.permute.xlu0 11
        %2822 = vperm.xlu0 %2821, %v376
        %v2823 = vpop.permute.xlu0 %2822
        %2825 = vset.pattern.permute.xlu0 11
        %2826 = vperm.xlu0 %2825, %v377
        %v2827 = vpop.permute.xlu0 %2826
        %2829 = vset.pattern.permute.xlu0 11
        %2830 = vperm.xlu0 %2829, %v378
        %v2831 = vpop.permute.xlu0 %2830
        %2833 = vset.pattern.permute.xlu0 11
        %2834 = vperm.xlu0 %2833, %v379
        %v2835 = vpop.permute.xlu0 %2834
        %2837 = vset.pattern.permute.xlu0 11
        %2838 = vperm.xlu0 %2837, %v380
        %v2839 = vpop.permute.xlu0 %2838
        %2841 = vset.pattern.permute.xlu0 11
        %2842 = vperm.xlu0 %2841, %v381
        %v2843 = vpop.permute.xlu0 %2842
        %2845 = vset.pattern.permute.xlu0 11
        %2846 = vperm.xlu0 %2845, %v382
        %v2847 = vpop.permute.xlu0 %2846
        %2849 = vset.pattern.permute.xlu0 11
        %2850 = vperm.xlu0 %2849, %v383
        %v2851 = vpop.permute.xlu0 %2850
        %2853 = vset.pattern.permute.xlu0 11
        %2854 = vperm.xlu0 %2853, %v384
        %v2855 = vpop.permute.xlu0 %2854
        %2857 = vset.pattern.permute.xlu0 11
        %2858 = vperm.xlu0 %2857, %v385
        %v2859 = vpop.permute.xlu0 %2858
        %2861 = vset.pattern.permute.xlu0 11
        %2862 = vperm.xlu0 %2861, %v386
        %v2863 = vpop.permute.xlu0 %2862
        %2865 = vset.pattern.permute.xlu0 11
        %2866 = vperm.xlu0 %2865, %v387
        %v2867 = vpop.permute.xlu0 %2866
        %2869 = vset.pattern.permute.xlu0 11
        %2870 = vperm.xlu0 %2869, %v388
        %v2871 = vpop.permute.xlu0 %2870
        %v2873 = vmul.f32 %v2747, %v952
        %v2874 = vmul.f32 %v2751, %v952
        %v2875 = vmul.f32 %v2755, %v952
        %v2876 = vmul.f32 %v2759, %v952
        %v2877 = vmul.f32 %v2763, %v952
        %v2878 = vmul.f32 %v2767, %v952
        %v2879 = vmul.f32 %v2771, %v952
        %v2880 = vmul.f32 %v2775, %v952
        %v2881 = vmul.f32 %v2779, %v952
        %v2882 = vmul.f32 %v2783, %v952
        %v2883 = vmul.f32 %v2787, %v952
        %v2884 = vmul.f32 %v2791, %v952
        %v2885 = vmul.f32 %v2795, %v952
        %v2886 = vmul.f32 %v2799, %v952
        %v2887 = vmul.f32 %v2803, %v952
        %v2888 = vmul.f32 %v2807, %v952
        %v2889 = vmul.f32 %v2811, %v952
        %v2890 = vmul.f32 %v2815, %v952
        %v2891 = vmul.f32 %v2819, %v952
        %v2892 = vmul.f32 %v2823, %v952
        %v2893 = vmul.f32 %v2827, %v952
        %v2894 = vmul.f32 %v2831, %v952
        %v2895 = vmul.f32 %v2835, %v952
        %v2896 = vmul.f32 %v2839, %v952
        %v2897 = vmul.f32 %v2843, %v952
        %v2898 = vmul.f32 %v2847, %v952
        %v2899 = vmul.f32 %v2851, %v952
        %v2900 = vmul.f32 %v2855, %v952
        %v2901 = vmul.f32 %v2859, %v952
        %v2902 = vmul.f32 %v2863, %v952
        %v2903 = vmul.f32 %v2867, %v952
        %v2904 = vmul.f32 %v2871, %v952
        %v2905 = vadd.f32 %v2713, %v2873
        %v2906 = vadd.f32 %v2714, %v2874
        %v2907 = vadd.f32 %v2715, %v2875
        %v2908 = vadd.f32 %v2716, %v2876
        %v2909 = vadd.f32 %v2717, %v2877
        %v2910 = vadd.f32 %v2718, %v2878
        %v2911 = vadd.f32 %v2719, %v2879
        %v2912 = vadd.f32 %v2720, %v2880
        %v2913 = vadd.f32 %v2721, %v2881
        %v2914 = vadd.f32 %v2722, %v2882
        %v2915 = vadd.f32 %v2723, %v2883
        %v2916 = vadd.f32 %v2724, %v2884
        %v2917 = vadd.f32 %v2725, %v2885
        %v2918 = vadd.f32 %v2726, %v2886
        %v2919 = vadd.f32 %v2727, %v2887
        %v2920 = vadd.f32 %v2728, %v2888
        %v2921 = vadd.f32 %v2729, %v2889
        %v2922 = vadd.f32 %v2730, %v2890
        %v2923 = vadd.f32 %v2731, %v2891
        %v2924 = vadd.f32 %v2732, %v2892
        %v2925 = vadd.f32 %v2733, %v2893
        %v2926 = vadd.f32 %v2734, %v2894
        %v2927 = vadd.f32 %v2735, %v2895
        %v2928 = vadd.f32 %v2736, %v2896
        %v2929 = vadd.f32 %v2737, %v2897
        %v2930 = vadd.f32 %v2738, %v2898
        %v2931 = vadd.f32 %v2739, %v2899
        %v2932 = vadd.f32 %v2740, %v2900
        %v2933 = vadd.f32 %v2741, %v2901
        %v2934 = vadd.f32 %v2742, %v2902
        %v2935 = vadd.f32 %v2743, %v2903
        %v2936 = vadd.f32 %v2744, %v2904
        %v2937 = vmax.f32 %v2905, 0.0
        %v2938 = vmax.f32 %v2906, 0.0
        %v2939 = vmax.f32 %v2907, 0.0
        %v2940 = vmax.f32 %v2908, 0.0
        %v2941 = vmax.f32 %v2909, 0.0
        %v2942 = vmax.f32 %v2910, 0.0
        %v2943 = vmax.f32 %v2911, 0.0
        %v2944 = vmax.f32 %v2912, 0.0
        %v2945 = vmax.f32 %v2913, 0.0
        %v2946 = vmax.f32 %v2914, 0.0
        %v2947 = vmax.f32 %v2915, 0.0
        %v2948 = vmax.f32 %v2916, 0.0
        %v2949 = vmax.f32 %v2917, 0.0
        %v2950 = vmax.f32 %v2918, 0.0
        %v2951 = vmax.f32 %v2919, 0.0
        %v2952 = vmax.f32 %v2920, 0.0
        %v2953 = vmax.f32 %v2921, 0.0
        %v2954 = vmax.f32 %v2922, 0.0
        %v2955 = vmax.f32 %v2923, 0.0
        %v2956 = vmax.f32 %v2924, 0.0
        %v2957 = vmax.f32 %v2925, 0.0
        %v2958 = vmax.f32 %v2926, 0.0
        %v2959 = vmax.f32 %v2927, 0.0
        %v2960 = vmax.f32 %v2928, 0.0
        %v2961 = vmax.f32 %v2929, 0.0
        %v2962 = vmax.f32 %v2930, 0.0
        %v2963 = vmax.f32 %v2931, 0.0
        %v2964 = vmax.f32 %v2932, 0.0
        %v2965 = vmax.f32 %v2933, 0.0
        %v2966 = vmax.f32 %v2934, 0.0
        %v2967 = vmax.f32 %v2935, 0.0
        %v2968 = vmax.f32 %v2936, 0.0
        %v2969 = vadd.f32 %v2329, %v2937
        %v2970 = vadd.f32 %v2330, %v2938
        %v2971 = vadd.f32 %v2331, %v2939
        %v2972 = vadd.f32 %v2332, %v2940
        %v2973 = vadd.f32 %v2333, %v2941
        %v2974 = vadd.f32 %v2334, %v2942
        %v2975 = vadd.f32 %v2335, %v2943
        %v2976 = vadd.f32 %v2336, %v2944
        %v2977 = vadd.f32 %v2337, %v2945
        %v2978 = vadd.f32 %v2338, %v2946
        %v2979 = vadd.f32 %v2339, %v2947
        %v2980 = vadd.f32 %v2340, %v2948
        %v2981 = vadd.f32 %v2341, %v2949
        %v2982 = vadd.f32 %v2342, %v2950
        %v2983 = vadd.f32 %v2343, %v2951
        %v2984 = vadd.f32 %v2344, %v2952
        %v2985 = vadd.f32 %v2345, %v2953
        %v2986 = vadd.f32 %v2346, %v2954
        %v2987 = vadd.f32 %v2347, %v2955
        %v2988 = vadd.f32 %v2348, %v2956
        %v2989 = vadd.f32 %v2349, %v2957
        %v2990 = vadd.f32 %v2350, %v2958
        %v2991 = vadd.f32 %v2351, %v2959
        %v2992 = vadd.f32 %v2352, %v2960
        %v2993 = vadd.f32 %v2353, %v2961
        %v2994 = vadd.f32 %v2354, %v2962
        %v2995 = vadd.f32 %v2355, %v2963
        %v2996 = vadd.f32 %v2356, %v2964
        %v2997 = vadd.f32 %v2357, %v2965
        %v2998 = vadd.f32 %v2358, %v2966
        %v2999 = vadd.f32 %v2359, %v2967
        %v3000 = vadd.f32 %v2360, %v2968
        %v3001 = vmul.f32 %v2969, 0.25
        %v3002 = vmul.f32 %v2970, 0.25
        %v3003 = vmul.f32 %v2971, 0.25
        %v3004 = vmul.f32 %v2972, 0.25
        %v3005 = vmul.f32 %v2973, 0.25
        %v3006 = vmul.f32 %v2974, 0.25
        %v3007 = vmul.f32 %v2975, 0.25
        %v3008 = vmul.f32 %v2976, 0.25
        %v3009 = vmul.f32 %v2977, 0.25
        %v3010 = vmul.f32 %v2978, 0.25
        %v3011 = vmul.f32 %v2979, 0.25
        %v3012 = vmul.f32 %v2980, 0.25
        %v3013 = vmul.f32 %v2981, 0.25
        %v3014 = vmul.f32 %v2982, 0.25
        %v3015 = vmul.f32 %v2983, 0.25
        %v3016 = vmul.f32 %v2984, 0.25
        %v3017 = vmul.f32 %v2985, 0.25
        %v3018 = vmul.f32 %v2986, 0.25
        %v3019 = vmul.f32 %v2987, 0.25
        %v3020 = vmul.f32 %v2988, 0.25
        %v3021 = vmul.f32 %v2989, 0.25
        %v3022 = vmul.f32 %v2990, 0.25
        %v3023 = vmul.f32 %v2991, 0.25
        %v3024 = vmul.f32 %v2992, 0.25
        %v3025 = vmul.f32 %v2993, 0.25
        %v3026 = vmul.f32 %v2994, 0.25
        %v3027 = vmul.f32 %v2995, 0.25
        %v3028 = vmul.f32 %v2996, 0.25
        %v3029 = vmul.f32 %v2997, 0.25
        %v3030 = vmul.f32 %v2998, 0.25
        %v3031 = vmul.f32 %v2999, 0.25
        %v3032 = vmul.f32 %v3000, 0.25
        %v3033 = vld [vmem:[%s3] sm:$0xff]
        %v3034 = vld [vmem:[%s3 + $0x8] sm:$0xff]
        %v3035 = vld [vmem:[%s3 + $0x10] sm:$0xff]
        %v3036 = vld [vmem:[%s3 + $0x18] sm:$0xff]
        %v3037 = vld [vmem:[%s3 + $0x20] sm:$0xff]
        %v3038 = vld [vmem:[%s3 + $0x28] sm:$0xff]
        %v3039 = vld [vmem:[%s3 + $0x30] sm:$0xff]
        %v3040 = vld [vmem:[%s3 + $0x38] sm:$0xff]
        %v3041 = vld [vmem:[%s3 + $0x40] sm:$0xff]
        %v3042 = vld [vmem:[%s3 + $0x48] sm:$0xff]
        %v3043 = vld [vmem:[%s3 + $0x50] sm:$0xff]
        %v3044 = vld [vmem:[%s3 + $0x58] sm:$0xff]
        %v3045 = vld [vmem:[%s3 + $0x60] sm:$0xff]
        %v3046 = vld [vmem:[%s3 + $0x68] sm:$0xff]
        %v3047 = vld [vmem:[%s3 + $0x70] sm:$0xff]
        %v3048 = vld [vmem:[%s3 + $0x78] sm:$0xff]
        %v3049 = vld [vmem:[%s3 + $0x80] sm:$0xff]
        %v3050 = vld [vmem:[%s3 + $0x88] sm:$0xff]
        %v3051 = vld [vmem:[%s3 + $0x90] sm:$0xff]
        %v3052 = vld [vmem:[%s3 + $0x98] sm:$0xff]
        %v3053 = vld [vmem:[%s3 + $0xa0] sm:$0xff]
        %v3054 = vld [vmem:[%s3 + $0xa8] sm:$0xff]
        %v3055 = vld [vmem:[%s3 + $0xb0] sm:$0xff]
        %v3056 = vld [vmem:[%s3 + $0xb8] sm:$0xff]
        %v3057 = vld [vmem:[%s3 + $0xc0] sm:$0xff]
        %v3058 = vld [vmem:[%s3 + $0xc8] sm:$0xff]
        %v3059 = vld [vmem:[%s3 + $0xd0] sm:$0xff]
        %v3060 = vld [vmem:[%s3 + $0xd8] sm:$0xff]
        %v3061 = vld [vmem:[%s3 + $0xe0] sm:$0xff]
        %v3062 = vld [vmem:[%s3 + $0xe8] sm:$0xff]
        %v3063 = vld [vmem:[%s3 + $0xf0] sm:$0xff]
        %v3064 = vld [vmem:[%s3 + $0xf8] sm:$0xff]
        %3065 = vmatprep.subr.mxu0 0.0
        %3066 = vmatpush1.msra.mxu0 %v3001
        %3067 = vmatprep.subr.mxu0 0.0
        %3068 = vmatpush1.msra.mxu0 %v3002
        %3069 = vmatprep.subr.mxu0 0.0
        %3070 = vmatpush1.msra.mxu0 %v3003
        %3071 = vmatprep.subr.mxu0 0.0
        %3072 = vmatpush1.msra.mxu0 %v3004
        %3073 = vmatprep.subr.mxu0 0.0
        %3074 = vmatpush1.msra.mxu0 %v3005
        %3075 = vmatprep.subr.mxu0 0.0
        %3076 = vmatpush1.msra.mxu0 %v3006
        %3077 = vmatprep.subr.mxu0 0.0
        %3078 = vmatpush1.msra.mxu0 %v3007
        %3079 = vmatprep.subr.mxu0 0.0
        %3080 = vmatpush1.msra.mxu0 %v3008
        %3081 = vmatprep.subr.mxu0 0.0
        %3082 = vmatpush1.msra.mxu0 %v3009
        %3083 = vmatprep.subr.mxu0 0.0
        %3084 = vmatpush1.msra.mxu0 %v3010
        %3085 = vmatprep.subr.mxu0 0.0
        %3086 = vmatpush1.msra.mxu0 %v3011
        %3087 = vmatprep.subr.mxu0 0.0
        %3088 = vmatpush1.msra.mxu0 %v3012
        %3089 = vmatprep.subr.mxu0 0.0
        %3090 = vmatpush1.msra.mxu0 %v3013
        %3091 = vmatprep.subr.mxu0 0.0
        %3092 = vmatpush1.msra.mxu0 %v3014
        %3093 = vmatprep.subr.mxu0 0.0
        %3094 = vmatpush1.msra.mxu0 %v3015
        %3095 = vmatprep.subr.mxu0 0.0
        %3096 = vmatpush1.msra.mxu0 %v3016
        %3097 = vmatprep.subr.mxu0 0.0
        %3098 = vmatpush1.msra.mxu0 %v3017
        %3099 = vmatprep.subr.mxu0 0.0
        %3100 = vmatpush1.msra.mxu0 %v3018
        %3101 = vmatprep.subr.mxu0 0.0
        %3102 = vmatpush1.msra.mxu0 %v3019
        %3103 = vmatprep.subr.mxu0 0.0
        %3104 = vmatpush1.msra.mxu0 %v3020
        %3105 = vmatprep.subr.mxu0 0.0
        %3106 = vmatpush1.msra.mxu0 %v3021
        %3107 = vmatprep.subr.mxu0 0.0
        %3108 = vmatpush1.msra.mxu0 %v3022
        %3109 = vmatprep.subr.mxu0 0.0
        %3110 = vmatpush1.msra.mxu0 %v3023
        %3111 = vmatprep.subr.mxu0 0.0
        %3112 = vmatpush1.msra.mxu0 %v3024
        %3113 = vmatprep.subr.mxu0 0.0
        %3114 = vmatpush1.msra.mxu0 %v3025
        %3115 = vmatprep.subr.mxu0 0.0
        %3116 = vmatpush1.msra.mxu0 %v3026
        %3117 = vmatprep.subr.mxu0 0.0
        %3118 = vmatpush1.msra.mxu0 %v3027
        %3119 = vmatprep.subr.mxu0 0.0
        %3120 = vmatpush1.msra.mxu0 %v3028
        %3121 = vmatprep.subr.mxu0 0.0
        %3122 = vmatpush1.msra.mxu0 %v3029
        %3123 = vmatprep.subr.mxu0 0.0
        %3124 = vmatpush1.msra.mxu0 %v3030
        %3125 = vmatprep.subr.mxu0 0.0
        %3126 = vmatpush1.msra.mxu0 %v3031
        %3127 = vmatprep.subr.mxu0 0.0
        %3128 = vmatpush1.msra.mxu0 %v3032
        %3129 = vmatprep.mubr.f32.mxu0 %v3034
        %3130 = vmatmul.mubr.f32.gmra.mrb[0].mxu0 %v3033
        %v3131 = vpop.f32.mrb[0].mxu0
        %v3132 = vadd.f32 0.0, %v3131
        %v3133 = vpop.f32.mrb[0].mxu0
        %3134 = vmatprep.mubr.f32.mxu0 %v3036
        %3135 = vmatmul.mubr.f32.gmra.mrb[0].mxu0 %v3035
        %v3136 = vpop.f32.mrb[0].mxu0
        %v3137 = vadd.f32 0.0, %v3136
        %v3138 = vpop.f32.mrb[0].mxu0
        %3139 = vmatprep.mubr.f32.mxu0 %v3038
        %3140 = vmatmul.mubr.f32.gmra.mrb[0].mxu0 %v3037
        %v3141 = vpop.f32.mrb[0].mxu0
        %v3142 = vadd.f32 0.0, %v3141
        %v3143 = vpop.f32.mrb[0].mxu0
        %3144 = vmatprep.mubr.f32.mxu0 %v3040
        %3145 = vmatmul.mubr.f32.gmra.mrb[0].mxu0 %v3039
        %v3146 = vpop.f32.mrb[0].mxu0
        %v3147 = vadd.f32 0.0, %v3146
        %v3148 = vpop.f32.mrb[0].mxu0
        %3149 = vmatprep.mubr.f32.mxu0 %v3042
        %3150 = vmatmul.mubr.f32.gmra.mrb[0].mxu0 %v3041
        %v3151 = vpop.f32.mrb[0].mxu0
        %v3152 = vadd.f32 0.0, %v3151
        %v3153 = vpop.f32.mrb[0].mxu0
        %3154 = vmatprep.mubr.f32.mxu0 %v3044
        %3155 = vmatmul.mubr.f32.gmra.mrb[0].mxu0 %v3043
        %v3156 = vpop.f32.mrb[0].mxu0
        %v3157 = vadd.f32 0.0, %v3156
        %v3158 = vpop.f32.mrb[0].mxu0
        %3159 = vmatprep.mubr.f32.mxu0 %v3046
        %3160 = vmatmul.mubr.f32.gmra.mrb[0].mxu0 %v3045
        %v3161 = vpop.f32.mrb[0].mxu0
        %v3162 = vadd.f32 0.0, %v3161
        %v3163 = vpop.f32.mrb[0].mxu0
        %3164 = vmatprep.mubr.f32.mxu0 %v3048
        %3165 = vmatmul.mubr.f32.gmra.mrb[0].mxu0 %v3047
        %v3166 = vpop.f32.mrb[0].mxu0
        %v3167 = vadd.f32 0.0, %v3166
        %v3168 = vpop.f32.mrb[0].mxu0
        %3169 = vmatprep.mubr.f32.mxu0 %v3050
        %3170 = vmatmul.mubr.f32.gmra.mrb[0].mxu0 %v3049
        %v3171 = vpop.f32.mrb[0].mxu0
        %v3172 = vadd.f32 0.0, %v3171
        %v3173 = vpop.f32.mrb[0].mxu0
        %3174 = vmatprep.mubr.f32.mxu0 %v3052
        %3175 = vmatmul.mubr.f32.gmra.mrb[0].mxu0 %v3051
        %v3176 = vpop.f32.mrb[0].mxu0
        %v3177 = vadd.f32 0.0, %v3176
        %v3178 = vpop.f32.mrb[0].mxu0
        %3179 = vmatprep.mubr.f32.mxu0 %v3054
        %3180 = vmatmul.mubr.f32.gmra.mrb[0].mxu0 %v3053
        %v3181 = vpop.f32.mrb[0].mxu0
        %v3182 = vadd.f32 0.0, %v3181
        %v3183 = vpop.f32.mrb[0].mxu0
        %3184 = vmatprep.mubr.f32.mxu0 %v3056
        %3185 = vmatmul.mubr.f32.gmra.mrb[0].mxu0 %v3055
        %v3186 = vpop.f32.mrb[0].mxu0
        %v3187 = vadd.f32 0.0, %v3186
        %v3188 = vpop.f32.mrb[0].mxu0
        %3189 = vmatprep.mubr.f32.mxu0 %v3058
        %3190 = vmatmul.mubr.f32.gmra.mrb[0].mxu0 %v3057
        %v3191 = vpop.f32.mrb[0].mxu0
        %v3192 = vadd.f32 0.0, %v3191
        %v3193 = vpop.f32.mrb[0].mxu0
        %3194 = vmatprep.mubr.f32.mxu0 %v3060
        %3195 = vmatmul.mubr.f32.gmra.mrb[0].mxu0 %v3059
        %v3196 = vpop.f32.mrb[0].mxu0
        %v3197 = vadd.f32 0.0, %v3196
        %v3198 = vpop.f32.mrb[0].mxu0
        %3199 = vmatprep.mubr.f32.mxu0 %v3062
        %3200 = vmatmul.mubr.f32.gmra.mrb[0].mxu0 %v3061
        %v3201 = vpop.f32.mrb[0].mxu0
        %v3202 = vadd.f32 0.0, %v3201
        %v3203 = vpop.f32.mrb[0].mxu0
        %3204 = vmatprep.mubr.f32.mxu0 %v3064
        %3205 = vmatmul.mubr.f32.gmra.mrb[0].mxu0 %v3063
        %v3206 = vpop.f32.mrb[0].mxu0
        %v3207 = vadd.f32 0.0, %v3206
        %v3208 = vpop.f32.mrb[0].mxu0
        %3209 = vdwg.mxu0
        %vm3210 = vcmask 130048
        %3211 = vst.msk [vmem:[#allocation2] sm:$0xff] %vm3210, %v3132
        %3213 = vrot.lane.b32.xlu0 %v3137, 16
        %v3214 = vpop.permute.xlu0 %3213
        %vm3216 = vcmask 261248
        %3217 = vst.msk [vmem:[#allocation2] sm:$0xff] %vm3216, %v3214
        %3219 = vrot.lane.b32.xlu0 %v3142, 32
        %v3220 = vpop.permute.xlu0 %3219
        %vm3222 = vcmask 392448
        %3223 = vst.msk [vmem:[#allocation2] sm:$0xff] %vm3222, %v3220
        %3225 = vrot.lane.b32.xlu0 %v3147, 48
        %v3226 = vpop.permute.xlu0 %3225
        %vm3228 = vcmask 523648
        %3229 = vst.msk [vmem:[#allocation2] sm:$0xff] %vm3228, %v3226
        %3231 = vrot.lane.b32.xlu0 %v3152, 64
        %v3232 = vpop.permute.xlu0 %3231
        %vm3234 = vcmask 654848
        %3235 = vst.msk [vmem:[#allocation2] sm:$0xff] %vm3234, %v3232
        %3237 = vrot.lane.b32.xlu0 %v3157, 80
        %v3238 = vpop.permute.xlu0 %3237
        %vm3240 = vcmask 786048
        %3241 = vst.msk [vmem:[#allocation2] sm:$0xff] %vm3240, %v3238
        %3243 = vrot.lane.b32.xlu0 %v3162, 96
        %v3244 = vpop.permute.xlu0 %3243
        %vm3246 = vcmask 917248
        %3247 = vst.msk [vmem:[#allocation2] sm:$0xff] %vm3246, %v3244
        %3249 = vrot.lane.b32.xlu0 %v3167, 112
        %v3250 = vpop.permute.xlu0 %3249
        %vm3252 = vcmask 1048448
        %3253 = vst.msk [vmem:[#allocation2] sm:$0xff] %vm3252, %v3250
        %3254 = vst.msk [vmem:[#allocation2 + $0x8] sm:$0xff] %vm3210, %v3172
        %3256 = vrot.lane.b32.xlu0 %v3177, 16
        %v3257 = vpop.permute.xlu0 %3256
        %3259 = vst.msk [vmem:[#allocation2 + $0x8] sm:$0xff] %vm3216, %v3257
        %3261 = vrot.lane.b32.xlu0 %v3182, 32
        %v3262 = vpop.permute.xlu0 %3261
        %3264 = vst.msk [vmem:[#allocation2 + $0x8] sm:$0xff] %vm3222, %v3262
        %3266 = vrot.lane.b32.xlu0 %v3187, 48
        %v3267 = vpop.permute.xlu0 %3266
        %3269 = vst.msk [vmem:[#allocation2 + $0x8] sm:$0xff] %vm3228, %v3267
        %3271 = vrot.lane.b32.xlu0 %v3192, 64
        %v3272 = vpop.permute.xlu0 %3271
        %3274 = vst.msk [vmem:[#allocation2 + $0x8] sm:$0xff] %vm3234, %v3272
        %3276 = vrot.lane.b32.xlu0 %v3197, 80
        %v3277 = vpop.permute.xlu0 %3276
        %3279 = vst.msk [vmem:[#allocation2 + $0x8] sm:$0xff] %vm3240, %v3277
        %3281 = vrot.lane.b32.xlu0 %v3202, 96
        %v3282 = vpop.permute.xlu0 %3281
        %3284 = vst.msk [vmem:[#allocation2 + $0x8] sm:$0xff] %vm3246, %v3282
        %3286 = vrot.lane.b32.xlu0 %v3207, 112
        %v3287 = vpop.permute.xlu0 %3286
        %3289 = vst.msk [vmem:[#allocation2 + $0x8] sm:$0xff] %vm3252, %v3287
        %v3290 = vld [vmem:[#allocation2] sm:$0xff]
        %v3291 = vld [vmem:[#allocation2 + $0x8] sm:$0xff]
        %v3292 = vld [vmem:[%s4] sm:$0xff]
        %v3293 = vld [vmem:[%s4 + $0x8] sm:$0xff]
        %v3294 = vld [vmem:[%s4 + $0x10] sm:$0xff]
        %v3295 = vld [vmem:[%s4 + $0x18] sm:$0xff]
        %v3296 = vld [vmem:[%s4 + $0x20] sm:$0xff]
        %v3297 = vld [vmem:[%s4 + $0x28] sm:$0xff]
        %v3298 = vld [vmem:[%s4 + $0x30] sm:$0xff]
        %v3299 = vld [vmem:[%s4 + $0x38] sm:$0xff]
        %v3300 = vld [vmem:[%s4 + $0x40] sm:$0xff]
        %v3301 = vld [vmem:[%s4 + $0x48] sm:$0xff]
        %v3302 = vld [vmem:[%s4 + $0x50] sm:$0xff]
        %v3303 = vld [vmem:[%s4 + $0x58] sm:$0xff]
        %v3304 = vld [vmem:[%s4 + $0x60] sm:$0xff]
        %v3305 = vld [vmem:[%s4 + $0x68] sm:$0xff]
        %v3306 = vld [vmem:[%s4 + $0x70] sm:$0xff]
        %v3307 = vld [vmem:[%s4 + $0x78] sm:$0xff]
        %v3308 = vld [vmem:[%s4 + $0x80] sm:$0xff]
        %v3309 = vld [vmem:[%s4 + $0x88] sm:$0xff]
        %v3310 = vld [vmem:[%s4 + $0x90] sm:$0xff]
        %v3311 = vld [vmem:[%s4 + $0x98] sm:$0xff]
        %v3312 = vld [vmem:[%s4 + $0xa0] sm:$0xff]
        %v3313 = vld [vmem:[%s4 + $0xa8] sm:$0xff]
        %v3314 = vld [vmem:[%s4 + $0xb0] sm:$0xff]
        %v3315 = vld [vmem:[%s4 + $0xb8] sm:$0xff]
        %v3316 = vld [vmem:[%s4 + $0xc0] sm:$0xff]
        %v3317 = vld [vmem:[%s4 + $0xc8] sm:$0xff]
        %v3318 = vld [vmem:[%s4 + $0xd0] sm:$0xff]
        %v3319 = vld [vmem:[%s4 + $0xd8] sm:$0xff]
        %v3320 = vld [vmem:[%s4 + $0xe0] sm:$0xff]
        %v3321 = vld [vmem:[%s4 + $0xe8] sm:$0xff]
        %v3322 = vld [vmem:[%s4 + $0xf0] sm:$0xff]
        %v3323 = vld [vmem:[%s4 + $0xf8] sm:$0xff]
        %v3324 = vld [vmem:[%s5] sm:$0x1]
        %v3326 = vlaneseq
        %v3327 = vshrl.u32 %v3326, 7
        %v3328 = vsub.s32 0, %v3327
        %v3329 = vrot.slane %v3324, %v3328
        %3331 = vmatprep.subr.mxu0 0.0
        %3332 = vmatpush1.msra.mxu0 %v3292
        %3333 = vmatprep.subr.mxu0 0.0
        %3334 = vmatpush1.msra.mxu0 %v3293
        %3335 = vmatprep.subr.mxu0 0.0
        %3336 = vmatpush1.msra.mxu0 %v3294
        %3337 = vmatprep.subr.mxu0 0.0
        %3338 = vmatpush1.msra.mxu0 %v3295
        %3339 = vmatprep.subr.mxu0 0.0
        %3340 = vmatpush1.msra.mxu0 %v3296
        %3341 = vmatprep.subr.mxu0 0.0
        %3342 = vmatpush1.msra.mxu0 %v3297
        %3343 = vmatprep.subr.mxu0 0.0
        %3344 = vmatpush1.msra.mxu0 %v3298
        %3345 = vmatprep.subr.mxu0 0.0
        %3346 = vmatpush1.msra.mxu0 %v3299
        %3347 = vmatprep.subr.mxu0 0.0
        %3348 = vmatpush1.msra.mxu0 %v3300
        %3349 = vmatprep.subr.mxu0 0.0
        %3350 = vmatpush1.msra.mxu0 %v3301
        %3351 = vmatprep.subr.mxu0 0.0
        %3352 = vmatpush1.msra.mxu0 %v3302
        %3353 = vmatprep.subr.mxu0 0.0
        %3354 = vmatpush1.msra.mxu0 %v3303
        %3355 = vmatprep.subr.mxu0 0.0
        %3356 = vmatpush1.msra.mxu0 %v3304
        %3357 = vmatprep.subr.mxu0 0.0
        %3358 = vmatpush1.msra.mxu0 %v3305
        %3359 = vmatprep.subr.mxu0 0.0
        %3360 = vmatpush1.msra.mxu0 %v3306
        %3361 = vmatprep.subr.mxu0 0.0
        %3362 = vmatpush1.msra.mxu0 %v3307
        %3363 = vmatprep.subr.mxu0 0.0
        %3364 = vmatpush1.msra.mxu0 %v3308
        %3365 = vmatprep.subr.mxu0 0.0
        %3366 = vmatpush1.msra.mxu0 %v3309
        %3367 = vmatprep.subr.mxu0 0.0
        %3368 = vmatpush1.msra.mxu0 %v3310
        %3369 = vmatprep.subr.mxu0 0.0
        %3370 = vmatpush1.msra.mxu0 %v3311
        %3371 = vmatprep.subr.mxu0 0.0
        %3372 = vmatpush1.msra.mxu0 %v3312
        %3373 = vmatprep.subr.mxu0 0.0
        %3374 = vmatpush1.msra.mxu0 %v3313
        %3375 = vmatprep.subr.mxu0 0.0
        %3376 = vmatpush1.msra.mxu0 %v3314
        %3377 = vmatprep.subr.mxu0 0.0
        %3378 = vmatpush1.msra.mxu0 %v3315
        %3379 = vmatprep.subr.mxu0 0.0
        %3380 = vmatpush1.msra.mxu0 %v3316
        %3381 = vmatprep.subr.mxu0 0.0
        %3382 = vmatpush1.msra.mxu0 %v3317
        %3383 = vmatprep.subr.mxu0 0.0
        %3384 = vmatpush1.msra.mxu0 %v3318
        %3385 = vmatprep.subr.mxu0 0.0
        %3386 = vmatpush1.msra.mxu0 %v3319
        %3387 = vmatprep.subr.mxu0 0.0
        %3388 = vmatpush1.msra.mxu0 %v3320
        %3389 = vmatprep.subr.mxu0 0.0
        %3390 = vmatpush1.msra.mxu0 %v3321
        %3391 = vmatprep.subr.mxu0 0.0
        %3392 = vmatpush1.msra.mxu0 %v3322
        %3393 = vmatprep.subr.mxu0 0.0
        %3394 = vmatpush1.msra.mxu0 %v3323
        %3395 = vmatprep.mubr.f32.mxu0 %v3291
        %3396 = vmatmul.mubr.f32.gmra.mrb[0].mxu0 %v3290
        %v3397 = vpop.f32.mrb[0].mxu0
        %v3398 = vadd.f32 %v3329, %v3397
        %v3399 = vpop.f32.mrb[0].mxu0
        %3400 = vdwg.mxu0
        %v3401 = vmax.f32 %v3398, 0.0
        %v3402 = vld [vmem:[%s6] sm:$0xff]
        %v3403 = vld [vmem:[%s6 + $0x8] sm:$0xff]
        %v3404 = vld [vmem:[%s6 + $0x10] sm:$0xff]
        %v3405 = vld [vmem:[%s6 + $0x18] sm:$0xff]
        %v3406 = vld [vmem:[%s6 + $0x20] sm:$0xff]
        %v3407 = vld [vmem:[%s6 + $0x28] sm:$0xff]
        %v3408 = vld [vmem:[%s6 + $0x30] sm:$0xff]
        %v3409 = vld [vmem:[%s6 + $0x38] sm:$0xff]
        %v3410 = vld [vmem:[%s6 + $0x40] sm:$0xff]
        %v3411 = vld [vmem:[%s6 + $0x48] sm:$0xff]
        %v3412 = vld [vmem:[%s6 + $0x50] sm:$0xff]
        %v3413 = vld [vmem:[%s6 + $0x58] sm:$0xff]
        %v3414 = vld [vmem:[%s6 + $0x60] sm:$0xff]
        %v3415 = vld [vmem:[%s6 + $0x68] sm:$0xff]
        %v3416 = vld [vmem:[%s6 + $0x70] sm:$0xff]
        %v3417 = vld [vmem:[%s6 + $0x78] sm:$0xff]
        %v3418 = vld [vmem:[%s7] sm:$0x1]
        %v3420 = vlaneseq
        %v3421 = vshrl.u32 %v3420, 7
        %v3422 = vsub.s32 0, %v3421
        %v3423 = vrot.slane %v3418, %v3422
        %3425 = vmatprep.subr.mxu0 0.0
        %3426 = vmatpush1.msra.mxu0 %v3402
        %3427 = vmatprep.subr.mxu0 0.0
        %3428 = vmatpush1.msra.mxu0 %v3403
        %3429 = vmatprep.subr.mxu0 0.0
        %3430 = vmatpush1.msra.mxu0 %v3404
        %3431 = vmatprep.subr.mxu0 0.0
        %3432 = vmatpush1.msra.mxu0 %v3405
        %3433 = vmatprep.subr.mxu0 0.0
        %3434 = vmatpush1.msra.mxu0 %v3406
        %3435 = vmatprep.subr.mxu0 0.0
        %3436 = vmatpush1.msra.mxu0 %v3407
        %3437 = vmatprep.subr.mxu0 0.0
        %3438 = vmatpush1.msra.mxu0 %v3408
        %3439 = vmatprep.subr.mxu0 0.0
        %3440 = vmatpush1.msra.mxu0 %v3409
        %3441 = vmatprep.subr.mxu0 0.0
        %3442 = vmatpush1.msra.mxu0 %v3410
        %3443 = vmatprep.subr.mxu0 0.0
        %3444 = vmatpush1.msra.mxu0 %v3411
        %3445 = vmatprep.subr.mxu0 0.0
        %3446 = vmatpush1.msra.mxu0 %v3412
        %3447 = vmatprep.subr.mxu0 0.0
        %3448 = vmatpush1.msra.mxu0 %v3413
        %3449 = vmatprep.subr.mxu0 0.0
        %3450 = vmatpush1.msra.mxu0 %v3414
        %3451 = vmatprep.subr.mxu0 0.0
        %3452 = vmatpush1.msra.mxu0 %v3415
        %3453 = vmatprep.subr.mxu0 0.0
        %3454 = vmatpush1.msra.mxu0 %v3416
        %3455 = vmatprep.subr.mxu0 0.0
        %3456 = vmatpush1.msra.mxu0 %v3417
        %3457 = vmatprep.subr.mxu0 0.0
        %3458 = vmatpush1.msra.mxu0 0.0
        %3459 = vmatprep.subr.mxu0 0.0
        %3460 = vmatpush1.msra.mxu0 0.0
        %3461 = vmatprep.subr.mxu0 0.0
        %3462 = vmatpush1.msra.mxu0 0.0
        %3463 = vmatprep.subr.mxu0 0.0
        %3464 = vmatpush1.msra.mxu0 0.0
        %3465 = vmatprep.subr.mxu0 0.0
        %3466 = vmatpush1.msra.mxu0 0.0
        %3467 = vmatprep.subr.mxu0 0.0
        %3468 = vmatpush1.msra.mxu0 0.0
        %3469 = vmatprep.subr.mxu0 0.0
        %3470 = vmatpush1.msra.mxu0 0.0
        %3471 = vmatprep.subr.mxu0 0.0
        %3472 = vmatpush1.msra.mxu0 0.0
        %3473 = vmatprep.subr.mxu0 0.0
        %3474 = vmatpush1.msra.mxu0 0.0
        %3475 = vmatprep.subr.mxu0 0.0
        %3476 = vmatpush1.msra.mxu0 0.0
        %3477 = vmatprep.subr.mxu0 0.0
        %3478 = vmatpush1.msra.mxu0 0.0
        %3479 = vmatprep.subr.mxu0 0.0
        %3480 = vmatpush1.msra.mxu0 0.0
        %3481 = vmatprep.subr.mxu0 0.0
        %3482 = vmatpush1.msra.mxu0 0.0
        %3483 = vmatprep.subr.mxu0 0.0
        %3484 = vmatpush1.msra.mxu0 0.0
        %3485 = vmatprep.subr.mxu0 0.0
        %3486 = vmatpush1.msra.mxu0 0.0
        %3487 = vmatprep.subr.mxu0 0.0
        %3488 = vmatpush1.msra.mxu0 0.0
        %3489 = vmatprep.mubr.f32.mxu0 0.0
        %3490 = vmatmul.mubr.f32.gmra.mrb[0].mxu0 %v3401
        %v3491 = vpop.f32.mrb[0].mxu0
        %v3492 = vadd.f32 %v3423, %v3491
        %v3493 = vpop.f32.mrb[0].mxu0
        %3494 = vdwg.mxu0
        %v3495 = vmax.f32 %v3492, 0.0
        %v3496 = vrot.slane %v3495, 4
        %v3497 = vadd.f32 %v3495, %v3496
        %v3498 = vrot.slane %v3497, 2
        %v3499 = vadd.f32 %v3497, %v3498
        %v3500 = vrot.slane %v3499, 1
        %v3501 = vadd.f32 %v3499, %v3500
        %v3502 = vmul.f32 %v3501, 0.125
        %3503 = vst [vmem:[%s351] sm:$0x1] %v3502
        %s3504 = sand.u32 %s247, 1
        %s3505 = scalar_lea.sflag [#allocation4], %s3504
        %s3506 = sand.u32 %s247, 1
        %s3507 = scalar_lea.vmem [#allocation3], %s3506
        // Predicated region
        $region61: #{faster_rcnn_triplet_forward.1} parent=59 // pred_check
          %p3508 = pneg %p257
        $region62: #{faster_rcnn_triplet_forward.1} parent=59 // pred_check_branch
          %3510 = sbr.rel (%p3508) target = $region64
        $region63: #{faster_rcnn_triplet_forward.1} parent=59 // pred_region
          %s3512 = ssub.s32 16, 16
          %3513 = vsyncadd %s3505, %s3512
          %s3514 = smul.addr %s24, 16
          %s3515 = scalar_lea.hbm %s10, %s3514
          %s3517 = sshll.u32 %s3507, 4
          %s3518 = int_to_ptr.vmem [resolvable:$true] %s3517
          %3520 = dma.vmem_to_hbm [thread:$0]  %s3518, 16, %s3515, %s3505
        $region64: #{faster_rcnn_triplet_forward.1} parent=59 // pred_fallthru
          _
      $region60: #{faster_rcnn_triplet_forward.1} parent=5 // pred_fallthru
        _
      %p3521 = scmp.le.s32.totalorder 2, %s19
      // Predicated region
      $region65: #{faster_rcnn_triplet_forward.1} parent=5 // pred_check
        %p3522 = pneg %p3521
      $region66: #{faster_rcnn_triplet_forward.1} parent=5 // pred_check_branch
        %3524 = sbr.rel (%p3522) target = $region68
      $region67: #{faster_rcnn_triplet_forward.1} parent=5 // pred_region
        %s3525 = ssub.s32 %s19, 2
        // Predicated region
        $region69: #{faster_rcnn_triplet_forward.1} parent=67 // pred_check
          %p3526 = pneg %p263
        $region70: #{faster_rcnn_triplet_forward.1} parent=67 // pred_check_branch
          %3528 = sbr.rel (%p3526) target = $region72
        $region71: #{faster_rcnn_triplet_forward.1} parent=67 // pred_region
          %s3529 = sand.u32 %s248, 1
          %s3530 = scalar_lea.sflag [#allocation4], %s3529
          %s3531 = sand.u32 %s248, 1
          %s3532 = scalar_lea.vmem [#allocation3], %s3531
          %3533 = dma.done %s3530, 16
        $region72: #{faster_rcnn_triplet_forward.1} parent=67 // pred_fallthru
          _
      $region68: #{faster_rcnn_triplet_forward.1} parent=5 // pred_fallthru
        _
    $region6: #{faster_rcnn_triplet_forward.1} parent=1 // loop_footer
      %s23 = sadd.s32 1, %s19
    $region7: #{faster_rcnn_triplet_forward.1} parent=1 // loop_footer_branch
      %18 = sbr.rel target = $region3
    $region8: #{faster_rcnn_triplet_forward.1} parent=1 // loop_exit
      _
    %3534 = vsyncpa [#allocation4], 1
    %s3535 = scalar_lea.sflag [#allocation4], 1
    %3536 = vsyncpa %s3535, 1

</llo_original>
